<compile_context>
chip_gen: v6e
topology: v6e:2x2x1
jax: 0.10.0
libtpu: 0.0.40
codegen_flags: <defaults>
</compile_context>

<pallas_src>
import functools

import jax
import jax.numpy as jnp
from jax.experimental import pallas as pl
from jax.experimental.pallas import tpu as pltpu


def _silu(v):
    # SiLU = v * sigmoid(v).  exp and the approximate reciprocal both execute
    # on the EUP slot, which is otherwise idle in this kernel.
    # (approx=True adds ~1e-3 rel error; use approx=False for training.)
    return v * pl.reciprocal(1.0 + jnp.exp(-v), approx=True)


def _conv3x3(a, w_ref, b_ref, col, width, out_rows):
    """3x3 'SAME' conv (PyTorch Conv2d semantics) on a flat row-major slab.

    a:      (rows_in*width, Cin) f32 conv input; out-of-image rows already zeroed.
    w_ref:  (3, 3*Cin, Cout) bf16, [ky, kx*Cin + i, o]  (dx folded into K).
    col:    (rows_in*width, 1) int32 pixel column index.
    Returns the (out_rows*width, Cout) f32 output for input slab rows
    1 .. rows_in-2 (interior rows only), bias added.
    """
    hw_in = a.shape[0]
    hw_out = out_rows * width

    parts = []
    for dx in (-1, 0, 1):
        if dx == 0:
            zx = a
        else:
            # zx[p] = a[p + dx] in flat row-major order; pixels whose x+dx falls
            # outside [0, width) are zeroed -> zero padding along x.  The roll
            # (XLU slot) and the mask are kept in f32 so the +-1 sublane roll on
            # packed bf16 never forces a relayout; the bf16 cast below is a
            # single pass over the data.
            zx = pltpu.roll(a, shift=(-dx) % hw_in, axis=0)
            zx = jnp.where((col + dx >= 0) & (col + dx < width), zx, 0.0)
        parts.append(zx.astype(jnp.bfloat16))

    # dx lives in the contraction dim (K = 3*Cin); one N=Cout dot per ky tap,
    # accumulated immediately: no fat q slab, no zero-fill, no scratch.
    acat = jnp.concatenate(parts, axis=-1)                    # (hw_in, 3*Cin) bf16
    acc = jnp.dot(acat[:hw_out], w_ref[0],
                  preferred_element_type=jnp.float32)
    acc = acc + jnp.dot(acat[width:width + hw_out], w_ref[1],
                        preferred_element_type=jnp.float32)
    acc = acc + jnp.dot(acat[2 * width:2 * width + hw_out], w_ref[2],
                        preferred_element_type=jnp.float32)
    return acc + b_ref[...]


def _guided_resblock_kernel(*refs, has_shortcut, th, width, height):
    if has_shortcut:
        (x_top_ref, x_mid_ref, x_bot_ref, t_top_ref, t_mid_ref, t_bot_ref,
         wsc_ref, bsc_ref, w1_ref, b1_ref, w2_ref, b2_ref,
         wg1_ref, bg1_ref, wg2_ref, bg2_ref, wb_ref, bb_ref, out_ref) = refs
    else:
        (x_top_ref, x_mid_ref, x_bot_ref, t_top_ref, t_mid_ref, t_bot_ref,
         w1_ref, b1_ref, w2_ref, b2_ref,
         wg1_ref, bg1_ref, wg2_ref, bg2_ref, wb_ref, bb_ref, out_ref) = refs

    w = width
    hw0 = th * w                       # output tile pixels
    hw1 = (th + 2) * w                 # conv1-output / conv2-input pixels
    hw2 = (th + 4) * w                 # x / conv1-input pixels
    in_c = x_mid_ref.shape[-1]
    row0 = pl.program_id(1) * th       # first image row of this output tile

    # Flat pixel-major x slab with a 2-row halo on each side
    # (image rows row0-2 .. row0+th+1; edge halos are clamped, masked below).
    x_slab = jnp.concatenate(
        [x_top_ref[...].reshape(2 * w, in_c),
         x_mid_ref[...].reshape(hw0, in_c),
         x_bot_ref[...].reshape(2 * w, in_c)], axis=0)          # (hw2, in_c) f32

    # t slab with a 1-row halo (image rows row0-1 .. row0+th).
    t_top = t_top_ref[...].reshape(2 * w, 1)
    t_bot = t_bot_ref[...].reshape(2 * w, 1)
    t_slab = jnp.concatenate(
        [t_top[w:2 * w], t_mid_ref[...].reshape(hw0, 1), t_bot[:w]],
        axis=0)                                                 # (hw1, 1) f32

    # (rows, 1) column index + in-image row masks (broadcast along lanes later).
    pix2 = jax.lax.broadcasted_iota(jnp.int32, (hw2, 1), 0)
    col2 = pix2 % w
    row_ok2 = (pix2 >= (2 - row0) * w) & (pix2 < (height - row0 + 2) * w)
    col1 = col2[:hw1]
    row_ok1 = row_ok2[w:w + hw1]

    # x = short_cut(x): 1x1 conv when in_c != out_c, identity otherwise.
    if has_shortcut:
        xsc = (jnp.dot(x_slab.astype(jnp.bfloat16), wsc_ref[...],
                       preferred_element_type=jnp.float32) + bsc_ref[...])
    else:
        xsc = x_slab

    # z = conv1(silu(x)); the zero padding applies to conv1's *input*, so
    # out-of-image halo rows of silu(xsc) are zeroed (not x itself).
    a1 = jnp.where(row_ok2, _silu(xsc), 0.0)
    z = _conv3x3(a1, w1_ref, b1_ref, col2, w, th + 2)           # (hw1, c)

    # tk = gamma(t): conv1x1(1->C) -> SiLU -> conv1x1(C->C)
    tk = _silu(t_slab * wg1_ref[...] + bg1_ref[...])
    tk = (jnp.dot(tk.astype(jnp.bfloat16), wg2_ref[...],
                  preferred_element_type=jnp.float32) + bg2_ref[...])
    # tb = beta(tk): SiLU -> conv1x1(C->C)
    tbv = (jnp.dot(_silu(tk).astype(jnp.bfloat16), wb_ref[...],
                   preferred_element_type=jnp.float32) + bb_ref[...])

    # z = conv2(silu(z*tk + tb)); out = z + x   (only the TH interior rows).
    a2 = jnp.where(row_ok1, _silu(z * tk + tbv), 0.0)
    z2 = _conv3x3(a2, w2_ref, b2_ref, col1, w, th)              # (hw0, c)
    res = z2 + xsc[2 * w:2 * w + hw0]
    out_ref[...] = res.reshape(out_ref.shape)


def _pick_row_tile(h, th_max):
    """Largest even divisor of h that is <= th_max (falls back to h)."""
    th_max = max(min(th_max, h), 2)
    for th in range(th_max, 1, -1):
        if h % th == 0 and th % 2 == 0:
            return th
    return h


def guided_residual_block(x, t, params, *, has_shortcut, row_tile=None):
    """x: (N,H,W,in_c) f32, t: (N,H,W,1) f32 -> (N,H,W,out_c) f32."""
    n, h, w, in_c = x.shape
    c = params["b1"].shape[-1]
    bf = jnp.bfloat16

    assert w % 8 == 0, "W must be a multiple of 8"   # TODO(synk): pad W otherwise
    assert h % 2 == 0, "H must be even"

    # Generation-aware VMEM budget (128 MiB on v5e/v6e, 64 MiB per core on v7x).
    try:
        cap = getattr(pltpu.get_tpu_info(), "vmem_capacity_bytes",
                      128 * 1024 * 1024)
    except Exception:
        cap = 128 * 1024 * 1024
    vmem_limit = int(cap) * 3 // 4

    if row_tile is None:
        # Rough per-output-row footprint: live f32/bf16 slabs + double-buffered IO.
        per_row = w * 4 * (16 * c + 2 * in_c + 4)
        th = _pick_row_tile(h, max((vmem_limit // 2) // per_row, 2))
    else:
        assert h % row_tile == 0 and row_tile % 2 == 0
        th = row_tile
    ntiles = h // th
    h2b = th // 2        # row-tile size in units of 2-row halo blocks
    nhb = h // 2         # number of 2-row blocks along H

    # Conv weights packed as (3, 3*Cin, Cout): [ky, kx*Cin + i, o] so the three
    # kx taps sit in the contraction dim of one dot per ky tap.
    w1p = params["w1"].reshape(3, 3 * c, c).astype(bf)
    w2p = params["w2"].reshape(3, 3 * c, c).astype(bf)

    args = [x, x, x, t, t, t]
    if has_shortcut:
        args += [params["wsc"].astype(bf), params["bsc"]]
    args += [w1p, params["b1"], w2p, params["b2"],
             params["wg1"], params["bg1"], params["wg2"].astype(bf), params["bg2"],
             params["wb"].astype(bf), params["bb"]]

    def top_map(i, j):   # 2-row halo block just above the tile (clamped at edge)
        return (i, jnp.maximum(j * h2b - 1, 0), 0, 0)

    def bot_map(i, j):   # 2-row halo block just below the tile (clamped at edge)
        return (i, jnp.minimum((j + 1) * h2b, nhb - 1), 0, 0)

    def mid_map(i, j):
        return (i, j, 0, 0)

    def full_spec(a):
        nd = a.ndim
        return pl.BlockSpec(a.shape, lambda i, j, _nd=nd: (0,) * _nd)

    in_specs = [pl.BlockSpec((1, 2, w, in_c), top_map),
                pl.BlockSpec((1, th, w, in_c), mid_map),
                pl.BlockSpec((1, 2, w, in_c), bot_map),
                pl.BlockSpec((1, 2, w, 1), top_map),
                pl.BlockSpec((1, th, w, 1), mid_map),
                pl.BlockSpec((1, 2, w, 1), bot_map)]
    in_specs += [full_spec(a) for a in args[6:]]

    kernel = functools.partial(_guided_resblock_kernel,
                               has_shortcut=has_shortcut,
                               th=th, width=w, height=h)

    return pl.pallas_call(
        kernel,
        out_shape=jax.ShapeDtypeStruct((n, h, w, c), jnp.float32),
        grid=(n, ntiles),
        in_specs=in_specs,
        out_specs=pl.BlockSpec((1, th, w, c), mid_map),
        compiler_params=pltpu.CompilerParams(
            dimension_semantics=("parallel", "parallel"),
            vmem_limit_bytes=vmem_limit),
    )(*args)


def _reference(x, t, p, *, has_shortcut):
    """Pure-JAX reference (mirrors the PyTorch forward) for verification."""
    silu = lambda v: v * jax.nn.sigmoid(v)
    hi = jax.lax.Precision.HIGHEST
    if has_shortcut:
        xsc = (jnp.einsum("nhwi,io->nhwo", x, p["wsc"], precision=hi)
               + p["bsc"].reshape(1, 1, 1, -1))
    else:
        xsc = x

    def conv3(v, w9, b):
        wk = w9.reshape(3, 3, w9.shape[1], w9.shape[2])
        out = jax.lax.conv_general_dilated(
            v, wk, window_strides=(1, 1), padding="SAME",
            dimension_numbers=("NHWC", "HWIO", "NHWC"), precision=hi)
        return out + b.reshape(1, 1, 1, -1)

    z = conv3(silu(xsc), p["w1"], p["b1"])
    tk = t * p["wg1"].reshape(1, 1, 1, -1) + p["bg1"].reshape(1, 1, 1, -1)
    tk = silu(tk)
    tk = (jnp.einsum("nhwi,io->nhwo", tk, p["wg2"], precision=hi)
          + p["bg2"].reshape(1, 1, 1, -1))
    tb = silu(tk)
    tb = (jnp.einsum("nhwi,io->nhwo", tb, p["wb"], precision=hi)
          + p["bb"].reshape(1, 1, 1, -1))
    z = z * tk + tb
    z = silu(z)
    z = conv3(z, p["w2"], p["b2"])
    return z + xsc


def _init_params(key, in_c, out_c):
    ks = jax.random.split(key, 12)
    f = lambda k, shape: (0.1 * jax.random.normal(k, shape)).astype(jnp.float32)
    return {
        "wsc": f(ks[0], (in_c, out_c)), "bsc": f(ks[1], (1, out_c)),
        "w1": f(ks[2], (9, out_c, out_c)), "b1": f(ks[3], (1, out_c)),
        "w2": f(ks[4], (9, out_c, out_c)), "b2": f(ks[5], (1, out_c)),
        "wg1": f(ks[6], (1, out_c)), "bg1": f(ks[7], (1, out_c)),
        "wg2": f(ks[8], (out_c, out_c)), "bg2": f(ks[9], (1, out_c)),
        "wb": f(ks[10], (out_c, out_c)), "bb": f(ks[11], (1, out_c)),
    }


if __name__ == "__main__":
    key = jax.random.PRNGKey(0)
    kx, kt, kp, kp2 = jax.random.split(key, 4)

    # Case 1: in_c != out_c (1x1-conv shortcut path), 2 row tiles (halo exercised).
    N, IN_C, OUT_C, H, W = 2, 4, 8, 16, 16
    x = jax.random.normal(kx, (N, H, W, IN_C), dtype=jnp.float32)
    t = jax.random.normal(kt, (N, H, W, 1), dtype=jnp.float32)
    params = _init_params(kp, IN_C, OUT_C)
    out = jax.block_until_ready(
        guided_residual_block(x, t, params, has_shortcut=True, row_tile=8))
    ref = _reference(x, t, params, has_shortcut=True)
    err1 = float(jnp.max(jnp.abs(out - ref)))
    assert out.shape == (N, H, W, OUT_C)
    assert err1 < 2e-2, f"shortcut-path max abs err {err1}"

    # Case 2: in_c == out_c (identity shortcut; wsc/bsc not passed), auto tile.
    params2 = _init_params(kp2, OUT_C, OUT_C)
    x2 = jax.random.normal(kx, (N, H, W, OUT_C), dtype=jnp.float32)
    out2 = jax.block_until_ready(
        guided_residual_block(x2, t, params2, has_shortcut=False))
    ref2 = _reference(x2, t, params2, has_shortcut=False)
    err2 = float(jnp.max(jnp.abs(out2 - ref2)))
    assert err2 < 2e-2, f"identity-path max abs err {err2}"

    print("KERNEL_OK")
</pallas_src>

<mosaic_0001>
module attributes {stable_mosaic.version = 11 : i64} {
  func.func @_guided_resblock_kernel(%arg0: i32, %arg1: i32, %arg2: memref<1x2x16x4xf32, #tpu.memory_space<vmem>>, %arg3: memref<1x8x16x4xf32, #tpu.memory_space<vmem>>, %arg4: memref<1x2x16x4xf32, #tpu.memory_space<vmem>>, %arg5: memref<1x2x16x1xf32, #tpu.memory_space<vmem>>, %arg6: memref<1x8x16x1xf32, #tpu.memory_space<vmem>>, %arg7: memref<1x2x16x1xf32, #tpu.memory_space<vmem>>, %arg8: memref<4x8xbf16, #tpu.memory_space<vmem>>, %arg9: memref<1x8xf32, #tpu.memory_space<vmem>>, %arg10: memref<3x24x8xbf16, #tpu.memory_space<vmem>>, %arg11: memref<1x8xf32, #tpu.memory_space<vmem>>, %arg12: memref<3x24x8xbf16, #tpu.memory_space<vmem>>, %arg13: memref<1x8xf32, #tpu.memory_space<vmem>>, %arg14: memref<1x8xf32, #tpu.memory_space<vmem>>, %arg15: memref<1x8xf32, #tpu.memory_space<vmem>>, %arg16: memref<8x8xbf16, #tpu.memory_space<vmem>>, %arg17: memref<1x8xf32, #tpu.memory_space<vmem>>, %arg18: memref<8x8xbf16, #tpu.memory_space<vmem>>, %arg19: memref<1x8xf32, #tpu.memory_space<vmem>>, %arg20: memref<1x8x16x8xf32, #tpu.memory_space<vmem>>) attributes {dimension_semantics = [#tpu.dimension_semantics<parallel>, #tpu.dimension_semantics<parallel>], iteration_bounds = array<i64: 2, 2>, scalar_prefetch = 0 : i64, scratch_operands = 0 : i64, tpu.core_type = #tpu.core_type<tc>, window_params = [{transform_indices = @transform_0, window_bounds = array<i64: 1, 2, 16, 4>}, {transform_indices = @transform_1, window_bounds = array<i64: 1, 8, 16, 4>}, {transform_indices = @transform_2, window_bounds = array<i64: 1, 2, 16, 4>}, {transform_indices = @transform_3, window_bounds = array<i64: 1, 2, 16, 1>}, {transform_indices = @transform_4, window_bounds = array<i64: 1, 8, 16, 1>}, {transform_indices = @transform_5, window_bounds = array<i64: 1, 2, 16, 1>}, {pipeline_mode = #tpu.pipeline_mode<synchronous>, transform_indices = @transform_6, window_bounds = array<i64: 4, 8>}, {pipeline_mode = #tpu.pipeline_mode<synchronous>, transform_indices = @transform_7, window_bounds = array<i64: 1, 8>}, {pipeline_mode = #tpu.pipeline_mode<synchronous>, transform_indices = @transform_8, window_bounds = array<i64: 3, 24, 8>}, {pipeline_mode = #tpu.pipeline_mode<synchronous>, transform_indices = @transform_9, window_bounds = array<i64: 1, 8>}, {pipeline_mode = #tpu.pipeline_mode<synchronous>, transform_indices = @transform_10, window_bounds = array<i64: 3, 24, 8>}, {pipeline_mode = #tpu.pipeline_mode<synchronous>, transform_indices = @transform_11, window_bounds = array<i64: 1, 8>}, {pipeline_mode = #tpu.pipeline_mode<synchronous>, transform_indices = @transform_12, window_bounds = array<i64: 1, 8>}, {pipeline_mode = #tpu.pipeline_mode<synchronous>, transform_indices = @transform_13, window_bounds = array<i64: 1, 8>}, {pipeline_mode = #tpu.pipeline_mode<synchronous>, transform_indices = @transform_14, window_bounds = array<i64: 8, 8>}, {pipeline_mode = #tpu.pipeline_mode<synchronous>, transform_indices = @transform_15, window_bounds = array<i64: 1, 8>}, {pipeline_mode = #tpu.pipeline_mode<synchronous>, transform_indices = @transform_16, window_bounds = array<i64: 8, 8>}, {pipeline_mode = #tpu.pipeline_mode<synchronous>, transform_indices = @transform_17, window_bounds = array<i64: 1, 8>}, {transform_indices = @transform_18, window_bounds = array<i64: 1, 8, 16, 8>}]} {
    %c8_i32 = arith.constant 8 : i32
    %0 = arith.muli %arg1, %c8_i32 : i32
    %c0 = arith.constant 0 : index
    %c0_0 = arith.constant 0 : index
    %c0_1 = arith.constant 0 : index
    %c0_2 = arith.constant 0 : index
    %1 = vector.load %arg2[%c0, %c0_0, %c0_1, %c0_2] : memref<1x2x16x4xf32, #tpu.memory_space<vmem>>, vector<1x2x16x4xf32>
    %2 = vector.shape_cast %1 : vector<1x2x16x4xf32> to vector<32x4xf32>
    %c0_3 = arith.constant 0 : index
    %c0_4 = arith.constant 0 : index
    %c0_5 = arith.constant 0 : index
    %c0_6 = arith.constant 0 : index
    %3 = vector.load %arg3[%c0_3, %c0_4, %c0_5, %c0_6] : memref<1x8x16x4xf32, #tpu.memory_space<vmem>>, vector<1x8x16x4xf32>
    %4 = vector.shape_cast %3 : vector<1x8x16x4xf32> to vector<128x4xf32>
    %c0_7 = arith.constant 0 : index
    %c0_8 = arith.constant 0 : index
    %c0_9 = arith.constant 0 : index
    %c0_10 = arith.constant 0 : index
    %5 = vector.load %arg4[%c0_7, %c0_8, %c0_9, %c0_10] : memref<1x2x16x4xf32, #tpu.memory_space<vmem>>, vector<1x2x16x4xf32>
    %6 = vector.shape_cast %5 : vector<1x2x16x4xf32> to vector<32x4xf32>
    %7 = tpu.concatenate %2, %4, %6 in 0 : vector<32x4xf32>, vector<128x4xf32>, vector<32x4xf32> -> vector<192x4xf32>
    %c0_11 = arith.constant 0 : index
    %c0_12 = arith.constant 0 : index
    %c0_13 = arith.constant 0 : index
    %c0_14 = arith.constant 0 : index
    %8 = vector.load %arg5[%c0_11, %c0_12, %c0_13, %c0_14] : memref<1x2x16x1xf32, #tpu.memory_space<vmem>>, vector<1x2x16x1xf32>
    %9 = vector.shape_cast %8 : vector<1x2x16x1xf32> to vector<32x1xf32>
    %c0_15 = arith.constant 0 : index
    %c0_16 = arith.constant 0 : index
    %c0_17 = arith.constant 0 : index
    %c0_18 = arith.constant 0 : index
    %10 = vector.load %arg7[%c0_15, %c0_16, %c0_17, %c0_18] : memref<1x2x16x1xf32, #tpu.memory_space<vmem>>, vector<1x2x16x1xf32>
    %11 = vector.shape_cast %10 : vector<1x2x16x1xf32> to vector<32x1xf32>
    %12 = vector.extract_strided_slice %9 {offsets = [16, 0], sizes = [16, 1], strides = [1, 1]} : vector<32x1xf32> to vector<16x1xf32>
    %c0_19 = arith.constant 0 : index
    %c0_20 = arith.constant 0 : index
    %c0_21 = arith.constant 0 : index
    %c0_22 = arith.constant 0 : index
    %13 = vector.load %arg6[%c0_19, %c0_20, %c0_21, %c0_22] : memref<1x8x16x1xf32, #tpu.memory_space<vmem>>, vector<1x8x16x1xf32>
    %14 = vector.shape_cast %13 : vector<1x8x16x1xf32> to vector<128x1xf32>
    %15 = vector.extract_strided_slice %11 {offsets = [0, 0], sizes = [16, 1], strides = [1, 1]} : vector<32x1xf32> to vector<16x1xf32>
    %16 = tpu.concatenate %12, %14, %15 in 0 : vector<16x1xf32>, vector<128x1xf32>, vector<16x1xf32> -> vector<160x1xf32>
    %17 = tpu.iota {dimensions = array<i32: 0>} : vector<192x1xi32>
    %c16_i32 = arith.constant 16 : i32
    %c0_i32 = arith.constant 0 : i32
    %18 = arith.cmpi eq, %c16_i32, %c0_i32 : i32
    %c1_i32 = arith.constant 1 : i32
    %19 = arith.select %18, %c1_i32, %c16_i32 : i32
    %20 = vector.broadcast %19 : i32 to vector<192x1xi32>
    %21 = arith.remsi %17, %20 : vector<192x1xi32>
    %c0_i32_23 = arith.constant 0 : i32
    %22 = vector.broadcast %c0_i32_23 : i32 to vector<192x1xi32>
    %23 = arith.cmpi ne, %21, %22 : vector<192x1xi32>
    %c0_i32_24 = arith.constant 0 : i32
    %24 = vector.broadcast %c0_i32_24 : i32 to vector<192x1xi32>
    %25 = arith.cmpi slt, %21, %24 : vector<192x1xi32>
    %c0_i32_25 = arith.constant 0 : i32
    %26 = arith.cmpi slt, %19, %c0_i32_25 : i32
    %27 = vector.broadcast %26 : i1 to vector<192x1xi1>
    %28 = vector.broadcast %27 : vector<192x1xi1> to vector<192x1xi1>
    %29 = arith.xori %25, %28 : vector<192x1xi1>
    %30 = arith.andi %29, %23 : vector<192x1xi1>
    %31 = vector.broadcast %19 : i32 to vector<192x1xi32>
    %32 = arith.addi %21, %31 : vector<192x1xi32>
    %33 = arith.select %30, %32, %21 : vector<192x1xi1>, vector<192x1xi32>
    %c2_i32 = arith.constant 2 : i32
    %34 = arith.subi %c2_i32, %0 : i32
    %c16_i32_26 = arith.constant 16 : i32
    %35 = arith.muli %34, %c16_i32_26 : i32
    %36 = vector.broadcast %35 : i32 to vector<192x1xi32>
    %37 = arith.cmpi sge, %17, %36 : vector<192x1xi32>
    %c16_i32_27 = arith.constant 16 : i32
    %38 = arith.subi %c16_i32_27, %0 : i32
    %c2_i32_28 = arith.constant 2 : i32
    %39 = arith.addi %38, %c2_i32_28 : i32
    %c16_i32_29 = arith.constant 16 : i32
    %40 = arith.muli %39, %c16_i32_29 : i32
    %41 = vector.broadcast %40 : i32 to vector<192x1xi32>
    %42 = arith.cmpi slt, %17, %41 : vector<192x1xi32>
    %43 = arith.andi %37, %42 : vector<192x1xi1>
    %44 = vector.extract_strided_slice %33 {offsets = [0, 0], sizes = [160, 1], strides = [1, 1]} : vector<192x1xi32> to vector<160x1xi32>
    %45 = vector.extract_strided_slice %43 {offsets = [16, 0], sizes = [160, 1], strides = [1, 1]} : vector<192x1xi1> to vector<160x1xi1>
    %46 = arith.truncf %7 : vector<192x4xf32> to vector<192x4xbf16>
    %c0_30 = arith.constant 0 : index
    %c0_31 = arith.constant 0 : index
    %47 = vector.load %arg8[%c0_30, %c0_31] : memref<4x8xbf16, #tpu.memory_space<vmem>>, vector<4x8xbf16>
    %cst = arith.constant dense<0.000000e+00> : vector<192x8xf32>
    %48 = tpu.matmul %46, %47, %cst {dimension_numbers = #tpu.dot_dimension_numbers<[1], [0], [0], [1], [0, 0, 1, 1], [], []>} : vector<192x4xbf16>, vector<4x8xbf16>, vector<192x8xf32> -> vector<192x8xf32>
    %c0_32 = arith.constant 0 : index
    %c0_33 = arith.constant 0 : index
    %49 = vector.load %arg9[%c0_32, %c0_33] : memref<1x8xf32, #tpu.memory_space<vmem>>, vector<1x8xf32>
    %50 = vector.broadcast %49 : vector<1x8xf32> to vector<192x8xf32>
    %51 = arith.addf %48, %50 : vector<192x8xf32>
    %cst_34 = arith.constant 0.000000e+00 : f32
    %52 = vector.broadcast %cst_34 : f32 to vector<192x8xf32>
    %53 = arith.subf %52, %51 : vector<192x8xf32>
    %54 = math.exp %53 : vector<192x8xf32>
    %cst_35 = arith.constant 1.000000e+00 : f32
    %55 = vector.broadcast %cst_35 : f32 to vector<192x8xf32>
    %56 = arith.addf %55, %54 : vector<192x8xf32>
    %57 = tpu.reciprocal %56 {approx = true} : vector<192x8xf32> -> vector<192x8xf32>
    %58 = arith.mulf %51, %57 : vector<192x8xf32>
    %cst_36 = arith.constant 0.000000e+00 : f32
    %59 = vector.shape_cast %43 : vector<192x1xi1> to vector<192x1xi1>
    %60 = vector.broadcast %59 : vector<192x1xi1> to vector<192x8xi1>
    %61 = vector.broadcast %cst_36 : f32 to vector<192x8xf32>
    %62 = arith.select %60, %58, %61 : vector<192x8xi1>, vector<192x8xf32>
    %c1_i32_37 = arith.constant 1 : i32
    %63 = tpu.dynamic_rotate %62 by %c1_i32_37 dim 0 : vector<192x8xf32>, i32 -> vector<192x8xf32>
    %c-1_i32 = arith.constant -1 : i32
    %64 = vector.broadcast %c-1_i32 : i32 to vector<192x1xi32>
    %65 = arith.addi %33, %64 : vector<192x1xi32>
    %c0_i32_38 = arith.constant 0 : i32
    %66 = vector.broadcast %c0_i32_38 : i32 to vector<192x1xi32>
    %67 = arith.cmpi sge, %65, %66 : vector<192x1xi32>
    %c-1_i32_39 = arith.constant -1 : i32
    %68 = vector.broadcast %c-1_i32_39 : i32 to vector<192x1xi32>
    %69 = arith.addi %33, %68 : vector<192x1xi32>
    %c16_i32_40 = arith.constant 16 : i32
    %70 = vector.broadcast %c16_i32_40 : i32 to vector<192x1xi32>
    %71 = arith.cmpi slt, %69, %70 : vector<192x1xi32>
    %72 = arith.andi %67, %71 : vector<192x1xi1>
    %cst_41 = arith.constant 0.000000e+00 : f32
    %73 = vector.shape_cast %72 : vector<192x1xi1> to vector<192x1xi1>
    %74 = vector.broadcast %73 : vector<192x1xi1> to vector<192x8xi1>
    %75 = vector.broadcast %cst_41 : f32 to vector<192x8xf32>
    %76 = arith.select %74, %63, %75 : vector<192x8xi1>, vector<192x8xf32>
    %77 = arith.truncf %76 : vector<192x8xf32> to vector<192x8xbf16>
    %78 = arith.truncf %62 : vector<192x8xf32> to vector<192x8xbf16>
    %c191_i32 = arith.constant 191 : i32
    %79 = tpu.dynamic_rotate %62 by %c191_i32 dim 0 : vector<192x8xf32>, i32 -> vector<192x8xf32>
    %c1_i32_42 = arith.constant 1 : i32
    %80 = vector.broadcast %c1_i32_42 : i32 to vector<192x1xi32>
    %81 = arith.addi %33, %80 : vector<192x1xi32>
    %c0_i32_43 = arith.constant 0 : i32
    %82 = vector.broadcast %c0_i32_43 : i32 to vector<192x1xi32>
    %83 = arith.cmpi sge, %81, %82 : vector<192x1xi32>
    %c1_i32_44 = arith.constant 1 : i32
    %84 = vector.broadcast %c1_i32_44 : i32 to vector<192x1xi32>
    %85 = arith.addi %33, %84 : vector<192x1xi32>
    %c16_i32_45 = arith.constant 16 : i32
    %86 = vector.broadcast %c16_i32_45 : i32 to vector<192x1xi32>
    %87 = arith.cmpi slt, %85, %86 : vector<192x1xi32>
    %88 = arith.andi %83, %87 : vector<192x1xi1>
    %cst_46 = arith.constant 0.000000e+00 : f32
    %89 = vector.shape_cast %88 : vector<192x1xi1> to vector<192x1xi1>
    %90 = vector.broadcast %89 : vector<192x1xi1> to vector<192x8xi1>
    %91 = vector.broadcast %cst_46 : f32 to vector<192x8xf32>
    %92 = arith.select %90, %79, %91 : vector<192x8xi1>, vector<192x8xf32>
    %93 = arith.truncf %92 : vector<192x8xf32> to vector<192x8xbf16>
    %94 = tpu.concatenate %77, %78, %93 in 1 : vector<192x8xbf16>, vector<192x8xbf16>, vector<192x8xbf16> -> vector<192x24xbf16>
    %95 = vector.extract_strided_slice %94 {offsets = [0, 0], sizes = [160, 24], strides = [1, 1]} : vector<192x24xbf16> to vector<160x24xbf16>
    %c0_47 = arith.constant 0 : index
    %c0_48 = arith.constant 0 : index
    %c0_49 = arith.constant 0 : index
    %96 = vector.load %arg10[%c0_47, %c0_48, %c0_49] : memref<3x24x8xbf16, #tpu.memory_space<vmem>>, vector<1x24x8xbf16>
    %97 = vector.shape_cast %96 : vector<1x24x8xbf16> to vector<24x8xbf16>
    %cst_50 = arith.constant dense<0.000000e+00> : vector<160x8xf32>
    %98 = tpu.matmul %95, %97, %cst_50 {dimension_numbers = #tpu.dot_dimension_numbers<[1], [0], [0], [1], [0, 0, 1, 1], [], []>} : vector<160x24xbf16>, vector<24x8xbf16>, vector<160x8xf32> -> vector<160x8xf32>
    %99 = vector.extract_strided_slice %94 {offsets = [16, 0], sizes = [160, 24], strides = [1, 1]} : vector<192x24xbf16> to vector<160x24xbf16>
    %c1 = arith.constant 1 : index
    %c0_51 = arith.constant 0 : index
    %c0_52 = arith.constant 0 : index
    %100 = vector.load %arg10[%c1, %c0_51, %c0_52] : memref<3x24x8xbf16, #tpu.memory_space<vmem>>, vector<1x24x8xbf16>
    %101 = vector.shape_cast %100 : vector<1x24x8xbf16> to vector<24x8xbf16>
    %cst_53 = arith.constant dense<0.000000e+00> : vector<160x8xf32>
    %102 = tpu.matmul %99, %101, %cst_53 {dimension_numbers = #tpu.dot_dimension_numbers<[1], [0], [0], [1], [0, 0, 1, 1], [], []>} : vector<160x24xbf16>, vector<24x8xbf16>, vector<160x8xf32> -> vector<160x8xf32>
    %103 = arith.addf %98, %102 : vector<160x8xf32>
    %104 = vector.extract_strided_slice %94 {offsets = [32, 0], sizes = [160, 24], strides = [1, 1]} : vector<192x24xbf16> to vector<160x24xbf16>
    %c2 = arith.constant 2 : index
    %c0_54 = arith.constant 0 : index
    %c0_55 = arith.constant 0 : index
    %105 = vector.load %arg10[%c2, %c0_54, %c0_55] : memref<3x24x8xbf16, #tpu.memory_space<vmem>>, vector<1x24x8xbf16>
    %106 = vector.shape_cast %105 : vector<1x24x8xbf16> to vector<24x8xbf16>
    %cst_56 = arith.constant dense<0.000000e+00> : vector<160x8xf32>
    %107 = tpu.matmul %104, %106, %cst_56 {dimension_numbers = #tpu.dot_dimension_numbers<[1], [0], [0], [1], [0, 0, 1, 1], [], []>} : vector<160x24xbf16>, vector<24x8xbf16>, vector<160x8xf32> -> vector<160x8xf32>
    %108 = arith.addf %103, %107 : vector<160x8xf32>
    %c0_57 = arith.constant 0 : index
    %c0_58 = arith.constant 0 : index
    %109 = vector.load %arg11[%c0_57, %c0_58] : memref<1x8xf32, #tpu.memory_space<vmem>>, vector<1x8xf32>
    %110 = vector.broadcast %109 : vector<1x8xf32> to vector<160x8xf32>
    %111 = arith.addf %108, %110 : vector<160x8xf32>
    %c0_59 = arith.constant 0 : index
    %c0_60 = arith.constant 0 : index
    %112 = vector.load %arg14[%c0_59, %c0_60] : memref<1x8xf32, #tpu.memory_space<vmem>>, vector<1x8xf32>
    %113 = vector.broadcast %16 : vector<160x1xf32> to vector<160x8xf32>
    %114 = vector.broadcast %112 : vector<1x8xf32> to vector<160x8xf32>
    %115 = arith.mulf %113, %114 : vector<160x8xf32>
    %c0_61 = arith.constant 0 : index
    %c0_62 = arith.constant 0 : index
    %116 = vector.load %arg15[%c0_61, %c0_62] : memref<1x8xf32, #tpu.memory_space<vmem>>, vector<1x8xf32>
    %117 = vector.broadcast %116 : vector<1x8xf32> to vector<160x8xf32>
    %118 = arith.addf %115, %117 : vector<160x8xf32>
    %cst_63 = arith.constant 0.000000e+00 : f32
    %119 = vector.broadcast %cst_63 : f32 to vector<160x8xf32>
    %120 = arith.subf %119, %118 : vector<160x8xf32>
    %121 = math.exp %120 : vector<160x8xf32>
    %cst_64 = arith.constant 1.000000e+00 : f32
    %122 = vector.broadcast %cst_64 : f32 to vector<160x8xf32>
    %123 = arith.addf %122, %121 : vector<160x8xf32>
    %124 = tpu.reciprocal %123 {approx = true} : vector<160x8xf32> -> vector<160x8xf32>
    %125 = arith.mulf %118, %124 : vector<160x8xf32>
    %126 = arith.truncf %125 : vector<160x8xf32> to vector<160x8xbf16>
    %c0_65 = arith.constant 0 : index
    %c0_66 = arith.constant 0 : index
    %127 = vector.load %arg16[%c0_65, %c0_66] : memref<8x8xbf16, #tpu.memory_space<vmem>>, vector<8x8xbf16>
    %cst_67 = arith.constant dense<0.000000e+00> : vector<160x8xf32>
    %128 = tpu.matmul %126, %127, %cst_67 {dimension_numbers = #tpu.dot_dimension_numbers<[1], [0], [0], [1], [0, 0, 1, 1], [], []>} : vector<160x8xbf16>, vector<8x8xbf16>, vector<160x8xf32> -> vector<160x8xf32>
    %c0_68 = arith.constant 0 : index
    %c0_69 = arith.constant 0 : index
    %129 = vector.load %arg17[%c0_68, %c0_69] : memref<1x8xf32, #tpu.memory_space<vmem>>, vector<1x8xf32>
    %130 = vector.broadcast %129 : vector<1x8xf32> to vector<160x8xf32>
    %131 = arith.addf %128, %130 : vector<160x8xf32>
    %cst_70 = arith.constant 0.000000e+00 : f32
    %132 = vector.broadcast %cst_70 : f32 to vector<160x8xf32>
    %133 = arith.subf %132, %131 : vector<160x8xf32>
    %134 = math.exp %133 : vector<160x8xf32>
    %cst_71 = arith.constant 1.000000e+00 : f32
    %135 = vector.broadcast %cst_71 : f32 to vector<160x8xf32>
    %136 = arith.addf %135, %134 : vector<160x8xf32>
    %137 = tpu.reciprocal %136 {approx = true} : vector<160x8xf32> -> vector<160x8xf32>
    %138 = arith.mulf %131, %137 : vector<160x8xf32>
    %139 = arith.truncf %138 : vector<160x8xf32> to vector<160x8xbf16>
    %c0_72 = arith.constant 0 : index
    %c0_73 = arith.constant 0 : index
    %140 = vector.load %arg18[%c0_72, %c0_73] : memref<8x8xbf16, #tpu.memory_space<vmem>>, vector<8x8xbf16>
    %cst_74 = arith.constant dense<0.000000e+00> : vector<160x8xf32>
    %141 = tpu.matmul %139, %140, %cst_74 {dimension_numbers = #tpu.dot_dimension_numbers<[1], [0], [0], [1], [0, 0, 1, 1], [], []>} : vector<160x8xbf16>, vector<8x8xbf16>, vector<160x8xf32> -> vector<160x8xf32>
    %c0_75 = arith.constant 0 : index
    %c0_76 = arith.constant 0 : index
    %142 = vector.load %arg19[%c0_75, %c0_76] : memref<1x8xf32, #tpu.memory_space<vmem>>, vector<1x8xf32>
    %143 = vector.broadcast %142 : vector<1x8xf32> to vector<160x8xf32>
    %144 = arith.addf %141, %143 : vector<160x8xf32>
    %145 = arith.mulf %111, %131 : vector<160x8xf32>
    %146 = arith.addf %145, %144 : vector<160x8xf32>
    %cst_77 = arith.constant 0.000000e+00 : f32
    %147 = vector.broadcast %cst_77 : f32 to vector<160x8xf32>
    %148 = arith.subf %147, %146 : vector<160x8xf32>
    %149 = math.exp %148 : vector<160x8xf32>
    %cst_78 = arith.constant 1.000000e+00 : f32
    %150 = vector.broadcast %cst_78 : f32 to vector<160x8xf32>
    %151 = arith.addf %150, %149 : vector<160x8xf32>
    %152 = tpu.reciprocal %151 {approx = true} : vector<160x8xf32> -> vector<160x8xf32>
    %153 = arith.mulf %146, %152 : vector<160x8xf32>
    %cst_79 = arith.constant 0.000000e+00 : f32
    %154 = vector.shape_cast %45 : vector<160x1xi1> to vector<160x1xi1>
    %155 = vector.broadcast %154 : vector<160x1xi1> to vector<160x8xi1>
    %156 = vector.broadcast %cst_79 : f32 to vector<160x8xf32>
    %157 = arith.select %155, %153, %156 : vector<160x8xi1>, vector<160x8xf32>
    %c1_i32_80 = arith.constant 1 : i32
    %158 = tpu.dynamic_rotate %157 by %c1_i32_80 dim 0 : vector<160x8xf32>, i32 -> vector<160x8xf32>
    %c-1_i32_81 = arith.constant -1 : i32
    %159 = vector.broadcast %c-1_i32_81 : i32 to vector<160x1xi32>
    %160 = arith.addi %44, %159 : vector<160x1xi32>
    %c0_i32_82 = arith.constant 0 : i32
    %161 = vector.broadcast %c0_i32_82 : i32 to vector<160x1xi32>
    %162 = arith.cmpi sge, %160, %161 : vector<160x1xi32>
    %c-1_i32_83 = arith.constant -1 : i32
    %163 = vector.broadcast %c-1_i32_83 : i32 to vector<160x1xi32>
    %164 = arith.addi %44, %163 : vector<160x1xi32>
    %c16_i32_84 = arith.constant 16 : i32
    %165 = vector.broadcast %c16_i32_84 : i32 to vector<160x1xi32>
    %166 = arith.cmpi slt, %164, %165 : vector<160x1xi32>
    %167 = arith.andi %162, %166 : vector<160x1xi1>
    %cst_85 = arith.constant 0.000000e+00 : f32
    %168 = vector.shape_cast %167 : vector<160x1xi1> to vector<160x1xi1>
    %169 = vector.broadcast %168 : vector<160x1xi1> to vector<160x8xi1>
    %170 = vector.broadcast %cst_85 : f32 to vector<160x8xf32>
    %171 = arith.select %169, %158, %170 : vector<160x8xi1>, vector<160x8xf32>
    %172 = arith.truncf %171 : vector<160x8xf32> to vector<160x8xbf16>
    %173 = arith.truncf %157 : vector<160x8xf32> to vector<160x8xbf16>
    %c159_i32 = arith.constant 159 : i32
    %174 = tpu.dynamic_rotate %157 by %c159_i32 dim 0 : vector<160x8xf32>, i32 -> vector<160x8xf32>
    %c1_i32_86 = arith.constant 1 : i32
    %175 = vector.broadcast %c1_i32_86 : i32 to vector<160x1xi32>
    %176 = arith.addi %44, %175 : vector<160x1xi32>
    %c0_i32_87 = arith.constant 0 : i32
    %177 = vector.broadcast %c0_i32_87 : i32 to vector<160x1xi32>
    %178 = arith.cmpi sge, %176, %177 : vector<160x1xi32>
    %c1_i32_88 = arith.constant 1 : i32
    %179 = vector.broadcast %c1_i32_88 : i32 to vector<160x1xi32>
    %180 = arith.addi %44, %179 : vector<160x1xi32>
    %c16_i32_89 = arith.constant 16 : i32
    %181 = vector.broadcast %c16_i32_89 : i32 to vector<160x1xi32>
    %182 = arith.cmpi slt, %180, %181 : vector<160x1xi32>
    %183 = arith.andi %178, %182 : vector<160x1xi1>
    %cst_90 = arith.constant 0.000000e+00 : f32
    %184 = vector.shape_cast %183 : vector<160x1xi1> to vector<160x1xi1>
    %185 = vector.broadcast %184 : vector<160x1xi1> to vector<160x8xi1>
    %186 = vector.broadcast %cst_90 : f32 to vector<160x8xf32>
    %187 = arith.select %185, %174, %186 : vector<160x8xi1>, vector<160x8xf32>
    %188 = arith.truncf %187 : vector<160x8xf32> to vector<160x8xbf16>
    %189 = tpu.concatenate %172, %173, %188 in 1 : vector<160x8xbf16>, vector<160x8xbf16>, vector<160x8xbf16> -> vector<160x24xbf16>
    %190 = vector.extract_strided_slice %189 {offsets = [0, 0], sizes = [128, 24], strides = [1, 1]} : vector<160x24xbf16> to vector<128x24xbf16>
    %c0_91 = arith.constant 0 : index
    %c0_92 = arith.constant 0 : index
    %c0_93 = arith.constant 0 : index
    %191 = vector.load %arg12[%c0_91, %c0_92, %c0_93] : memref<3x24x8xbf16, #tpu.memory_space<vmem>>, vector<1x24x8xbf16>
    %192 = vector.shape_cast %191 : vector<1x24x8xbf16> to vector<24x8xbf16>
    %cst_94 = arith.constant dense<0.000000e+00> : vector<128x8xf32>
    %193 = tpu.matmul %190, %192, %cst_94 {dimension_numbers = #tpu.dot_dimension_numbers<[1], [0], [0], [1], [0, 0, 1, 1], [], []>} : vector<128x24xbf16>, vector<24x8xbf16>, vector<128x8xf32> -> vector<128x8xf32>
    %194 = vector.extract_strided_slice %189 {offsets = [16, 0], sizes = [128, 24], strides = [1, 1]} : vector<160x24xbf16> to vector<128x24xbf16>
    %c1_95 = arith.constant 1 : index
    %c0_96 = arith.constant 0 : index
    %c0_97 = arith.constant 0 : index
    %195 = vector.load %arg12[%c1_95, %c0_96, %c0_97] : memref<3x24x8xbf16, #tpu.memory_space<vmem>>, vector<1x24x8xbf16>
    %196 = vector.shape_cast %195 : vector<1x24x8xbf16> to vector<24x8xbf16>
    %cst_98 = arith.constant dense<0.000000e+00> : vector<128x8xf32>
    %197 = tpu.matmul %194, %196, %cst_98 {dimension_numbers = #tpu.dot_dimension_numbers<[1], [0], [0], [1], [0, 0, 1, 1], [], []>} : vector<128x24xbf16>, vector<24x8xbf16>, vector<128x8xf32> -> vector<128x8xf32>
    %198 = arith.addf %193, %197 : vector<128x8xf32>
    %199 = vector.extract_strided_slice %189 {offsets = [32, 0], sizes = [128, 24], strides = [1, 1]} : vector<160x24xbf16> to vector<128x24xbf16>
    %c2_99 = arith.constant 2 : index
    %c0_100 = arith.constant 0 : index
    %c0_101 = arith.constant 0 : index
    %200 = vector.load %arg12[%c2_99, %c0_100, %c0_101] : memref<3x24x8xbf16, #tpu.memory_space<vmem>>, vector<1x24x8xbf16>
    %201 = vector.shape_cast %200 : vector<1x24x8xbf16> to vector<24x8xbf16>
    %cst_102 = arith.constant dense<0.000000e+00> : vector<128x8xf32>
    %202 = tpu.matmul %199, %201, %cst_102 {dimension_numbers = #tpu.dot_dimension_numbers<[1], [0], [0], [1], [0, 0, 1, 1], [], []>} : vector<128x24xbf16>, vector<24x8xbf16>, vector<128x8xf32> -> vector<128x8xf32>
    %203 = arith.addf %198, %202 : vector<128x8xf32>
    %c0_103 = arith.constant 0 : index
    %c0_104 = arith.constant 0 : index
    %204 = vector.load %arg13[%c0_103, %c0_104] : memref<1x8xf32, #tpu.memory_space<vmem>>, vector<1x8xf32>
    %205 = vector.broadcast %204 : vector<1x8xf32> to vector<128x8xf32>
    %206 = arith.addf %203, %205 : vector<128x8xf32>
    %207 = vector.extract_strided_slice %51 {offsets = [32, 0], sizes = [128, 8], strides = [1, 1]} : vector<192x8xf32> to vector<128x8xf32>
    %208 = arith.addf %206, %207 : vector<128x8xf32>
    %209 = vector.shape_cast %208 : vector<128x8xf32> to vector<1x8x16x8xf32>
    %c0_105 = arith.constant 0 : index
    %c0_106 = arith.constant 0 : index
    %c0_107 = arith.constant 0 : index
    %c0_108 = arith.constant 0 : index
    %210 = vector.load %arg20[%c0_105, %c0_106, %c0_107, %c0_108] : memref<1x8x16x8xf32, #tpu.memory_space<vmem>>, vector<1x8x16x8xf32>
    tpu.vector_store %arg20[%c0_105, %c0_106, %c0_107, %c0_108], %209 {strides = array<i32>} : memref<1x8x16x8xf32, #tpu.memory_space<vmem>>, vector<1x8x16x8xf32>,
    return
  }
  func.func @transform_0(%arg0: i32, %arg1: i32) -> (i32, i32, i32, i32) {
    %c4_i32 = arith.constant 4 : i32
    %0 = arith.muli %arg1, %c4_i32 : i32
    %c1_i32 = arith.constant 1 : i32
    %1 = arith.subi %0, %c1_i32 : i32
    %c0_i32 = arith.constant 0 : i32
    %2 = arith.maxsi %1, %c0_i32 : i32
    %c0_i32_0 = arith.constant 0 : i32
    %c0_i32_1 = arith.constant 0 : i32
    %c0_i32_2 = arith.constant 0 : i32
    return %arg0, %2, %c0_i32_0, %c0_i32_1 : i32, i32, i32, i32
  }
  func.func @transform_1(%arg0: i32, %arg1: i32) -> (i32, i32, i32, i32) {
    %c0_i32 = arith.constant 0 : i32
    %c0_i32_0 = arith.constant 0 : i32
    %c0_i32_1 = arith.constant 0 : i32
    return %arg0, %arg1, %c0_i32, %c0_i32_0 : i32, i32, i32, i32
  }
  func.func @transform_2(%arg0: i32, %arg1: i32) -> (i32, i32, i32, i32) {
    %c1_i32 = arith.constant 1 : i32
    %0 = arith.addi %arg1, %c1_i32 : i32
    %c4_i32 = arith.constant 4 : i32
    %1 = arith.muli %0, %c4_i32 : i32
    %c7_i32 = arith.constant 7 : i32
    %2 = arith.minsi %1, %c7_i32 : i32
    %c0_i32 = arith.constant 0 : i32
    %c0_i32_0 = arith.constant 0 : i32
    %c0_i32_1 = arith.constant 0 : i32
    return %arg0, %2, %c0_i32, %c0_i32_0 : i32, i32, i32, i32
  }
  func.func @transform_3(%arg0: i32, %arg1: i32) -> (i32, i32, i32, i32) {
    %c4_i32 = arith.constant 4 : i32
    %0 = arith.muli %arg1, %c4_i32 : i32
    %c1_i32 = arith.constant 1 : i32
    %1 = arith.subi %0, %c1_i32 : i32
    %c0_i32 = arith.constant 0 : i32
    %2 = arith.maxsi %1, %c0_i32 : i32
    %c0_i32_0 = arith.constant 0 : i32
    %c0_i32_1 = arith.constant 0 : i32
    %c0_i32_2 = arith.constant 0 : i32
    return %arg0, %2, %c0_i32_0, %c0_i32_1 : i32, i32, i32, i32
  }
  func.func @transform_4(%arg0: i32, %arg1: i32) -> (i32, i32, i32, i32) {
    %c0_i32 = arith.constant 0 : i32
    %c0_i32_0 = arith.constant 0 : i32
    %c0_i32_1 = arith.constant 0 : i32
    return %arg0, %arg1, %c0_i32, %c0_i32_0 : i32, i32, i32, i32
  }
  func.func @transform_5(%arg0: i32, %arg1: i32) -> (i32, i32, i32, i32) {
    %c1_i32 = arith.constant 1 : i32
    %0 = arith.addi %arg1, %c1_i32 : i32
    %c4_i32 = arith.constant 4 : i32
    %1 = arith.muli %0, %c4_i32 : i32
    %c7_i32 = arith.constant 7 : i32
    %2 = arith.minsi %1, %c7_i32 : i32
    %c0_i32 = arith.constant 0 : i32
    %c0_i32_0 = arith.constant 0 : i32
    %c0_i32_1 = arith.constant 0 : i32
    return %arg0, %2, %c0_i32, %c0_i32_0 : i32, i32, i32, i32
  }
  func.func @transform_6(%arg0: i32, %arg1: i32) -> (i32, i32) {
    %c0_i32 = arith.constant 0 : i32
    %c0_i32_0 = arith.constant 0 : i32
    %c0_i32_1 = arith.constant 0 : i32
    return %c0_i32, %c0_i32_0 : i32, i32
  }
  func.func @transform_7(%arg0: i32, %arg1: i32) -> (i32, i32) {
    %c0_i32 = arith.constant 0 : i32
    %c0_i32_0 = arith.constant 0 : i32
    %c0_i32_1 = arith.constant 0 : i32
    return %c0_i32, %c0_i32_0 : i32, i32
  }
  func.func @transform_8(%arg0: i32, %arg1: i32) -> (i32, i32, i32) {
    %c0_i32 = arith.constant 0 : i32
    %c0_i32_0 = arith.constant 0 : i32
    %c0_i32_1 = arith.constant 0 : i32
    %c0_i32_2 = arith.constant 0 : i32
    return %c0_i32, %c0_i32_0, %c0_i32_1 : i32, i32, i32
  }
  func.func @transform_9(%arg0: i32, %arg1: i32) -> (i32, i32) {
    %c0_i32 = arith.constant 0 : i32
    %c0_i32_0 = arith.constant 0 : i32
    %c0_i32_1 = arith.constant 0 : i32
    return %c0_i32, %c0_i32_0 : i32, i32
  }
  func.func @transform_10(%arg0: i32, %arg1: i32) -> (i32, i32, i32) {
    %c0_i32 = arith.constant 0 : i32
    %c0_i32_0 = arith.constant 0 : i32
    %c0_i32_1 = arith.constant 0 : i32
    %c0_i32_2 = arith.constant 0 : i32
    return %c0_i32, %c0_i32_0, %c0_i32_1 : i32, i32, i32
  }
  func.func @transform_11(%arg0: i32, %arg1: i32) -> (i32, i32) {
    %c0_i32 = arith.constant 0 : i32
    %c0_i32_0 = arith.constant 0 : i32
    %c0_i32_1 = arith.constant 0 : i32
    return %c0_i32, %c0_i32_0 : i32, i32
  }
  func.func @transform_12(%arg0: i32, %arg1: i32) -> (i32, i32) {
    %c0_i32 = arith.constant 0 : i32
    %c0_i32_0 = arith.constant 0 : i32
    %c0_i32_1 = arith.constant 0 : i32
    return %c0_i32, %c0_i32_0 : i32, i32
  }
  func.func @transform_13(%arg0: i32, %arg1: i32) -> (i32, i32) {
    %c0_i32 = arith.constant 0 : i32
    %c0_i32_0 = arith.constant 0 : i32
    %c0_i32_1 = arith.constant 0 : i32
    return %c0_i32, %c0_i32_0 : i32, i32
  }
  func.func @transform_14(%arg0: i32, %arg1: i32) -> (i32, i32) {
    %c0_i32 = arith.constant 0 : i32
    %c0_i32_0 = arith.constant 0 : i32
    %c0_i32_1 = arith.constant 0 : i32
    return %c0_i32, %c0_i32_0 : i32, i32
  }
  func.func @transform_15(%arg0: i32, %arg1: i32) -> (i32, i32) {
    %c0_i32 = arith.constant 0 : i32
    %c0_i32_0 = arith.constant 0 : i32
    %c0_i32_1 = arith.constant 0 : i32
    return %c0_i32, %c0_i32_0 : i32, i32
  }
  func.func @transform_16(%arg0: i32, %arg1: i32) -> (i32, i32) {
    %c0_i32 = arith.constant 0 : i32
    %c0_i32_0 = arith.constant 0 : i32
    %c0_i32_1 = arith.constant 0 : i32
    return %c0_i32, %c0_i32_0 : i32, i32
  }
  func.func @transform_17(%arg0: i32, %arg1: i32) -> (i32, i32) {
    %c0_i32 = arith.constant 0 : i32
    %c0_i32_0 = arith.constant 0 : i32
    %c0_i32_1 = arith.constant 0 : i32
    return %c0_i32, %c0_i32_0 : i32, i32
  }
  func.func @transform_18(%arg0: i32, %arg1: i32) -> (i32, i32, i32, i32) {
    %c0_i32 = arith.constant 0 : i32
    %c0_i32_0 = arith.constant 0 : i32
    %c0_i32_1 = arith.constant 0 : i32
    return %arg0, %arg1, %c0_i32, %c0_i32_0 : i32, i32, i32, i32
  }
}

</mosaic_0001>

<llo_original>
// kernel: tpu_custom_call.1
$region0: #{tpu_custom_call.1}
  #allocation0 [shape = 'u32[]', space=smem, size = 0x4, offset = 0x4, fixed_abs, tag = 'smem constant byte address 0x4 - core index']
  #allocation1 [shape = 'u32[144,128]{1,0:T(1,128)}', space=vmem, size = 0x12000, scoped, tag = 'internal scratch']
  %s0 = inlined_call_operand.vmem [shape: f32[2,16,16,4], index: 0, kind: input, shape index: {}]
  %s1 = inlined_call_operand.vmem [shape: f32[2,16,16,4], index: 1, kind: input, shape index: {}]
  %s2 = inlined_call_operand.vmem [shape: f32[2,16,16,4], index: 2, kind: input, shape index: {}]
  %s3 = inlined_call_operand.vmem [shape: f32[2,16,16,1], index: 3, kind: input, shape index: {}]
  %s4 = inlined_call_operand.vmem [shape: f32[2,16,16,1], index: 4, kind: input, shape index: {}]
  %s5 = inlined_call_operand.vmem [shape: f32[2,16,16,1], index: 5, kind: input, shape index: {}]
  %s6 = inlined_call_operand.vmem [shape: bf16[4,8], index: 6, kind: input, shape index: {}]
  %s7 = inlined_call_operand.vmem [shape: f32[1,8], index: 7, kind: input, shape index: {}]
  %s8 = inlined_call_operand.vmem [shape: bf16[3,24,8], index: 8, kind: input, shape index: {}]
  %s9 = inlined_call_operand.vmem [shape: f32[1,8], index: 9, kind: input, shape index: {}]
  %s10 = inlined_call_operand.vmem [shape: bf16[3,24,8], index: 10, kind: input, shape index: {}]
  %s11 = inlined_call_operand.vmem [shape: f32[1,8], index: 11, kind: input, shape index: {}]
  %s12 = inlined_call_operand.vmem [shape: f32[1,8], index: 12, kind: input, shape index: {}]
  %s13 = inlined_call_operand.vmem [shape: f32[1,8], index: 13, kind: input, shape index: {}]
  %s14 = inlined_call_operand.vmem [shape: bf16[8,8], index: 14, kind: input, shape index: {}]
  %s15 = inlined_call_operand.vmem [shape: f32[1,8], index: 15, kind: input, shape index: {}]
  %s16 = inlined_call_operand.vmem [shape: bf16[8,8], index: 16, kind: input, shape index: {}]
  %s17 = inlined_call_operand.vmem [shape: f32[1,8], index: 17, kind: input, shape index: {}]
  %s18 = inlined_call_operand.vmem [shape: f32[2,16,16,8], index: 18, kind: output, shape index: {}]
  %s19 = sld [smem:[#allocation0]]
  $region105: #{tpu_custom_call.1} parent=0
    _
  %s21 = ssub.s32 1, %s19
  %s22 = scalar_select 0, %s21, %s19
  loop: start=0, step=1, limit=6
  $region2: #{tpu_custom_call.1} parent=0 // loop_pre_header
    _
  $region3: #{tpu_custom_call.1} parent=0 // loop_header
    %s24 = sphi 0, %s28
    %p25 = scmp.ge.s32.totalorder %s24, 6
    %s31 = sphi 0, %s43
    %s32 = sphi 0, %s39
    %s33 = sphi 0, %s31
    %s34 = sphi 0, %s32
    %s35 = sphi 0, %s33
    %s36 = sphi 0, %s34
    %s56 = sphi 0, %s58
    %s59 = sphi 0, %s56
    %s60 = sphi 0, %s59
    %s76 = sphi 0, %s60
    %s84 = sphi 0, %s86
    %s87 = sphi 0, %s84
    %s88 = sphi 0, %s87
    %s104 = sphi 0, %s88
    %s120 = sphi 0, %s122
    %s123 = sphi 0, %s120
    %s124 = sphi 0, %s123
    %s140 = sphi 0, %s124
    %s156 = sphi 0, %s158
    %s159 = sphi 0, %s156
    %s160 = sphi 0, %s159
    %s176 = sphi 0, %s160
    %s184 = sphi 0, %s186
    %s187 = sphi 0, %s184
    %s188 = sphi 0, %s187
    %s204 = sphi 0, %s188
    %s220 = sphi 0, %s222
    %s223 = sphi 0, %s220
    %s224 = sphi 0, %s223
    %s240 = sphi 0, %s224
    %s244 = sphi 0, %s244
    %s246 = sphi 0, %s244
    %s247 = sphi 0, %s246
    %s261 = sphi 0, %s247
    %s265 = sphi 0, %s265
    %s267 = sphi 0, %s265
    %s268 = sphi 0, %s267
    %s282 = sphi 0, %s268
    %s286 = sphi 0, %s286
    %s288 = sphi 0, %s286
    %s289 = sphi 0, %s288
    %s303 = sphi 0, %s289
    %s307 = sphi 0, %s307
    %s309 = sphi 0, %s307
    %s310 = sphi 0, %s309
    %s324 = sphi 0, %s310
    %s328 = sphi 0, %s328
    %s330 = sphi 0, %s328
    %s331 = sphi 0, %s330
    %s345 = sphi 0, %s331
    %s349 = sphi 0, %s349
    %s351 = sphi 0, %s349
    %s352 = sphi 0, %s351
    %s366 = sphi 0, %s352
    %s370 = sphi 0, %s370
    %s372 = sphi 0, %s370
    %s373 = sphi 0, %s372
    %s387 = sphi 0, %s373
    %s391 = sphi 0, %s391
    %s393 = sphi 0, %s391
    %s394 = sphi 0, %s393
    %s408 = sphi 0, %s394
    %s412 = sphi 0, %s412
    %s414 = sphi 0, %s412
    %s415 = sphi 0, %s414
    %s429 = sphi 0, %s415
    %s433 = sphi 0, %s433
    %s435 = sphi 0, %s433
    %s436 = sphi 0, %s435
    %s450 = sphi 0, %s436
    %s454 = sphi 0, %s454
    %s456 = sphi 0, %s454
    %s457 = sphi 0, %s456
    %s471 = sphi 0, %s457
    %s475 = sphi 0, %s475
    %s477 = sphi 0, %s475
    %s478 = sphi 0, %s477
    %s492 = sphi 0, %s478
    %s500 = sphi 0, %s502
    %s503 = sphi 0, %s500
    %s504 = sphi 0, %s503
    %s520 = sphi 0, %s504
  $region4: #{tpu_custom_call.1} parent=0 // loop_header_branch
    %27 = sbr.rel (%p25) target = $region8
  $region5: #{tpu_custom_call.1} parent=0 // loop_body
    %s29 = ssub.s32 %s24, 1
    %s30 = ssub.s32 %s24, 2
    %s37 = sadd.s32 1, %s32
    %p38 = scmp.ge.s32.totalorder %s37, 2
    %s39 = scalar_select %p38, 0, %s37
    %s40 = sadd.s32 1, %s31
    %s41 = scalar_select %p38, %s40, %s31
    %p42 = scmp.ge.s32.totalorder %s41, 2
    %s43 = scalar_select %p42, 0, %s41
    %s44 = smul.u32 %s32, 4
    %s45 = ssub.s32 %s44, 1
    %p46 = scmp.gt.s32.totalorder %s45, 0
    %s47 = scalar_select %p46, %s45, 0
    %s48 = smul.u32 %s39, 4
    %s49 = ssub.s32 %s48, 1
    %p50 = scmp.gt.s32.totalorder %s49, 0
    %s51 = scalar_select %p50, %s49, 0
    %s52 = ssub.s32 %s31, %s43
    %s53 = ssub.s32 %s47, %s51
    %s54 = sor.u32 %s52, %s53
    %p55 = scmp.eq.s32.totalorder %s54, 0
    %s57 = sadd.s32 %s56, 1
    %s58 = scalar_select %p55, %s56, %s57
    %p61 = pneg %p55
    %p62 = scmp.eq.s32.totalorder %s24, 3
    %p63 = por %p61, %p62
    %p64 = scmp.ne.s32.totalorder %s56, %s59
    %p65 = scmp.eq.s32.totalorder %s24, 0
    %p66 = por %p64, %p65
    %p67 = scmp.ne.s32.totalorder %s56, %s59
    %p68 = scmp.eq.s32.totalorder %s29, 3
    %p69 = por %p67, %p68
    %p70 = scmp.ne.s32.totalorder %s59, %s60
    %p71 = scmp.eq.s32.totalorder %s29, 0
    %p72 = por %p70, %p71
    %p73 = scmp.ne.s32.totalorder %s59, %s60
    %p74 = scmp.eq.s32.totalorder %s30, 3
    %p75 = por %p73, %p74
    %p77 = scmp.ne.s32.totalorder %s60, %s76
    %p78 = scmp.eq.s32.totalorder %s30, 0
    %p79 = por %p77, %p78
    %s80 = ssub.s32 %s31, %s43
    %s81 = ssub.s32 %s32, %s39
    %s82 = sor.u32 %s80, %s81
    %p83 = scmp.eq.s32.totalorder %s82, 0
    %s85 = sadd.s32 %s84, 1
    %s86 = scalar_select %p83, %s84, %s85
    %p89 = pneg %p83
    %p90 = scmp.eq.s32.totalorder %s24, 3
    %p91 = por %p89, %p90
    %p92 = scmp.ne.s32.totalorder %s84, %s87
    %p93 = scmp.eq.s32.totalorder %s24, 0
    %p94 = por %p92, %p93
    %p95 = scmp.ne.s32.totalorder %s84, %s87
    %p96 = scmp.eq.s32.totalorder %s29, 3
    %p97 = por %p95, %p96
    %p98 = scmp.ne.s32.totalorder %s87, %s88
    %p99 = scmp.eq.s32.totalorder %s29, 0
    %p100 = por %p98, %p99
    %p101 = scmp.ne.s32.totalorder %s87, %s88
    %p102 = scmp.eq.s32.totalorder %s30, 3
    %p103 = por %p101, %p102
    %p105 = scmp.ne.s32.totalorder %s88, %s104
    %p106 = scmp.eq.s32.totalorder %s30, 0
    %p107 = por %p105, %p106
    %s108 = sadd.s32 %s32, 1
    %s109 = smul.u32 %s108, 4
    %p110 = scmp.lt.s32.totalorder %s109, 7
    %s111 = scalar_select %p110, %s109, 7
    %s112 = sadd.s32 %s39, 1
    %s113 = smul.u32 %s112, 4
    %p114 = scmp.lt.s32.totalorder %s113, 7
    %s115 = scalar_select %p114, %s113, 7
    %s116 = ssub.s32 %s31, %s43
    %s117 = ssub.s32 %s111, %s115
    %s118 = sor.u32 %s116, %s117
    %p119 = scmp.eq.s32.totalorder %s118, 0
    %s121 = sadd.s32 %s120, 1
    %s122 = scalar_select %p119, %s120, %s121
    %p125 = pneg %p119
    %p126 = scmp.eq.s32.totalorder %s24, 3
    %p127 = por %p125, %p126
    %p128 = scmp.ne.s32.totalorder %s120, %s123
    %p129 = scmp.eq.s32.totalorder %s24, 0
    %p130 = por %p128, %p129
    %p131 = scmp.ne.s32.totalorder %s120, %s123
    %p132 = scmp.eq.s32.totalorder %s29, 3
    %p133 = por %p131, %p132
    %p134 = scmp.ne.s32.totalorder %s123, %s124
    %p135 = scmp.eq.s32.totalorder %s29, 0
    %p136 = por %p134, %p135
    %p137 = scmp.ne.s32.totalorder %s123, %s124
    %p138 = scmp.eq.s32.totalorder %s30, 3
    %p139 = por %p137, %p138
    %p141 = scmp.ne.s32.totalorder %s124, %s140
    %p142 = scmp.eq.s32.totalorder %s30, 0
    %p143 = por %p141, %p142
    %s144 = smul.u32 %s32, 4
    %s145 = ssub.s32 %s144, 1
    %p146 = scmp.gt.s32.totalorder %s145, 0
    %s147 = scalar_select %p146, %s145, 0
    %s148 = smul.u32 %s39, 4
    %s149 = ssub.s32 %s148, 1
    %p150 = scmp.gt.s32.totalorder %s149, 0
    %s151 = scalar_select %p150, %s149, 0
    %s152 = ssub.s32 %s31, %s43
    %s153 = ssub.s32 %s147, %s151
    %s154 = sor.u32 %s152, %s153
    %p155 = scmp.eq.s32.totalorder %s154, 0
    %s157 = sadd.s32 %s156, 1
    %s158 = scalar_select %p155, %s156, %s157
    %p161 = pneg %p155
    %p162 = scmp.eq.s32.totalorder %s24, 3
    %p163 = por %p161, %p162
    %p164 = scmp.ne.s32.totalorder %s156, %s159
    %p165 = scmp.eq.s32.totalorder %s24, 0
    %p166 = por %p164, %p165
    %p167 = scmp.ne.s32.totalorder %s156, %s159
    %p168 = scmp.eq.s32.totalorder %s29, 3
    %p169 = por %p167, %p168
    %p170 = scmp.ne.s32.totalorder %s159, %s160
    %p171 = scmp.eq.s32.totalorder %s29, 0
    %p172 = por %p170, %p171
    %p173 = scmp.ne.s32.totalorder %s159, %s160
    %p174 = scmp.eq.s32.totalorder %s30, 3
    %p175 = por %p173, %p174
    %p177 = scmp.ne.s32.totalorder %s160, %s176
    %p178 = scmp.eq.s32.totalorder %s30, 0
    %p179 = por %p177, %p178
    %s180 = ssub.s32 %s31, %s43
    %s181 = ssub.s32 %s32, %s39
    %s182 = sor.u32 %s180, %s181
    %p183 = scmp.eq.s32.totalorder %s182, 0
    %s185 = sadd.s32 %s184, 1
    %s186 = scalar_select %p183, %s184, %s185
    %p189 = pneg %p183
    %p190 = scmp.eq.s32.totalorder %s24, 3
    %p191 = por %p189, %p190
    %p192 = scmp.ne.s32.totalorder %s184, %s187
    %p193 = scmp.eq.s32.totalorder %s24, 0
    %p194 = por %p192, %p193
    %p195 = scmp.ne.s32.totalorder %s184, %s187
    %p196 = scmp.eq.s32.totalorder %s29, 3
    %p197 = por %p195, %p196
    %p198 = scmp.ne.s32.totalorder %s187, %s188
    %p199 = scmp.eq.s32.totalorder %s29, 0
    %p200 = por %p198, %p199
    %p201 = scmp.ne.s32.totalorder %s187, %s188
    %p202 = scmp.eq.s32.totalorder %s30, 3
    %p203 = por %p201, %p202
    %p205 = scmp.ne.s32.totalorder %s188, %s204
    %p206 = scmp.eq.s32.totalorder %s30, 0
    %p207 = por %p205, %p206
    %s208 = sadd.s32 %s32, 1
    %s209 = smul.u32 %s208, 4
    %p210 = scmp.lt.s32.totalorder %s209, 7
    %s211 = scalar_select %p210, %s209, 7
    %s212 = sadd.s32 %s39, 1
    %s213 = smul.u32 %s212, 4
    %p214 = scmp.lt.s32.totalorder %s213, 7
    %s215 = scalar_select %p214, %s213, 7
    %s216 = ssub.s32 %s31, %s43
    %s217 = ssub.s32 %s211, %s215
    %s218 = sor.u32 %s216, %s217
    %p219 = scmp.eq.s32.totalorder %s218, 0
    %s221 = sadd.s32 %s220, 1
    %s222 = scalar_select %p219, %s220, %s221
    %p225 = pneg %p219
    %p226 = scmp.eq.s32.totalorder %s24, 3
    %p227 = por %p225, %p226
    %p228 = scmp.ne.s32.totalorder %s220, %s223
    %p229 = scmp.eq.s32.totalorder %s24, 0
    %p230 = por %p228, %p229
    %p231 = scmp.ne.s32.totalorder %s220, %s223
    %p232 = scmp.eq.s32.totalorder %s29, 3
    %p233 = por %p231, %p232
    %p234 = scmp.ne.s32.totalorder %s223, %s224
    %p235 = scmp.eq.s32.totalorder %s29, 0
    %p236 = por %p234, %p235
    %p237 = scmp.ne.s32.totalorder %s223, %s224
    %p238 = scmp.eq.s32.totalorder %s30, 3
    %p239 = por %p237, %p238
    %p241 = scmp.ne.s32.totalorder %s224, %s240
    %p242 = scmp.eq.s32.totalorder %s30, 0
    %p243 = por %p241, %p242
    %s245 = sadd.s32 %s244, 1
    %p248 = scmp.eq.s32.totalorder %s24, 3
    %p249 = scmp.ne.s32.totalorder %s244, %s246
    %p250 = scmp.eq.s32.totalorder %s24, 0
    %p251 = por %p249, %p250
    %p252 = scmp.ne.s32.totalorder %s244, %s246
    %p253 = scmp.eq.s32.totalorder %s29, 3
    %p254 = por %p252, %p253
    %p255 = scmp.ne.s32.totalorder %s246, %s247
    %p256 = scmp.eq.s32.totalorder %s29, 0
    %p257 = por %p255, %p256
    %p258 = scmp.ne.s32.totalorder %s246, %s247
    %p259 = scmp.eq.s32.totalorder %s30, 3
    %p260 = por %p258, %p259
    %p262 = scmp.ne.s32.totalorder %s247, %s261
    %p263 = scmp.eq.s32.totalorder %s30, 0
    %p264 = por %p262, %p263
    %s266 = sadd.s32 %s265, 1
    %p269 = scmp.eq.s32.totalorder %s24, 3
    %p270 = scmp.ne.s32.totalorder %s265, %s267
    %p271 = scmp.eq.s32.totalorder %s24, 0
    %p272 = por %p270, %p271
    %p273 = scmp.ne.s32.totalorder %s265, %s267
    %p274 = scmp.eq.s32.totalorder %s29, 3
    %p275 = por %p273, %p274
    %p276 = scmp.ne.s32.totalorder %s267, %s268
    %p277 = scmp.eq.s32.totalorder %s29, 0
    %p278 = por %p276, %p277
    %p279 = scmp.ne.s32.totalorder %s267, %s268
    %p280 = scmp.eq.s32.totalorder %s30, 3
    %p281 = por %p279, %p280
    %p283 = scmp.ne.s32.totalorder %s268, %s282
    %p284 = scmp.eq.s32.totalorder %s30, 0
    %p285 = por %p283, %p284
    %s287 = sadd.s32 %s286, 1
    %p290 = scmp.eq.s32.totalorder %s24, 3
    %p291 = scmp.ne.s32.totalorder %s286, %s288
    %p292 = scmp.eq.s32.totalorder %s24, 0
    %p293 = por %p291, %p292
    %p294 = scmp.ne.s32.totalorder %s286, %s288
    %p295 = scmp.eq.s32.totalorder %s29, 3
    %p296 = por %p294, %p295
    %p297 = scmp.ne.s32.totalorder %s288, %s289
    %p298 = scmp.eq.s32.totalorder %s29, 0
    %p299 = por %p297, %p298
    %p300 = scmp.ne.s32.totalorder %s288, %s289
    %p301 = scmp.eq.s32.totalorder %s30, 3
    %p302 = por %p300, %p301
    %p304 = scmp.ne.s32.totalorder %s289, %s303
    %p305 = scmp.eq.s32.totalorder %s30, 0
    %p306 = por %p304, %p305
    %s308 = sadd.s32 %s307, 1
    %p311 = scmp.eq.s32.totalorder %s24, 3
    %p312 = scmp.ne.s32.totalorder %s307, %s309
    %p313 = scmp.eq.s32.totalorder %s24, 0
    %p314 = por %p312, %p313
    %p315 = scmp.ne.s32.totalorder %s307, %s309
    %p316 = scmp.eq.s32.totalorder %s29, 3
    %p317 = por %p315, %p316
    %p318 = scmp.ne.s32.totalorder %s309, %s310
    %p319 = scmp.eq.s32.totalorder %s29, 0
    %p320 = por %p318, %p319
    %p321 = scmp.ne.s32.totalorder %s309, %s310
    %p322 = scmp.eq.s32.totalorder %s30, 3
    %p323 = por %p321, %p322
    %p325 = scmp.ne.s32.totalorder %s310, %s324
    %p326 = scmp.eq.s32.totalorder %s30, 0
    %p327 = por %p325, %p326
    %s329 = sadd.s32 %s328, 1
    %p332 = scmp.eq.s32.totalorder %s24, 3
    %p333 = scmp.ne.s32.totalorder %s328, %s330
    %p334 = scmp.eq.s32.totalorder %s24, 0
    %p335 = por %p333, %p334
    %p336 = scmp.ne.s32.totalorder %s328, %s330
    %p337 = scmp.eq.s32.totalorder %s29, 3
    %p338 = por %p336, %p337
    %p339 = scmp.ne.s32.totalorder %s330, %s331
    %p340 = scmp.eq.s32.totalorder %s29, 0
    %p341 = por %p339, %p340
    %p342 = scmp.ne.s32.totalorder %s330, %s331
    %p343 = scmp.eq.s32.totalorder %s30, 3
    %p344 = por %p342, %p343
    %p346 = scmp.ne.s32.totalorder %s331, %s345
    %p347 = scmp.eq.s32.totalorder %s30, 0
    %p348 = por %p346, %p347
    %s350 = sadd.s32 %s349, 1
    %p353 = scmp.eq.s32.totalorder %s24, 3
    %p354 = scmp.ne.s32.totalorder %s349, %s351
    %p355 = scmp.eq.s32.totalorder %s24, 0
    %p356 = por %p354, %p355
    %p357 = scmp.ne.s32.totalorder %s349, %s351
    %p358 = scmp.eq.s32.totalorder %s29, 3
    %p359 = por %p357, %p358
    %p360 = scmp.ne.s32.totalorder %s351, %s352
    %p361 = scmp.eq.s32.totalorder %s29, 0
    %p362 = por %p360, %p361
    %p363 = scmp.ne.s32.totalorder %s351, %s352
    %p364 = scmp.eq.s32.totalorder %s30, 3
    %p365 = por %p363, %p364
    %p367 = scmp.ne.s32.totalorder %s352, %s366
    %p368 = scmp.eq.s32.totalorder %s30, 0
    %p369 = por %p367, %p368
    %s371 = sadd.s32 %s370, 1
    %p374 = scmp.eq.s32.totalorder %s24, 3
    %p375 = scmp.ne.s32.totalorder %s370, %s372
    %p376 = scmp.eq.s32.totalorder %s24, 0
    %p377 = por %p375, %p376
    %p378 = scmp.ne.s32.totalorder %s370, %s372
    %p379 = scmp.eq.s32.totalorder %s29, 3
    %p380 = por %p378, %p379
    %p381 = scmp.ne.s32.totalorder %s372, %s373
    %p382 = scmp.eq.s32.totalorder %s29, 0
    %p383 = por %p381, %p382
    %p384 = scmp.ne.s32.totalorder %s372, %s373
    %p385 = scmp.eq.s32.totalorder %s30, 3
    %p386 = por %p384, %p385
    %p388 = scmp.ne.s32.totalorder %s373, %s387
    %p389 = scmp.eq.s32.totalorder %s30, 0
    %p390 = por %p388, %p389
    %s392 = sadd.s32 %s391, 1
    %p395 = scmp.eq.s32.totalorder %s24, 3
    %p396 = scmp.ne.s32.totalorder %s391, %s393
    %p397 = scmp.eq.s32.totalorder %s24, 0
    %p398 = por %p396, %p397
    %p399 = scmp.ne.s32.totalorder %s391, %s393
    %p400 = scmp.eq.s32.totalorder %s29, 3
    %p401 = por %p399, %p400
    %p402 = scmp.ne.s32.totalorder %s393, %s394
    %p403 = scmp.eq.s32.totalorder %s29, 0
    %p404 = por %p402, %p403
    %p405 = scmp.ne.s32.totalorder %s393, %s394
    %p406 = scmp.eq.s32.totalorder %s30, 3
    %p407 = por %p405, %p406
    %p409 = scmp.ne.s32.totalorder %s394, %s408
    %p410 = scmp.eq.s32.totalorder %s30, 0
    %p411 = por %p409, %p410
    %s413 = sadd.s32 %s412, 1
    %p416 = scmp.eq.s32.totalorder %s24, 3
    %p417 = scmp.ne.s32.totalorder %s412, %s414
    %p418 = scmp.eq.s32.totalorder %s24, 0
    %p419 = por %p417, %p418
    %p420 = scmp.ne.s32.totalorder %s412, %s414
    %p421 = scmp.eq.s32.totalorder %s29, 3
    %p422 = por %p420, %p421
    %p423 = scmp.ne.s32.totalorder %s414, %s415
    %p424 = scmp.eq.s32.totalorder %s29, 0
    %p425 = por %p423, %p424
    %p426 = scmp.ne.s32.totalorder %s414, %s415
    %p427 = scmp.eq.s32.totalorder %s30, 3
    %p428 = por %p426, %p427
    %p430 = scmp.ne.s32.totalorder %s415, %s429
    %p431 = scmp.eq.s32.totalorder %s30, 0
    %p432 = por %p430, %p431
    %s434 = sadd.s32 %s433, 1
    %p437 = scmp.eq.s32.totalorder %s24, 3
    %p438 = scmp.ne.s32.totalorder %s433, %s435
    %p439 = scmp.eq.s32.totalorder %s24, 0
    %p440 = por %p438, %p439
    %p441 = scmp.ne.s32.totalorder %s433, %s435
    %p442 = scmp.eq.s32.totalorder %s29, 3
    %p443 = por %p441, %p442
    %p444 = scmp.ne.s32.totalorder %s435, %s436
    %p445 = scmp.eq.s32.totalorder %s29, 0
    %p446 = por %p444, %p445
    %p447 = scmp.ne.s32.totalorder %s435, %s436
    %p448 = scmp.eq.s32.totalorder %s30, 3
    %p449 = por %p447, %p448
    %p451 = scmp.ne.s32.totalorder %s436, %s450
    %p452 = scmp.eq.s32.totalorder %s30, 0
    %p453 = por %p451, %p452
    %s455 = sadd.s32 %s454, 1
    %p458 = scmp.eq.s32.totalorder %s24, 3
    %p459 = scmp.ne.s32.totalorder %s454, %s456
    %p460 = scmp.eq.s32.totalorder %s24, 0
    %p461 = por %p459, %p460
    %p462 = scmp.ne.s32.totalorder %s454, %s456
    %p463 = scmp.eq.s32.totalorder %s29, 3
    %p464 = por %p462, %p463
    %p465 = scmp.ne.s32.totalorder %s456, %s457
    %p466 = scmp.eq.s32.totalorder %s29, 0
    %p467 = por %p465, %p466
    %p468 = scmp.ne.s32.totalorder %s456, %s457
    %p469 = scmp.eq.s32.totalorder %s30, 3
    %p470 = por %p468, %p469
    %p472 = scmp.ne.s32.totalorder %s457, %s471
    %p473 = scmp.eq.s32.totalorder %s30, 0
    %p474 = por %p472, %p473
    %s476 = sadd.s32 %s475, 1
    %p479 = scmp.eq.s32.totalorder %s24, 3
    %p480 = scmp.ne.s32.totalorder %s475, %s477
    %p481 = scmp.eq.s32.totalorder %s24, 0
    %p482 = por %p480, %p481
    %p483 = scmp.ne.s32.totalorder %s475, %s477
    %p484 = scmp.eq.s32.totalorder %s29, 3
    %p485 = por %p483, %p484
    %p486 = scmp.ne.s32.totalorder %s477, %s478
    %p487 = scmp.eq.s32.totalorder %s29, 0
    %p488 = por %p486, %p487
    %p489 = scmp.ne.s32.totalorder %s477, %s478
    %p490 = scmp.eq.s32.totalorder %s30, 3
    %p491 = por %p489, %p490
    %p493 = scmp.ne.s32.totalorder %s478, %s492
    %p494 = scmp.eq.s32.totalorder %s30, 0
    %p495 = por %p493, %p494
    %s496 = ssub.s32 %s31, %s43
    %s497 = ssub.s32 %s32, %s39
    %s498 = sor.u32 %s496, %s497
    %p499 = scmp.eq.s32.totalorder %s498, 0
    %s501 = sadd.s32 %s500, 1
    %s502 = scalar_select %p499, %s500, %s501
    %p505 = pneg %p499
    %p506 = scmp.eq.s32.totalorder %s24, 3
    %p507 = por %p505, %p506
    %p508 = scmp.ne.s32.totalorder %s500, %s503
    %p509 = scmp.eq.s32.totalorder %s24, 0
    %p510 = por %p508, %p509
    %p511 = scmp.ne.s32.totalorder %s500, %s503
    %p512 = scmp.eq.s32.totalorder %s29, 3
    %p513 = por %p511, %p512
    %p514 = scmp.ne.s32.totalorder %s503, %s504
    %p515 = scmp.eq.s32.totalorder %s29, 0
    %p516 = por %p514, %p515
    %p517 = scmp.ne.s32.totalorder %s503, %s504
    %p518 = scmp.eq.s32.totalorder %s30, 3
    %p519 = por %p517, %p518
    %p521 = scmp.ne.s32.totalorder %s504, %s520
    %p522 = scmp.eq.s32.totalorder %s30, 0
    %p523 = por %p521, %p522
    %p524 = scmp.le.s32.totalorder 1, %s24
    %p525 = scmp.lt.s32.totalorder %s24, 5
    %p526 = pnand %p524, %p525
    %p527 = pneg %p526
    // Predicated region
    $region9: #{tpu_custom_call.1} parent=5 // pred_check
      _
    $region10: #{tpu_custom_call.1} parent=5 // pred_check_branch
      %529 = sbr.rel (%p526) target = $region12
    $region11: #{tpu_custom_call.1} parent=5 // pred_region
      %s530 = ssub.s32 %s24, 1
      // Predicated region
      $region13: #{tpu_custom_call.1} parent=11 // pred_check
        %p531 = pneg %p257
      $region14: #{tpu_custom_call.1} parent=11 // pred_check_branch
        %533 = sbr.rel (%p531) target = $region16
      $region15: #{tpu_custom_call.1} parent=11 // pred_region
        _
      $region16: #{tpu_custom_call.1} parent=11 // pred_fallthru
        _
      // Predicated region
      $region17: #{tpu_custom_call.1} parent=11 // pred_check
        %p534 = pneg %p278
      $region18: #{tpu_custom_call.1} parent=11 // pred_check_branch
        %536 = sbr.rel (%p534) target = $region20
      $region19: #{tpu_custom_call.1} parent=11 // pred_region
        _
      $region20: #{tpu_custom_call.1} parent=11 // pred_fallthru
        _
      // Predicated region
      $region21: #{tpu_custom_call.1} parent=11 // pred_check
        %p537 = pneg %p299
      $region22: #{tpu_custom_call.1} parent=11 // pred_check_branch
        %539 = sbr.rel (%p537) target = $region24
      $region23: #{tpu_custom_call.1} parent=11 // pred_region
        _
      $region24: #{tpu_custom_call.1} parent=11 // pred_fallthru
        _
      // Predicated region
      $region25: #{tpu_custom_call.1} parent=11 // pred_check
        %p540 = pneg %p320
      $region26: #{tpu_custom_call.1} parent=11 // pred_check_branch
        %542 = sbr.rel (%p540) target = $region28
      $region27: #{tpu_custom_call.1} parent=11 // pred_region
        _
      $region28: #{tpu_custom_call.1} parent=11 // pred_fallthru
        _
      // Predicated region
      $region29: #{tpu_custom_call.1} parent=11 // pred_check
        %p543 = pneg %p341
      $region30: #{tpu_custom_call.1} parent=11 // pred_check_branch
        %545 = sbr.rel (%p543) target = $region32
      $region31: #{tpu_custom_call.1} parent=11 // pred_region
        _
      $region32: #{tpu_custom_call.1} parent=11 // pred_fallthru
        _
      // Predicated region
      $region33: #{tpu_custom_call.1} parent=11 // pred_check
        %p546 = pneg %p362
      $region34: #{tpu_custom_call.1} parent=11 // pred_check_branch
        %548 = sbr.rel (%p546) target = $region36
      $region35: #{tpu_custom_call.1} parent=11 // pred_region
        _
      $region36: #{tpu_custom_call.1} parent=11 // pred_fallthru
        _
      // Predicated region
      $region37: #{tpu_custom_call.1} parent=11 // pred_check
        %p549 = pneg %p383
      $region38: #{tpu_custom_call.1} parent=11 // pred_check_branch
        %551 = sbr.rel (%p549) target = $region40
      $region39: #{tpu_custom_call.1} parent=11 // pred_region
        _
      $region40: #{tpu_custom_call.1} parent=11 // pred_fallthru
        _
      // Predicated region
      $region41: #{tpu_custom_call.1} parent=11 // pred_check
        %p552 = pneg %p404
      $region42: #{tpu_custom_call.1} parent=11 // pred_check_branch
        %554 = sbr.rel (%p552) target = $region44
      $region43: #{tpu_custom_call.1} parent=11 // pred_region
        _
      $region44: #{tpu_custom_call.1} parent=11 // pred_fallthru
        _
      // Predicated region
      $region45: #{tpu_custom_call.1} parent=11 // pred_check
        %p555 = pneg %p425
      $region46: #{tpu_custom_call.1} parent=11 // pred_check_branch
        %557 = sbr.rel (%p555) target = $region48
      $region47: #{tpu_custom_call.1} parent=11 // pred_region
        _
      $region48: #{tpu_custom_call.1} parent=11 // pred_fallthru
        _
      // Predicated region
      $region49: #{tpu_custom_call.1} parent=11 // pred_check
        %p558 = pneg %p446
      $region50: #{tpu_custom_call.1} parent=11 // pred_check_branch
        %560 = sbr.rel (%p558) target = $region52
      $region51: #{tpu_custom_call.1} parent=11 // pred_region
        _
      $region52: #{tpu_custom_call.1} parent=11 // pred_fallthru
        _
      // Predicated region
      $region53: #{tpu_custom_call.1} parent=11 // pred_check
        %p561 = pneg %p467
      $region54: #{tpu_custom_call.1} parent=11 // pred_check_branch
        %563 = sbr.rel (%p561) target = $region56
      $region55: #{tpu_custom_call.1} parent=11 // pred_region
        _
      $region56: #{tpu_custom_call.1} parent=11 // pred_fallthru
        _
      // Predicated region
      $region57: #{tpu_custom_call.1} parent=11 // pred_check
        %p564 = pneg %p488
      $region58: #{tpu_custom_call.1} parent=11 // pred_check_branch
        %566 = sbr.rel (%p564) target = $region60
      $region59: #{tpu_custom_call.1} parent=11 // pred_region
        _
      $region60: #{tpu_custom_call.1} parent=11 // pred_fallthru
        _
    $region12: #{tpu_custom_call.1} parent=5 // pred_fallthru
      _
    %p567 = scmp.lt.s32.totalorder %s24, 4
    // Predicated region
    $region61: #{tpu_custom_call.1} parent=5 // pred_check
      %p568 = pneg %p567
    $region62: #{tpu_custom_call.1} parent=5 // pred_check_branch
      %570 = sbr.rel (%p568) target = $region64
    $region63: #{tpu_custom_call.1} parent=5 // pred_region
      // Predicated region
      $region65: #{tpu_custom_call.1} parent=63 // pred_check
        %p571 = pneg %p66
      $region66: #{tpu_custom_call.1} parent=63 // pred_check_branch
        %573 = sbr.rel (%p571) target = $region68
      $region67: #{tpu_custom_call.1} parent=63 // pred_region
        %s574 = smul.u32 %s32, 4
        %s575 = ssub.s32 %s574, 1
        %p576 = scmp.gt.s32.totalorder %s575, 0
        %s577 = scalar_select %p576, %s575, 0
        %s578 = smul.u32 2, %s577
        %p579 = scmp.lt.s32.totalorder %s31, 1
        %s580 = scalar_select %p579, %s31, 1
        %p581 = scmp.lt.s32.totalorder %s578, 15
        %s582 = scalar_select %p581, %s578, 15
        %s583 = smul.addr %s582, 2
        %s584 = smul.addr %s580, 32
        %s585 = sadd.s32 %s583, %s584
        %s586 = smul.addr %s585, 8
        %s587 = scalar_lea.vmem %s0, %s586
        %s588 = smul.u32 %s32, 4
        %s589 = ssub.s32 %s588, 1
        %p590 = scmp.gt.s32.totalorder %s589, 0
        %s591 = scalar_select %p590, %s589, 0
        %s592 = smul.u32 2, %s591
      $region68: #{tpu_custom_call.1} parent=63 // pred_fallthru
        _
      // Predicated region
      $region69: #{tpu_custom_call.1} parent=63 // pred_check
        %p593 = pneg %p94
      $region70: #{tpu_custom_call.1} parent=63 // pred_check_branch
        %595 = sbr.rel (%p593) target = $region72
      $region71: #{tpu_custom_call.1} parent=63 // pred_region
        %s596 = smul.u32 8, %s32
        %p597 = scmp.lt.s32.totalorder %s31, 1
        %s598 = scalar_select %p597, %s31, 1
        %p599 = scmp.lt.s32.totalorder %s596, 15
        %s600 = scalar_select %p599, %s596, 15
        %s601 = smul.addr %s600, 2
        %s602 = smul.addr %s598, 32
        %s603 = sadd.s32 %s601, %s602
        %s604 = smul.addr %s603, 8
        %s605 = scalar_lea.vmem %s1, %s604
        %s606 = smul.u32 8, %s32
      $region72: #{tpu_custom_call.1} parent=63 // pred_fallthru
        _
      // Predicated region
      $region73: #{tpu_custom_call.1} parent=63 // pred_check
        %p607 = pneg %p130
      $region74: #{tpu_custom_call.1} parent=63 // pred_check_branch
        %609 = sbr.rel (%p607) target = $region76
      $region75: #{tpu_custom_call.1} parent=63 // pred_region
        %s610 = sadd.s32 %s32, 1
        %s611 = smul.u32 %s610, 4
        %p612 = scmp.lt.s32.totalorder %s611, 7
        %s613 = scalar_select %p612, %s611, 7
        %s614 = smul.u32 2, %s613
        %p615 = scmp.lt.s32.totalorder %s31, 1
        %s616 = scalar_select %p615, %s31, 1
        %p617 = scmp.lt.s32.totalorder %s614, 15
        %s618 = scalar_select %p617, %s614, 15
        %s619 = smul.addr %s618, 2
        %s620 = smul.addr %s616, 32
        %s621 = sadd.s32 %s619, %s620
        %s622 = smul.addr %s621, 8
        %s623 = scalar_lea.vmem %s2, %s622
        %s624 = sadd.s32 %s32, 1
        %s625 = smul.u32 %s624, 4
        %p626 = scmp.lt.s32.totalorder %s625, 7
        %s627 = scalar_select %p626, %s625, 7
        %s628 = smul.u32 2, %s627
      $region76: #{tpu_custom_call.1} parent=63 // pred_fallthru
        _
      // Predicated region
      $region77: #{tpu_custom_call.1} parent=63 // pred_check
        %p629 = pneg %p166
      $region78: #{tpu_custom_call.1} parent=63 // pred_check_branch
        %631 = sbr.rel (%p629) target = $region80
      $region79: #{tpu_custom_call.1} parent=63 // pred_region
        %s632 = smul.u32 %s32, 4
        %s633 = ssub.s32 %s632, 1
        %p634 = scmp.gt.s32.totalorder %s633, 0
        %s635 = scalar_select %p634, %s633, 0
        %s636 = smul.u32 2, %s635
        %p637 = scmp.lt.s32.totalorder %s31, 1
        %s638 = scalar_select %p637, %s31, 1
        %p639 = scmp.lt.s32.totalorder %s636, 15
        %s640 = scalar_select %p639, %s636, 15
        %s641 = smul.addr %s640, 2
        %s642 = smul.addr %s638, 32
        %s643 = sadd.s32 %s641, %s642
        %s644 = smul.addr %s643, 8
        %s645 = scalar_lea.vmem %s3, %s644
        %s646 = smul.u32 %s32, 4
        %s647 = ssub.s32 %s646, 1
        %p648 = scmp.gt.s32.totalorder %s647, 0
        %s649 = scalar_select %p648, %s647, 0
        %s650 = smul.u32 2, %s649
      $region80: #{tpu_custom_call.1} parent=63 // pred_fallthru
        _
      // Predicated region
      $region81: #{tpu_custom_call.1} parent=63 // pred_check
        %p651 = pneg %p194
      $region82: #{tpu_custom_call.1} parent=63 // pred_check_branch
        %653 = sbr.rel (%p651) target = $region84
      $region83: #{tpu_custom_call.1} parent=63 // pred_region
        %s654 = smul.u32 8, %s32
        %p655 = scmp.lt.s32.totalorder %s31, 1
        %s656 = scalar_select %p655, %s31, 1
        %p657 = scmp.lt.s32.totalorder %s654, 15
        %s658 = scalar_select %p657, %s654, 15
        %s659 = smul.addr %s658, 2
        %s660 = smul.addr %s656, 32
        %s661 = sadd.s32 %s659, %s660
        %s662 = smul.addr %s661, 8
        %s663 = scalar_lea.vmem %s4, %s662
        %s664 = smul.u32 8, %s32
      $region84: #{tpu_custom_call.1} parent=63 // pred_fallthru
        _
      // Predicated region
      $region85: #{tpu_custom_call.1} parent=63 // pred_check
        %p665 = pneg %p230
      $region86: #{tpu_custom_call.1} parent=63 // pred_check_branch
        %667 = sbr.rel (%p665) target = $region88
      $region87: #{tpu_custom_call.1} parent=63 // pred_region
        %s668 = sadd.s32 %s32, 1
        %s669 = smul.u32 %s668, 4
        %p670 = scmp.lt.s32.totalorder %s669, 7
        %s671 = scalar_select %p670, %s669, 7
        %s672 = smul.u32 2, %s671
        %p673 = scmp.lt.s32.totalorder %s31, 1
        %s674 = scalar_select %p673, %s31, 1
        %p675 = scmp.lt.s32.totalorder %s672, 15
        %s676 = scalar_select %p675, %s672, 15
        %s677 = smul.addr %s676, 2
        %s678 = smul.addr %s674, 32
        %s679 = sadd.s32 %s677, %s678
        %s680 = smul.addr %s679, 8
        %s681 = scalar_lea.vmem %s5, %s680
        %s682 = sadd.s32 %s32, 1
        %s683 = smul.u32 %s682, 4
        %p684 = scmp.lt.s32.totalorder %s683, 7
        %s685 = scalar_select %p684, %s683, 7
        %s686 = smul.u32 2, %s685
      $region88: #{tpu_custom_call.1} parent=63 // pred_fallthru
        _
    $region64: #{tpu_custom_call.1} parent=5 // pred_fallthru
      _
    %p687 = scmp.le.s32.totalorder 1, %s24
    %p688 = scmp.lt.s32.totalorder %s24, 5
    %p689 = pnand %p687, %p688
    %p690 = pneg %p689
    // Predicated region
    $region89: #{tpu_custom_call.1} parent=5 // pred_check
      _
    $region90: #{tpu_custom_call.1} parent=5 // pred_check_branch
      %692 = sbr.rel (%p689) target = $region92
    $region91: #{tpu_custom_call.1} parent=5 // pred_region
      %s693 = ssub.s32 %s24, 1
      %s694 = smul.u32 %s34, 4
      %s695 = ssub.s32 %s694, 1
      %p696 = scmp.gt.s32.totalorder %s695, 0
      %s697 = scalar_select %p696, %s695, 0
      %s698 = smul.u32 2, %s697
      %p699 = scmp.lt.s32.totalorder %s33, 1
      %s700 = scalar_select %p699, %s33, 1
      %p701 = scmp.lt.s32.totalorder %s698, 15
      %s702 = scalar_select %p701, %s698, 15
      %s703 = smul.addr %s702, 2
      %s704 = smul.addr %s700, 32
      %s705 = sadd.s32 %s703, %s704
      %s706 = smul.addr %s705, 8
      %s707 = scalar_lea.vmem %s0, %s706
      %p708 = pneg %p72
      %p709 = pneg %p69
      %s710 = smul.u32 8, %s34
      %p711 = scmp.lt.s32.totalorder %s33, 1
      %s712 = scalar_select %p711, %s33, 1
      %p713 = scmp.lt.s32.totalorder %s710, 15
      %s714 = scalar_select %p713, %s710, 15
      %s715 = smul.addr %s714, 2
      %s716 = smul.addr %s712, 32
      %s717 = sadd.s32 %s715, %s716
      %s718 = smul.addr %s717, 8
      %s719 = scalar_lea.vmem %s1, %s718
      %p720 = pneg %p100
      %p721 = pneg %p97
      %s722 = sadd.s32 %s34, 1
      %s723 = smul.u32 %s722, 4
      %p724 = scmp.lt.s32.totalorder %s723, 7
      %s725 = scalar_select %p724, %s723, 7
      %s726 = smul.u32 2, %s725
      %p727 = scmp.lt.s32.totalorder %s33, 1
      %s728 = scalar_select %p727, %s33, 1
      %p729 = scmp.lt.s32.totalorder %s726, 15
      %s730 = scalar_select %p729, %s726, 15
      %s731 = smul.addr %s730, 2
      %s732 = smul.addr %s728, 32
      %s733 = sadd.s32 %s731, %s732
      %s734 = smul.addr %s733, 8
      %s735 = scalar_lea.vmem %s2, %s734
      %p736 = pneg %p136
      %p737 = pneg %p133
      %s738 = smul.u32 %s34, 4
      %s739 = ssub.s32 %s738, 1
      %p740 = scmp.gt.s32.totalorder %s739, 0
      %s741 = scalar_select %p740, %s739, 0
      %s742 = smul.u32 2, %s741
      %p743 = scmp.lt.s32.totalorder %s33, 1
      %s744 = scalar_select %p743, %s33, 1
      %p745 = scmp.lt.s32.totalorder %s742, 15
      %s746 = scalar_select %p745, %s742, 15
      %s747 = smul.addr %s746, 2
      %s748 = smul.addr %s744, 32
      %s749 = sadd.s32 %s747, %s748
      %s750 = smul.addr %s749, 8
      %s751 = scalar_lea.vmem %s3, %s750
      %p752 = pneg %p172
      %p753 = pneg %p169
      %s754 = smul.u32 8, %s34
      %p755 = scmp.lt.s32.totalorder %s33, 1
      %s756 = scalar_select %p755, %s33, 1
      %p757 = scmp.lt.s32.totalorder %s754, 15
      %s758 = scalar_select %p757, %s754, 15
      %s759 = smul.addr %s758, 2
      %s760 = smul.addr %s756, 32
      %s761 = sadd.s32 %s759, %s760
      %s762 = smul.addr %s761, 8
      %s763 = scalar_lea.vmem %s4, %s762
      %p764 = pneg %p200
      %p765 = pneg %p197
      %s766 = sadd.s32 %s34, 1
      %s767 = smul.u32 %s766, 4
      %p768 = scmp.lt.s32.totalorder %s767, 7
      %s769 = scalar_select %p768, %s767, 7
      %s770 = smul.u32 2, %s769
      %p771 = scmp.lt.s32.totalorder %s33, 1
      %s772 = scalar_select %p771, %s33, 1
      %p773 = scmp.lt.s32.totalorder %s770, 15
      %s774 = scalar_select %p773, %s770, 15
      %s775 = smul.addr %s774, 2
      %s776 = smul.addr %s772, 32
      %s777 = sadd.s32 %s775, %s776
      %s778 = smul.addr %s777, 8
      %s779 = scalar_lea.vmem %s5, %s778
      %p780 = pneg %p236
      %p781 = pneg %p233
      %p782 = pneg %p257
      %p783 = pneg %p254
      %p784 = pneg %p278
      %p785 = pneg %p275
      %p786 = pneg %p299
      %p787 = pneg %p296
      %p788 = pneg %p320
      %p789 = pneg %p317
      %p790 = pneg %p341
      %p791 = pneg %p338
      %p792 = pneg %p362
      %p793 = pneg %p359
      %p794 = pneg %p383
      %p795 = pneg %p380
      %p796 = pneg %p404
      %p797 = pneg %p401
      %p798 = pneg %p425
      %p799 = pneg %p422
      %p800 = pneg %p446
      %p801 = pneg %p443
      %p802 = pneg %p467
      %p803 = pneg %p464
      %p804 = pneg %p488
      %p805 = pneg %p485
      %p806 = pneg %p516
      %p807 = pneg %p513
      %s808 = smul.u32 8, %s34
      %p809 = scmp.lt.s32.totalorder %s33, 1
      %s810 = scalar_select %p809, %s33, 1
      %p811 = scmp.lt.s32.totalorder %s808, 15
      %s812 = scalar_select %p811, %s808, 15
      %s813 = smul.addr %s812, 2
      %s814 = smul.addr %s810, 32
      %s815 = sadd.s32 %s813, %s814
      %s816 = smul.addr %s815, 8
      %s817 = scalar_lea.vmem %s18, %s816
      %s818 = smul.u32 %s34, 4
      %s819 = ssub.s32 %s818, 1
      %p820 = scmp.gt.s32.totalorder %s819, 0
      %s821 = scalar_select %p820, %s819, 0
      %s822 = smul.u32 2, %s821
      %p823 = scmp.lt.s32.totalorder %s33, 1
      %s824 = scalar_select %p823, %s33, 1
      %p825 = scmp.lt.s32.totalorder %s822, 15
      %s826 = scalar_select %p825, %s822, 15
      %s827 = smul.addr %s826, 2
      %s828 = smul.addr %s824, 32
      %s829 = sadd.s32 %s827, %s828
      %s830 = smul.addr %s829, 8
      %s831 = scalar_lea.vmem %s0, %s830
      %s832 = smul.u32 %s34, 4
      %s833 = ssub.s32 %s832, 1
      %p834 = scmp.gt.s32.totalorder %s833, 0
      %s835 = scalar_select %p834, %s833, 0
      %s836 = smul.u32 2, %s835
      %s837 = smul.u32 8, %s34
      %p838 = scmp.lt.s32.totalorder %s33, 1
      %s839 = scalar_select %p838, %s33, 1
      %p840 = scmp.lt.s32.totalorder %s837, 15
      %s841 = scalar_select %p840, %s837, 15
      %s842 = smul.addr %s841, 2
      %s843 = smul.addr %s839, 32
      %s844 = sadd.s32 %s842, %s843
      %s845 = smul.addr %s844, 8
      %s846 = scalar_lea.vmem %s1, %s845
      %s847 = smul.u32 8, %s34
      %s848 = sadd.s32 %s34, 1
      %s849 = smul.u32 %s848, 4
      %p850 = scmp.lt.s32.totalorder %s849, 7
      %s851 = scalar_select %p850, %s849, 7
      %s852 = smul.u32 2, %s851
      %p853 = scmp.lt.s32.totalorder %s33, 1
      %s854 = scalar_select %p853, %s33, 1
      %p855 = scmp.lt.s32.totalorder %s852, 15
      %s856 = scalar_select %p855, %s852, 15
      %s857 = smul.addr %s856, 2
      %s858 = smul.addr %s854, 32
      %s859 = sadd.s32 %s857, %s858
      %s860 = smul.addr %s859, 8
      %s861 = scalar_lea.vmem %s2, %s860
      %s862 = sadd.s32 %s34, 1
      %s863 = smul.u32 %s862, 4
      %p864 = scmp.lt.s32.totalorder %s863, 7
      %s865 = scalar_select %p864, %s863, 7
      %s866 = smul.u32 2, %s865
      %s867 = smul.u32 %s34, 4
      %s868 = ssub.s32 %s867, 1
      %p869 = scmp.gt.s32.totalorder %s868, 0
      %s870 = scalar_select %p869, %s868, 0
      %s871 = smul.u32 2, %s870
      %p872 = scmp.lt.s32.totalorder %s33, 1
      %s873 = scalar_select %p872, %s33, 1
      %p874 = scmp.lt.s32.totalorder %s871, 15
      %s875 = scalar_select %p874, %s871, 15
      %s876 = smul.addr %s875, 2
      %s877 = smul.addr %s873, 32
      %s878 = sadd.s32 %s876, %s877
      %s879 = smul.addr %s878, 8
      %s880 = scalar_lea.vmem %s3, %s879
      %s881 = smul.u32 %s34, 4
      %s882 = ssub.s32 %s881, 1
      %p883 = scmp.gt.s32.totalorder %s882, 0
      %s884 = scalar_select %p883, %s882, 0
      %s885 = smul.u32 2, %s884
      %s886 = smul.u32 8, %s34
      %p887 = scmp.lt.s32.totalorder %s33, 1
      %s888 = scalar_select %p887, %s33, 1
      %p889 = scmp.lt.s32.totalorder %s886, 15
      %s890 = scalar_select %p889, %s886, 15
      %s891 = smul.addr %s890, 2
      %s892 = smul.addr %s888, 32
      %s893 = sadd.s32 %s891, %s892
      %s894 = smul.addr %s893, 8
      %s895 = scalar_lea.vmem %s4, %s894
      %s896 = smul.u32 8, %s34
      %s897 = sadd.s32 %s34, 1
      %s898 = smul.u32 %s897, 4
      %p899 = scmp.lt.s32.totalorder %s898, 7
      %s900 = scalar_select %p899, %s898, 7
      %s901 = smul.u32 2, %s900
      %p902 = scmp.lt.s32.totalorder %s33, 1
      %s903 = scalar_select %p902, %s33, 1
      %p904 = scmp.lt.s32.totalorder %s901, 15
      %s905 = scalar_select %p904, %s901, 15
      %s906 = smul.addr %s905, 2
      %s907 = smul.addr %s903, 32
      %s908 = sadd.s32 %s906, %s907
      %s909 = smul.addr %s908, 8
      %s910 = scalar_lea.vmem %s5, %s909
      %s911 = sadd.s32 %s34, 1
      %s912 = smul.u32 %s911, 4
      %p913 = scmp.lt.s32.totalorder %s912, 7
      %s914 = scalar_select %p913, %s912, 7
      %s915 = smul.u32 2, %s914
      %s916 = smul.u32 8, %s34
      %p917 = scmp.lt.s32.totalorder %s33, 1
      %s918 = scalar_select %p917, %s33, 1
      %p919 = scmp.lt.s32.totalorder %s916, 15
      %s920 = scalar_select %p919, %s916, 15
      %s921 = smul.addr %s920, 2
      %s922 = smul.addr %s918, 32
      %s923 = sadd.s32 %s921, %s922
      %s924 = smul.addr %s923, 8
      %s925 = scalar_lea.vmem %s18, %s924
      %s926 = smul.u32 8, %s34
      %s928 = smul.u32 %s34, 8
      %v929 = vld [vmem:[%s831] sm:$0xff]
      %v930 = vld [vmem:[%s831 + $0x8] sm:$0xff]
      %v931 = vld [vmem:[%s831 + $0x10] sm:$0xff]
      %v932 = vld [vmem:[%s831 + $0x18] sm:$0xff]
      %v933 = vld [vmem:[%s846] sm:$0xff]
      %v934 = vld [vmem:[%s846 + $0x8] sm:$0xff]
      %v935 = vld [vmem:[%s846 + $0x10] sm:$0xff]
      %v936 = vld [vmem:[%s846 + $0x18] sm:$0xff]
      %v937 = vld [vmem:[%s846 + $0x20] sm:$0xff]
      %v938 = vld [vmem:[%s846 + $0x28] sm:$0xff]
      %v939 = vld [vmem:[%s846 + $0x30] sm:$0xff]
      %v940 = vld [vmem:[%s846 + $0x38] sm:$0xff]
      %v941 = vld [vmem:[%s846 + $0x40] sm:$0xff]
      %v942 = vld [vmem:[%s846 + $0x48] sm:$0xff]
      %v943 = vld [vmem:[%s846 + $0x50] sm:$0xff]
      %v944 = vld [vmem:[%s846 + $0x58] sm:$0xff]
      %v945 = vld [vmem:[%s846 + $0x60] sm:$0xff]
      %v946 = vld [vmem:[%s846 + $0x68] sm:$0xff]
      %v947 = vld [vmem:[%s846 + $0x70] sm:$0xff]
      %v948 = vld [vmem:[%s846 + $0x78] sm:$0xff]
      %v949 = vld [vmem:[%s861] sm:$0xff]
      %v950 = vld [vmem:[%s861 + $0x8] sm:$0xff]
      %v951 = vld [vmem:[%s861 + $0x10] sm:$0xff]
      %v952 = vld [vmem:[%s861 + $0x18] sm:$0xff]
      %v953 = vld [vmem:[%s880 + $0x10] sm:$0xff]
      %v954 = vld [vmem:[%s880 + $0x18] sm:$0xff]
      %v955 = vld [vmem:[%s910] sm:$0xff]
      %v956 = vld [vmem:[%s910 + $0x8] sm:$0xff]
      %v957 = vld [vmem:[%s895] sm:$0xff]
      %v958 = vld [vmem:[%s895 + $0x8] sm:$0xff]
      %v959 = vld [vmem:[%s895 + $0x10] sm:$0xff]
      %v960 = vld [vmem:[%s895 + $0x18] sm:$0xff]
      %v961 = vld [vmem:[%s895 + $0x20] sm:$0xff]
      %v962 = vld [vmem:[%s895 + $0x28] sm:$0xff]
      %v963 = vld [vmem:[%s895 + $0x30] sm:$0xff]
      %v964 = vld [vmem:[%s895 + $0x38] sm:$0xff]
      %v965 = vld [vmem:[%s895 + $0x40] sm:$0xff]
      %v966 = vld [vmem:[%s895 + $0x48] sm:$0xff]
      %v967 = vld [vmem:[%s895 + $0x50] sm:$0xff]
      %v968 = vld [vmem:[%s895 + $0x58] sm:$0xff]
      %v969 = vld [vmem:[%s895 + $0x60] sm:$0xff]
      %v970 = vld [vmem:[%s895 + $0x68] sm:$0xff]
      %v971 = vld [vmem:[%s895 + $0x70] sm:$0xff]
      %v972 = vld [vmem:[%s895 + $0x78] sm:$0xff]
      %v973 = vlaneseq
      %v974 = vshrl.u32 %v973, 7
      %v975 = vadd.s32 %v974, 8
      %v976 = vadd.s32 %v974, 16
      %v977 = vadd.s32 %v974, 24
      %v978 = vadd.s32 %v974, 32
      %v979 = vadd.s32 %v974, 40
      %v980 = vadd.s32 %v974, 48
      %v981 = vadd.s32 %v974, 56
      %v982 = vadd.s32 %v974, 64
      %v983 = vadd.s32 %v974, 72
      %v984 = vadd.s32 %v974, 80
      %v985 = vadd.s32 %v974, 88
      %v986 = vadd.s32 %v974, 96
      %v987 = vadd.s32 %v974, 104
      %v988 = vadd.s32 %v974, 112
      %v989 = vadd.s32 %v974, 120
      %v990 = vadd.s32 %v974, 128
      %v991 = vadd.s32 %v974, 136
      %v992 = vadd.s32 %v974, 144
      %v993 = vadd.s32 %v974, 152
      %v994 = vadd.s32 %v974, 160
      %v995 = vadd.s32 %v974, 168
      %v996 = vadd.s32 %v974, 176
      %v997 = vadd.s32 %v974, 184
      %vm998 = vcmp.lt.s32.totalorder %v974, 0
      %v999 = vsub.s32 0, %v974
      %v1000 = vsel %vm998, %v999, %v974
      %v1001 = vshrl.u32 %v1000, 4
      %v1002 = vand.u32 %v1000, 15
      %v1003 = vsub.s32 0, %v1002
      %v1004 = vsel %vm998, %v1003, %v1002
      %vm1005 = vcmp.lt.s32.totalorder %v975, 0
      %v1006 = vsub.s32 0, %v975
      %v1007 = vsel %vm1005, %v1006, %v975
      %v1008 = vshrl.u32 %v1007, 4
      %v1009 = vand.u32 %v1007, 15
      %v1010 = vsub.s32 0, %v1009
      %v1011 = vsel %vm1005, %v1010, %v1009
      %vm1012 = vcmp.lt.s32.totalorder %v976, 0
      %v1013 = vsub.s32 0, %v976
      %v1014 = vsel %vm1012, %v1013, %v976
      %v1015 = vshrl.u32 %v1014, 4
      %v1016 = vand.u32 %v1014, 15
      %v1017 = vsub.s32 0, %v1016
      %v1018 = vsel %vm1012, %v1017, %v1016
      %vm1019 = vcmp.lt.s32.totalorder %v977, 0
      %v1020 = vsub.s32 0, %v977
      %v1021 = vsel %vm1019, %v1020, %v977
      %v1022 = vshrl.u32 %v1021, 4
      %v1023 = vand.u32 %v1021, 15
      %v1024 = vsub.s32 0, %v1023
      %v1025 = vsel %vm1019, %v1024, %v1023
      %vm1026 = vcmp.lt.s32.totalorder %v978, 0
      %v1027 = vsub.s32 0, %v978
      %v1028 = vsel %vm1026, %v1027, %v978
      %v1029 = vshrl.u32 %v1028, 4
      %v1030 = vand.u32 %v1028, 15
      %v1031 = vsub.s32 0, %v1030
      %v1032 = vsel %vm1026, %v1031, %v1030
      %vm1033 = vcmp.lt.s32.totalorder %v979, 0
      %v1034 = vsub.s32 0, %v979
      %v1035 = vsel %vm1033, %v1034, %v979
      %v1036 = vshrl.u32 %v1035, 4
      %v1037 = vand.u32 %v1035, 15
      %v1038 = vsub.s32 0, %v1037
      %v1039 = vsel %vm1033, %v1038, %v1037
      %vm1040 = vcmp.lt.s32.totalorder %v980, 0
      %v1041 = vsub.s32 0, %v980
      %v1042 = vsel %vm1040, %v1041, %v980
      %v1043 = vshrl.u32 %v1042, 4
      %v1044 = vand.u32 %v1042, 15
      %v1045 = vsub.s32 0, %v1044
      %v1046 = vsel %vm1040, %v1045, %v1044
      %vm1047 = vcmp.lt.s32.totalorder %v981, 0
      %v1048 = vsub.s32 0, %v981
      %v1049 = vsel %vm1047, %v1048, %v981
      %v1050 = vshrl.u32 %v1049, 4
      %v1051 = vand.u32 %v1049, 15
      %v1052 = vsub.s32 0, %v1051
      %v1053 = vsel %vm1047, %v1052, %v1051
      %vm1054 = vcmp.lt.s32.totalorder %v982, 0
      %v1055 = vsub.s32 0, %v982
      %v1056 = vsel %vm1054, %v1055, %v982
      %v1057 = vshrl.u32 %v1056, 4
      %v1058 = vand.u32 %v1056, 15
      %v1059 = vsub.s32 0, %v1058
      %v1060 = vsel %vm1054, %v1059, %v1058
      %vm1061 = vcmp.lt.s32.totalorder %v983, 0
      %v1062 = vsub.s32 0, %v983
      %v1063 = vsel %vm1061, %v1062, %v983
      %v1064 = vshrl.u32 %v1063, 4
      %v1065 = vand.u32 %v1063, 15
      %v1066 = vsub.s32 0, %v1065
      %v1067 = vsel %vm1061, %v1066, %v1065
      %vm1068 = vcmp.lt.s32.totalorder %v984, 0
      %v1069 = vsub.s32 0, %v984
      %v1070 = vsel %vm1068, %v1069, %v984
      %v1071 = vshrl.u32 %v1070, 4
      %v1072 = vand.u32 %v1070, 15
      %v1073 = vsub.s32 0, %v1072
      %v1074 = vsel %vm1068, %v1073, %v1072
      %vm1075 = vcmp.lt.s32.totalorder %v985, 0
      %v1076 = vsub.s32 0, %v985
      %v1077 = vsel %vm1075, %v1076, %v985
      %v1078 = vshrl.u32 %v1077, 4
      %v1079 = vand.u32 %v1077, 15
      %v1080 = vsub.s32 0, %v1079
      %v1081 = vsel %vm1075, %v1080, %v1079
      %vm1082 = vcmp.lt.s32.totalorder %v986, 0
      %v1083 = vsub.s32 0, %v986
      %v1084 = vsel %vm1082, %v1083, %v986
      %v1085 = vshrl.u32 %v1084, 4
      %v1086 = vand.u32 %v1084, 15
      %v1087 = vsub.s32 0, %v1086
      %v1088 = vsel %vm1082, %v1087, %v1086
      %vm1089 = vcmp.lt.s32.totalorder %v987, 0
      %v1090 = vsub.s32 0, %v987
      %v1091 = vsel %vm1089, %v1090, %v987
      %v1092 = vshrl.u32 %v1091, 4
      %v1093 = vand.u32 %v1091, 15
      %v1094 = vsub.s32 0, %v1093
      %v1095 = vsel %vm1089, %v1094, %v1093
      %vm1096 = vcmp.lt.s32.totalorder %v988, 0
      %v1097 = vsub.s32 0, %v988
      %v1098 = vsel %vm1096, %v1097, %v988
      %v1099 = vshrl.u32 %v1098, 4
      %v1100 = vand.u32 %v1098, 15
      %v1101 = vsub.s32 0, %v1100
      %v1102 = vsel %vm1096, %v1101, %v1100
      %vm1103 = vcmp.lt.s32.totalorder %v989, 0
      %v1104 = vsub.s32 0, %v989
      %v1105 = vsel %vm1103, %v1104, %v989
      %v1106 = vshrl.u32 %v1105, 4
      %v1107 = vand.u32 %v1105, 15
      %v1108 = vsub.s32 0, %v1107
      %v1109 = vsel %vm1103, %v1108, %v1107
      %vm1110 = vcmp.lt.s32.totalorder %v990, 0
      %v1111 = vsub.s32 0, %v990
      %v1112 = vsel %vm1110, %v1111, %v990
      %v1113 = vshrl.u32 %v1112, 4
      %v1114 = vand.u32 %v1112, 15
      %v1115 = vsub.s32 0, %v1114
      %v1116 = vsel %vm1110, %v1115, %v1114
      %vm1117 = vcmp.lt.s32.totalorder %v991, 0
      %v1118 = vsub.s32 0, %v991
      %v1119 = vsel %vm1117, %v1118, %v991
      %v1120 = vshrl.u32 %v1119, 4
      %v1121 = vand.u32 %v1119, 15
      %v1122 = vsub.s32 0, %v1121
      %v1123 = vsel %vm1117, %v1122, %v1121
      %vm1124 = vcmp.lt.s32.totalorder %v992, 0
      %v1125 = vsub.s32 0, %v992
      %v1126 = vsel %vm1124, %v1125, %v992
      %v1127 = vshrl.u32 %v1126, 4
      %v1128 = vand.u32 %v1126, 15
      %v1129 = vsub.s32 0, %v1128
      %v1130 = vsel %vm1124, %v1129, %v1128
      %vm1131 = vcmp.lt.s32.totalorder %v993, 0
      %v1132 = vsub.s32 0, %v993
      %v1133 = vsel %vm1131, %v1132, %v993
      %v1134 = vshrl.u32 %v1133, 4
      %v1135 = vand.u32 %v1133, 15
      %v1136 = vsub.s32 0, %v1135
      %v1137 = vsel %vm1131, %v1136, %v1135
      %vm1138 = vcmp.lt.s32.totalorder %v994, 0
      %v1139 = vsub.s32 0, %v994
      %v1140 = vsel %vm1138, %v1139, %v994
      %v1141 = vshrl.u32 %v1140, 4
      %v1142 = vand.u32 %v1140, 15
      %v1143 = vsub.s32 0, %v1142
      %v1144 = vsel %vm1138, %v1143, %v1142
      %vm1145 = vcmp.lt.s32.totalorder %v995, 0
      %v1146 = vsub.s32 0, %v995
      %v1147 = vsel %vm1145, %v1146, %v995
      %v1148 = vshrl.u32 %v1147, 4
      %v1149 = vand.u32 %v1147, 15
      %v1150 = vsub.s32 0, %v1149
      %v1151 = vsel %vm1145, %v1150, %v1149
      %vm1152 = vcmp.lt.s32.totalorder %v996, 0
      %v1153 = vsub.s32 0, %v996
      %v1154 = vsel %vm1152, %v1153, %v996
      %v1155 = vshrl.u32 %v1154, 4
      %v1156 = vand.u32 %v1154, 15
      %v1157 = vsub.s32 0, %v1156
      %v1158 = vsel %vm1152, %v1157, %v1156
      %vm1159 = vcmp.lt.s32.totalorder %v997, 0
      %v1160 = vsub.s32 0, %v997
      %v1161 = vsel %vm1159, %v1160, %v997
      %v1162 = vshrl.u32 %v1161, 4
      %v1163 = vand.u32 %v1161, 15
      %v1164 = vsub.s32 0, %v1163
      %v1165 = vsel %vm1159, %v1164, %v1163
      %vm1166 = vcmp.ne.s32.totalorder %v1004, 0
      %vm1167 = vcmp.ne.s32.totalorder %v1011, 0
      %vm1168 = vcmp.ne.s32.totalorder %v1018, 0
      %vm1169 = vcmp.ne.s32.totalorder %v1025, 0
      %vm1170 = vcmp.ne.s32.totalorder %v1032, 0
      %vm1171 = vcmp.ne.s32.totalorder %v1039, 0
      %vm1172 = vcmp.ne.s32.totalorder %v1046, 0
      %vm1173 = vcmp.ne.s32.totalorder %v1053, 0
      %vm1174 = vcmp.ne.s32.totalorder %v1060, 0
      %vm1175 = vcmp.ne.s32.totalorder %v1067, 0
      %vm1176 = vcmp.ne.s32.totalorder %v1074, 0
      %vm1177 = vcmp.ne.s32.totalorder %v1081, 0
      %vm1178 = vcmp.ne.s32.totalorder %v1088, 0
      %vm1179 = vcmp.ne.s32.totalorder %v1095, 0
      %vm1180 = vcmp.ne.s32.totalorder %v1102, 0
      %vm1181 = vcmp.ne.s32.totalorder %v1109, 0
      %vm1182 = vcmp.ne.s32.totalorder %v1116, 0
      %vm1183 = vcmp.ne.s32.totalorder %v1123, 0
      %vm1184 = vcmp.ne.s32.totalorder %v1130, 0
      %vm1185 = vcmp.ne.s32.totalorder %v1137, 0
      %vm1186 = vcmp.ne.s32.totalorder %v1144, 0
      %vm1187 = vcmp.ne.s32.totalorder %v1151, 0
      %vm1188 = vcmp.ne.s32.totalorder %v1158, 0
      %vm1189 = vcmp.ne.s32.totalorder %v1165, 0
      %vm1190 = vcmp.lt.s32.totalorder %v1004, 0
      %vm1191 = vcmp.lt.s32.totalorder %v1011, 0
      %vm1192 = vcmp.lt.s32.totalorder %v1018, 0
      %vm1193 = vcmp.lt.s32.totalorder %v1025, 0
      %vm1194 = vcmp.lt.s32.totalorder %v1032, 0
      %vm1195 = vcmp.lt.s32.totalorder %v1039, 0
      %vm1196 = vcmp.lt.s32.totalorder %v1046, 0
      %vm1197 = vcmp.lt.s32.totalorder %v1053, 0
      %vm1198 = vcmp.lt.s32.totalorder %v1060, 0
      %vm1199 = vcmp.lt.s32.totalorder %v1067, 0
      %vm1200 = vcmp.lt.s32.totalorder %v1074, 0
      %vm1201 = vcmp.lt.s32.totalorder %v1081, 0
      %vm1202 = vcmp.lt.s32.totalorder %v1088, 0
      %vm1203 = vcmp.lt.s32.totalorder %v1095, 0
      %vm1204 = vcmp.lt.s32.totalorder %v1102, 0
      %vm1205 = vcmp.lt.s32.totalorder %v1109, 0
      %vm1206 = vcmp.lt.s32.totalorder %v1116, 0
      %vm1207 = vcmp.lt.s32.totalorder %v1123, 0
      %vm1208 = vcmp.lt.s32.totalorder %v1130, 0
      %vm1209 = vcmp.lt.s32.totalorder %v1137, 0
      %vm1210 = vcmp.lt.s32.totalorder %v1144, 0
      %vm1211 = vcmp.lt.s32.totalorder %v1151, 0
      %vm1212 = vcmp.lt.s32.totalorder %v1158, 0
      %vm1213 = vcmp.lt.s32.totalorder %v1165, 0
      %vm1214 = vmand %vm1190, %vm1166
      %vm1215 = vmand %vm1191, %vm1167
      %vm1216 = vmand %vm1192, %vm1168
      %vm1217 = vmand %vm1193, %vm1169
      %vm1218 = vmand %vm1194, %vm1170
      %vm1219 = vmand %vm1195, %vm1171
      %vm1220 = vmand %vm1196, %vm1172
      %vm1221 = vmand %vm1197, %vm1173
      %vm1222 = vmand %vm1198, %vm1174
      %vm1223 = vmand %vm1199, %vm1175
      %vm1224 = vmand %vm1200, %vm1176
      %vm1225 = vmand %vm1201, %vm1177
      %vm1226 = vmand %vm1202, %vm1178
      %vm1227 = vmand %vm1203, %vm1179
      %vm1228 = vmand %vm1204, %vm1180
      %vm1229 = vmand %vm1205, %vm1181
      %vm1230 = vmand %vm1206, %vm1182
      %vm1231 = vmand %vm1207, %vm1183
      %vm1232 = vmand %vm1208, %vm1184
      %vm1233 = vmand %vm1209, %vm1185
      %vm1234 = vmand %vm1210, %vm1186
      %vm1235 = vmand %vm1211, %vm1187
      %vm1236 = vmand %vm1212, %vm1188
      %vm1237 = vmand %vm1213, %vm1189
      %v1238 = vadd.s32 %v1004, 16
      %v1239 = vadd.s32 %v1011, 16
      %v1240 = vadd.s32 %v1018, 16
      %v1241 = vadd.s32 %v1025, 16
      %v1242 = vadd.s32 %v1032, 16
      %v1243 = vadd.s32 %v1039, 16
      %v1244 = vadd.s32 %v1046, 16
      %v1245 = vadd.s32 %v1053, 16
      %v1246 = vadd.s32 %v1060, 16
      %v1247 = vadd.s32 %v1067, 16
      %v1248 = vadd.s32 %v1074, 16
      %v1249 = vadd.s32 %v1081, 16
      %v1250 = vadd.s32 %v1088, 16
      %v1251 = vadd.s32 %v1095, 16
      %v1252 = vadd.s32 %v1102, 16
      %v1253 = vadd.s32 %v1109, 16
      %v1254 = vadd.s32 %v1116, 16
      %v1255 = vadd.s32 %v1123, 16
      %v1256 = vadd.s32 %v1130, 16
      %v1257 = vadd.s32 %v1137, 16
      %v1258 = vadd.s32 %v1144, 16
      %v1259 = vadd.s32 %v1151, 16
      %v1260 = vadd.s32 %v1158, 16
      %v1261 = vadd.s32 %v1165, 16
      %v1262 = vsel %vm1214, %v1238, %v1004
      %v1263 = vsel %vm1215, %v1239, %v1011
      %v1264 = vsel %vm1216, %v1240, %v1018
      %v1265 = vsel %vm1217, %v1241, %v1025
      %v1266 = vsel %vm1218, %v1242, %v1032
      %v1267 = vsel %vm1219, %v1243, %v1039
      %v1268 = vsel %vm1220, %v1244, %v1046
      %v1269 = vsel %vm1221, %v1245, %v1053
      %v1270 = vsel %vm1222, %v1246, %v1060
      %v1271 = vsel %vm1223, %v1247, %v1067
      %v1272 = vsel %vm1224, %v1248, %v1074
      %v1273 = vsel %vm1225, %v1249, %v1081
      %v1274 = vsel %vm1226, %v1250, %v1088
      %v1275 = vsel %vm1227, %v1251, %v1095
      %v1276 = vsel %vm1228, %v1252, %v1102
      %v1277 = vsel %vm1229, %v1253, %v1109
      %v1278 = vsel %vm1230, %v1254, %v1116
      %v1279 = vsel %vm1231, %v1255, %v1123
      %v1280 = vsel %vm1232, %v1256, %v1130
      %v1281 = vsel %vm1233, %v1257, %v1137
      %v1282 = vsel %vm1234, %v1258, %v1144
      %v1283 = vsel %vm1235, %v1259, %v1151
      %v1284 = vsel %vm1236, %v1260, %v1158
      %v1285 = vsel %vm1237, %v1261, %v1165
      %s1286 = ssub.s32 2, %s928
      %s1287 = smul.u32 %s1286, 16
      %v1288 = vstv %s1287
      %vm1289 = vcmp.ge.s32.totalorder %v974, %v1288
      %vm1290 = vcmp.ge.s32.totalorder %v975, %v1288
      %vm1291 = vcmp.ge.s32.totalorder %v976, %v1288
      %vm1292 = vcmp.ge.s32.totalorder %v977, %v1288
      %vm1293 = vcmp.ge.s32.totalorder %v978, %v1288
      %vm1294 = vcmp.ge.s32.totalorder %v979, %v1288
      %vm1295 = vcmp.ge.s32.totalorder %v980, %v1288
      %vm1296 = vcmp.ge.s32.totalorder %v981, %v1288
      %vm1297 = vcmp.ge.s32.totalorder %v982, %v1288
      %vm1298 = vcmp.ge.s32.totalorder %v983, %v1288
      %vm1299 = vcmp.ge.s32.totalorder %v984, %v1288
      %vm1300 = vcmp.ge.s32.totalorder %v985, %v1288
      %vm1301 = vcmp.ge.s32.totalorder %v986, %v1288
      %vm1302 = vcmp.ge.s32.totalorder %v987, %v1288
      %vm1303 = vcmp.ge.s32.totalorder %v988, %v1288
      %vm1304 = vcmp.ge.s32.totalorder %v989, %v1288
      %vm1305 = vcmp.ge.s32.totalorder %v990, %v1288
      %vm1306 = vcmp.ge.s32.totalorder %v991, %v1288
      %vm1307 = vcmp.ge.s32.totalorder %v992, %v1288
      %vm1308 = vcmp.ge.s32.totalorder %v993, %v1288
      %vm1309 = vcmp.ge.s32.totalorder %v994, %v1288
      %vm1310 = vcmp.ge.s32.totalorder %v995, %v1288
      %vm1311 = vcmp.ge.s32.totalorder %v996, %v1288
      %vm1312 = vcmp.ge.s32.totalorder %v997, %v1288
      %s1313 = ssub.s32 18, %s928
      %s1314 = smul.u32 %s1313, 16
      %v1315 = vstv %s1314
      %vm1316 = vcmp.lt.s32.totalorder %v974, %v1315
      %vm1317 = vcmp.lt.s32.totalorder %v975, %v1315
      %vm1318 = vcmp.lt.s32.totalorder %v976, %v1315
      %vm1319 = vcmp.lt.s32.totalorder %v977, %v1315
      %vm1320 = vcmp.lt.s32.totalorder %v978, %v1315
      %vm1321 = vcmp.lt.s32.totalorder %v979, %v1315
      %vm1322 = vcmp.lt.s32.totalorder %v980, %v1315
      %vm1323 = vcmp.lt.s32.totalorder %v981, %v1315
      %vm1324 = vcmp.lt.s32.totalorder %v982, %v1315
      %vm1325 = vcmp.lt.s32.totalorder %v983, %v1315
      %vm1326 = vcmp.lt.s32.totalorder %v984, %v1315
      %vm1327 = vcmp.lt.s32.totalorder %v985, %v1315
      %vm1328 = vcmp.lt.s32.totalorder %v986, %v1315
      %vm1329 = vcmp.lt.s32.totalorder %v987, %v1315
      %vm1330 = vcmp.lt.s32.totalorder %v988, %v1315
      %vm1331 = vcmp.lt.s32.totalorder %v989, %v1315
      %vm1332 = vcmp.lt.s32.totalorder %v990, %v1315
      %vm1333 = vcmp.lt.s32.totalorder %v991, %v1315
      %vm1334 = vcmp.lt.s32.totalorder %v992, %v1315
      %vm1335 = vcmp.lt.s32.totalorder %v993, %v1315
      %vm1336 = vcmp.lt.s32.totalorder %v994, %v1315
      %vm1337 = vcmp.lt.s32.totalorder %v995, %v1315
      %vm1338 = vcmp.lt.s32.totalorder %v996, %v1315
      %vm1339 = vcmp.lt.s32.totalorder %v997, %v1315
      %vm1340 = vmand %vm1289, %vm1316
      %vm1341 = vmand %vm1290, %vm1317
      %vm1342 = vmand %vm1291, %vm1318
      %vm1343 = vmand %vm1292, %vm1319
      %vm1344 = vmand %vm1293, %vm1320
      %vm1345 = vmand %vm1294, %vm1321
      %vm1346 = vmand %vm1295, %vm1322
      %vm1347 = vmand %vm1296, %vm1323
      %vm1348 = vmand %vm1297, %vm1324
      %vm1349 = vmand %vm1298, %vm1325
      %vm1350 = vmand %vm1299, %vm1326
      %vm1351 = vmand %vm1300, %vm1327
      %vm1352 = vmand %vm1301, %vm1328
      %vm1353 = vmand %vm1302, %vm1329
      %vm1354 = vmand %vm1303, %vm1330
      %vm1355 = vmand %vm1304, %vm1331
      %vm1356 = vmand %vm1305, %vm1332
      %vm1357 = vmand %vm1306, %vm1333
      %vm1358 = vmand %vm1307, %vm1334
      %vm1359 = vmand %vm1308, %vm1335
      %vm1360 = vmand %vm1309, %vm1336
      %vm1361 = vmand %vm1310, %vm1337
      %vm1362 = vmand %vm1311, %vm1338
      %vm1363 = vmand %vm1312, %vm1339
      %v1364 = vpack.c.bf16 %v930, %v929
      %v1365 = vpack.c.bf16 %v932, %v931
      %v1366 = vpack.c.bf16 %v934, %v933
      %v1367 = vpack.c.bf16 %v936, %v935
      %v1368 = vpack.c.bf16 %v938, %v937
      %v1369 = vpack.c.bf16 %v940, %v939
      %v1370 = vpack.c.bf16 %v942, %v941
      %v1371 = vpack.c.bf16 %v944, %v943
      %v1372 = vpack.c.bf16 %v946, %v945
      %v1373 = vpack.c.bf16 %v948, %v947
      %v1374 = vpack.c.bf16 %v950, %v949
      %v1375 = vpack.c.bf16 %v952, %v951
      %v1376 = vld [vmem:[%s6] sm:$0x3]
      %v1377 = vld [vmem:[%s7] sm:$0x1]
      %v1379 = vlaneseq
      %v1380 = vshrl.u32 %v1379, 7
      %v1381 = vsub.s32 0, %v1380
      %v1382 = vrot.slane %v1377, %v1381
      %vm1384 = vcmask 31744
      %v1386 = vsel %vm1384, %v1364, 0
      %v1389 = vsel %vm1384, %v1365, 0
      %v1392 = vsel %vm1384, %v1366, 0
      %v1395 = vsel %vm1384, %v1367, 0
      %v1398 = vsel %vm1384, %v1368, 0
      %v1401 = vsel %vm1384, %v1369, 0
      %v1404 = vsel %vm1384, %v1370, 0
      %v1407 = vsel %vm1384, %v1371, 0
      %v1410 = vsel %vm1384, %v1372, 0
      %v1413 = vsel %vm1384, %v1373, 0
      %v1416 = vsel %vm1384, %v1374, 0
      %v1419 = vsel %vm1384, %v1375, 0
      %vm1421 = vcmask 1041408
      %v1423 = vsel %vm1421, %v1376, 0
      %1425 = vmatprep.subr.bf16.mxu0 0
      %1426 = vmatpush1.bf16.msra.mxu0 0
      %1427 = vmatprep.subr.bf16.mxu0 0
      %1428 = vmatpush1.bf16.msra.mxu0 0
      %1429 = vmatprep.subr.bf16.mxu0 0
      %1430 = vmatpush1.bf16.msra.mxu0 0
      %1431 = vmatprep.subr.bf16.mxu0 0
      %1432 = vmatpush1.bf16.msra.mxu0 0
      %1433 = vmatprep.subr.bf16.mxu0 0
      %1434 = vmatpush1.bf16.msra.mxu0 0
      %1435 = vmatprep.subr.bf16.mxu0 0
      %1436 = vmatpush1.bf16.msra.mxu0 0
      %1437 = vmatprep.subr.bf16.mxu0 0
      %1438 = vmatpush1.bf16.msra.mxu0 0
      %1439 = vmatprep.subr.bf16.mxu0 0
      %1440 = vmatpush1.bf16.msra.mxu0 %v1423
      %1441 = vmatprep.subr.bf16.mxu0 0
      %1442 = vmatpush2.bf16.msra.mxu0 0
      %1443 = vmatprep.subr.bf16.mxu0 0
      %1444 = vmatpush2.bf16.msra.mxu0 0
      %1445 = vmatprep.subr.bf16.mxu0 0
      %1446 = vmatpush2.bf16.msra.mxu0 0
      %1447 = vmatprep.subr.bf16.mxu0 0
      %1448 = vmatpush2.bf16.msra.mxu0 0
      %1449 = vmatprep.subr.bf16.mxu0 0
      %1450 = vmatpush2.bf16.msra.mxu0 0
      %1451 = vmatprep.subr.bf16.mxu0 0
      %1452 = vmatpush2.bf16.msra.mxu0 0
      %1453 = vmatprep.subr.bf16.mxu0 0
      %1454 = vmatpush2.bf16.msra.mxu0 0
      %1455 = vmatprep.subr.bf16.mxu0 0
      %1456 = vmatpush2.bf16.msra.mxu0 0
      %1457 = vmatprep.mubr.bf16.mxu0 0
      %1458 = vmatmul.mubr.bf16.gmra.mxu0 %v1386
      %v1459 = vpop.f32.mrf.mxu0
      %v1460 = vadd.f32 %v1382, %v1459
      %v1461 = vpop.f32.mrf.mxu0
      %v1462 = vpop.f32.mrf.mxu0
      %v1463 = vadd.f32 %v1382, %v1462
      %v1464 = vpop.f32.mrf.mxu0
      %1465 = vmatprep.mubr.bf16.mxu0 0
      %1466 = vmatmul.mubr.bf16.gmra.mxu0 %v1389
      %v1467 = vpop.f32.mrf.mxu0
      %v1468 = vadd.f32 %v1382, %v1467
      %v1469 = vpop.f32.mrf.mxu0
      %v1470 = vpop.f32.mrf.mxu0
      %v1471 = vadd.f32 %v1382, %v1470
      %v1472 = vpop.f32.mrf.mxu0
      %1473 = vmatprep.mubr.bf16.mxu0 0
      %1474 = vmatmul.mubr.bf16.gmra.mxu0 %v1392
      %v1475 = vpop.f32.mrf.mxu0
      %v1476 = vadd.f32 %v1382, %v1475
      %v1477 = vpop.f32.mrf.mxu0
      %v1478 = vpop.f32.mrf.mxu0
      %v1479 = vadd.f32 %v1382, %v1478
      %v1480 = vpop.f32.mrf.mxu0
      %1481 = vmatprep.mubr.bf16.mxu0 0
      %1482 = vmatmul.mubr.bf16.gmra.mxu0 %v1395
      %v1483 = vpop.f32.mrf.mxu0
      %v1484 = vadd.f32 %v1382, %v1483
      %v1485 = vpop.f32.mrf.mxu0
      %v1486 = vpop.f32.mrf.mxu0
      %v1487 = vadd.f32 %v1382, %v1486
      %v1488 = vpop.f32.mrf.mxu0
      %1489 = vmatprep.mubr.bf16.mxu0 0
      %1490 = vmatmul.mubr.bf16.gmra.mxu0 %v1398
      %v1491 = vpop.f32.mrf.mxu0
      %v1492 = vadd.f32 %v1382, %v1491
      %v1493 = vpop.f32.mrf.mxu0
      %v1494 = vpop.f32.mrf.mxu0
      %v1495 = vadd.f32 %v1382, %v1494
      %v1496 = vpop.f32.mrf.mxu0
      %1497 = vmatprep.mubr.bf16.mxu0 0
      %1498 = vmatmul.mubr.bf16.gmra.mxu0 %v1401
      %v1499 = vpop.f32.mrf.mxu0
      %v1500 = vadd.f32 %v1382, %v1499
      %v1501 = vpop.f32.mrf.mxu0
      %v1502 = vpop.f32.mrf.mxu0
      %v1503 = vadd.f32 %v1382, %v1502
      %v1504 = vpop.f32.mrf.mxu0
      %1505 = vmatprep.mubr.bf16.mxu0 0
      %1506 = vmatmul.mubr.bf16.gmra.mxu0 %v1404
      %v1507 = vpop.f32.mrf.mxu0
      %v1508 = vadd.f32 %v1382, %v1507
      %v1509 = vpop.f32.mrf.mxu0
      %v1510 = vpop.f32.mrf.mxu0
      %v1511 = vadd.f32 %v1382, %v1510
      %v1512 = vpop.f32.mrf.mxu0
      %1513 = vmatprep.mubr.bf16.mxu0 0
      %1514 = vmatmul.mubr.bf16.gmra.mxu0 %v1407
      %v1515 = vpop.f32.mrf.mxu0
      %v1516 = vadd.f32 %v1382, %v1515
      %v1517 = vpop.f32.mrf.mxu0
      %v1518 = vpop.f32.mrf.mxu0
      %v1519 = vadd.f32 %v1382, %v1518
      %v1520 = vpop.f32.mrf.mxu0
      %1521 = vmatprep.mubr.bf16.mxu0 0
      %1522 = vmatmul.mubr.bf16.gmra.mxu0 %v1410
      %v1523 = vpop.f32.mrf.mxu0
      %v1524 = vadd.f32 %v1382, %v1523
      %v1525 = vpop.f32.mrf.mxu0
      %v1526 = vpop.f32.mrf.mxu0
      %v1527 = vadd.f32 %v1382, %v1526
      %v1528 = vpop.f32.mrf.mxu0
      %1529 = vmatprep.mubr.bf16.mxu0 0
      %1530 = vmatmul.mubr.bf16.gmra.mxu0 %v1413
      %v1531 = vpop.f32.mrf.mxu0
      %v1532 = vadd.f32 %v1382, %v1531
      %v1533 = vpop.f32.mrf.mxu0
      %v1534 = vpop.f32.mrf.mxu0
      %v1535 = vadd.f32 %v1382, %v1534
      %v1536 = vpop.f32.mrf.mxu0
      %1537 = vmatprep.mubr.bf16.mxu0 0
      %1538 = vmatmul.mubr.bf16.gmra.mxu0 %v1416
      %v1539 = vpop.f32.mrf.mxu0
      %v1540 = vadd.f32 %v1382, %v1539
      %v1541 = vpop.f32.mrf.mxu0
      %v1542 = vpop.f32.mrf.mxu0
      %v1543 = vadd.f32 %v1382, %v1542
      %v1544 = vpop.f32.mrf.mxu0
      %1545 = vmatprep.mubr.bf16.mxu0 0
      %1546 = vmatmul.mubr.bf16.gmra.mxu0 %v1419
      %v1547 = vpop.f32.mrf.mxu0
      %v1548 = vadd.f32 %v1382, %v1547
      %v1549 = vpop.f32.mrf.mxu0
      %v1550 = vpop.f32.mrf.mxu0
      %v1551 = vadd.f32 %v1382, %v1550
      %v1552 = vpop.f32.mrf.mxu0
      %1553 = vdwg.mxu0
      %v1554 = vsub.f32 0.0, %v1460
      %v1555 = vsub.f32 0.0, %v1463
      %v1556 = vsub.f32 0.0, %v1468
      %v1557 = vsub.f32 0.0, %v1471
      %v1558 = vsub.f32 0.0, %v1476
      %v1559 = vsub.f32 0.0, %v1479
      %v1560 = vsub.f32 0.0, %v1484
      %v1561 = vsub.f32 0.0, %v1487
      %v1562 = vsub.f32 0.0, %v1492
      %v1563 = vsub.f32 0.0, %v1495
      %v1564 = vsub.f32 0.0, %v1500
      %v1565 = vsub.f32 0.0, %v1503
      %v1566 = vsub.f32 0.0, %v1508
      %v1567 = vsub.f32 0.0, %v1511
      %v1568 = vsub.f32 0.0, %v1516
      %v1569 = vsub.f32 0.0, %v1519
      %v1570 = vsub.f32 0.0, %v1524
      %v1571 = vsub.f32 0.0, %v1527
      %v1572 = vsub.f32 0.0, %v1532
      %v1573 = vsub.f32 0.0, %v1535
      %v1574 = vsub.f32 0.0, %v1540
      %v1575 = vsub.f32 0.0, %v1543
      %v1576 = vsub.f32 0.0, %v1548
      %v1577 = vsub.f32 0.0, %v1551
      %v1578 = vmul.f32 %v1554, 1.442695
      %v1579 = vpow.pop %v1578
      %v1580 = vmul.f32 %v1555, 1.442695
      %v1581 = vpow.pop %v1580
      %v1582 = vmul.f32 %v1556, 1.442695
      %v1583 = vpow.pop %v1582
      %v1584 = vmul.f32 %v1557, 1.442695
      %v1585 = vpow.pop %v1584
      %v1586 = vmul.f32 %v1558, 1.442695
      %v1587 = vpow.pop %v1586
      %v1588 = vmul.f32 %v1559, 1.442695
      %v1589 = vpow.pop %v1588
      %v1590 = vmul.f32 %v1560, 1.442695
      %v1591 = vpow.pop %v1590
      %v1592 = vmul.f32 %v1561, 1.442695
      %v1593 = vpow.pop %v1592
      %v1594 = vmul.f32 %v1562, 1.442695
      %v1595 = vpow.pop %v1594
      %v1596 = vmul.f32 %v1563, 1.442695
      %v1597 = vpow.pop %v1596
      %v1598 = vmul.f32 %v1564, 1.442695
      %v1599 = vpow.pop %v1598
      %v1600 = vmul.f32 %v1565, 1.442695
      %v1601 = vpow.pop %v1600
      %v1602 = vmul.f32 %v1566, 1.442695
      %v1603 = vpow.pop %v1602
      %v1604 = vmul.f32 %v1567, 1.442695
      %v1605 = vpow.pop %v1604
      %v1606 = vmul.f32 %v1568, 1.442695
      %v1607 = vpow.pop %v1606
      %v1608 = vmul.f32 %v1569, 1.442695
      %v1609 = vpow.pop %v1608
      %v1610 = vmul.f32 %v1570, 1.442695
      %v1611 = vpow.pop %v1610
      %v1612 = vmul.f32 %v1571, 1.442695
      %v1613 = vpow.pop %v1612
      %v1614 = vmul.f32 %v1572, 1.442695
      %v1615 = vpow.pop %v1614
      %v1616 = vmul.f32 %v1573, 1.442695
      %v1617 = vpow.pop %v1616
      %v1618 = vmul.f32 %v1574, 1.442695
      %v1619 = vpow.pop %v1618
      %v1620 = vmul.f32 %v1575, 1.442695
      %v1621 = vpow.pop %v1620
      %v1622 = vmul.f32 %v1576, 1.442695
      %v1623 = vpow.pop %v1622
      %v1624 = vmul.f32 %v1577, 1.442695
      %v1625 = vpow.pop %v1624
      %v1626 = vadd.f32 %v1579, 1.0
      %v1627 = vadd.f32 %v1581, 1.0
      %v1628 = vadd.f32 %v1583, 1.0
      %v1629 = vadd.f32 %v1585, 1.0
      %v1630 = vadd.f32 %v1587, 1.0
      %v1631 = vadd.f32 %v1589, 1.0
      %v1632 = vadd.f32 %v1591, 1.0
      %v1633 = vadd.f32 %v1593, 1.0
      %v1634 = vadd.f32 %v1595, 1.0
      %v1635 = vadd.f32 %v1597, 1.0
      %v1636 = vadd.f32 %v1599, 1.0
      %v1637 = vadd.f32 %v1601, 1.0
      %v1638 = vadd.f32 %v1603, 1.0
      %v1639 = vadd.f32 %v1605, 1.0
      %v1640 = vadd.f32 %v1607, 1.0
      %v1641 = vadd.f32 %v1609, 1.0
      %v1642 = vadd.f32 %v1611, 1.0
      %v1643 = vadd.f32 %v1613, 1.0
      %v1644 = vadd.f32 %v1615, 1.0
      %v1645 = vadd.f32 %v1617, 1.0
      %v1646 = vadd.f32 %v1619, 1.0
      %v1647 = vadd.f32 %v1621, 1.0
      %v1648 = vadd.f32 %v1623, 1.0
      %v1649 = vadd.f32 %v1625, 1.0
      %v1650 = vrcp.pop %v1626
      %v1651 = vrcp.pop %v1627
      %v1652 = vrcp.pop %v1628
      %v1653 = vrcp.pop %v1629
      %v1654 = vrcp.pop %v1630
      %v1655 = vrcp.pop %v1631
      %v1656 = vrcp.pop %v1632
      %v1657 = vrcp.pop %v1633
      %v1658 = vrcp.pop %v1634
      %v1659 = vrcp.pop %v1635
      %v1660 = vrcp.pop %v1636
      %v1661 = vrcp.pop %v1637
      %v1662 = vrcp.pop %v1638
      %v1663 = vrcp.pop %v1639
      %v1664 = vrcp.pop %v1640
      %v1665 = vrcp.pop %v1641
      %v1666 = vrcp.pop %v1642
      %v1667 = vrcp.pop %v1643
      %v1668 = vrcp.pop %v1644
      %v1669 = vrcp.pop %v1645
      %v1670 = vrcp.pop %v1646
      %v1671 = vrcp.pop %v1647
      %v1672 = vrcp.pop %v1648
      %v1673 = vrcp.pop %v1649
      %v1674 = vmul.f32 %v1460, %v1650
      %v1675 = vmul.f32 %v1463, %v1651
      %v1676 = vmul.f32 %v1468, %v1652
      %v1677 = vmul.f32 %v1471, %v1653
      %v1678 = vmul.f32 %v1476, %v1654
      %v1679 = vmul.f32 %v1479, %v1655
      %v1680 = vmul.f32 %v1484, %v1656
      %v1681 = vmul.f32 %v1487, %v1657
      %v1682 = vmul.f32 %v1492, %v1658
      %v1683 = vmul.f32 %v1495, %v1659
      %v1684 = vmul.f32 %v1500, %v1660
      %v1685 = vmul.f32 %v1503, %v1661
      %v1686 = vmul.f32 %v1508, %v1662
      %v1687 = vmul.f32 %v1511, %v1663
      %v1688 = vmul.f32 %v1516, %v1664
      %v1689 = vmul.f32 %v1519, %v1665
      %v1690 = vmul.f32 %v1524, %v1666
      %v1691 = vmul.f32 %v1527, %v1667
      %v1692 = vmul.f32 %v1532, %v1668
      %v1693 = vmul.f32 %v1535, %v1669
      %v1694 = vmul.f32 %v1540, %v1670
      %v1695 = vmul.f32 %v1543, %v1671
      %v1696 = vmul.f32 %v1548, %v1672
      %v1697 = vmul.f32 %v1551, %v1673
      %v1698 = vsel %vm1340, 1, 0
      %v1699 = vsel %vm1341, 1, 0
      %v1700 = vsel %vm1342, 1, 0
      %v1701 = vsel %vm1343, 1, 0
      %v1702 = vsel %vm1344, 1, 0
      %v1703 = vsel %vm1345, 1, 0
      %v1704 = vsel %vm1346, 1, 0
      %v1705 = vsel %vm1347, 1, 0
      %v1706 = vsel %vm1348, 1, 0
      %v1707 = vsel %vm1349, 1, 0
      %v1708 = vsel %vm1350, 1, 0
      %v1709 = vsel %vm1351, 1, 0
      %v1710 = vsel %vm1352, 1, 0
      %v1711 = vsel %vm1353, 1, 0
      %v1712 = vsel %vm1354, 1, 0
      %v1713 = vsel %vm1355, 1, 0
      %v1714 = vsel %vm1356, 1, 0
      %v1715 = vsel %vm1357, 1, 0
      %v1716 = vsel %vm1358, 1, 0
      %v1717 = vsel %vm1359, 1, 0
      %v1718 = vsel %vm1360, 1, 0
      %v1719 = vsel %vm1361, 1, 0
      %v1720 = vsel %vm1362, 1, 0
      %v1721 = vsel %vm1363, 1, 0
      %vm1722 = vcmp.eq.s32.totalorder %v1698, 1
      %vm1723 = vcmp.eq.s32.totalorder %v1699, 1
      %vm1724 = vcmp.eq.s32.totalorder %v1700, 1
      %vm1725 = vcmp.eq.s32.totalorder %v1701, 1
      %vm1726 = vcmp.eq.s32.totalorder %v1702, 1
      %vm1727 = vcmp.eq.s32.totalorder %v1703, 1
      %vm1728 = vcmp.eq.s32.totalorder %v1704, 1
      %vm1729 = vcmp.eq.s32.totalorder %v1705, 1
      %vm1730 = vcmp.eq.s32.totalorder %v1706, 1
      %vm1731 = vcmp.eq.s32.totalorder %v1707, 1
      %vm1732 = vcmp.eq.s32.totalorder %v1708, 1
      %vm1733 = vcmp.eq.s32.totalorder %v1709, 1
      %vm1734 = vcmp.eq.s32.totalorder %v1710, 1
      %vm1735 = vcmp.eq.s32.totalorder %v1711, 1
      %vm1736 = vcmp.eq.s32.totalorder %v1712, 1
      %vm1737 = vcmp.eq.s32.totalorder %v1713, 1
      %vm1738 = vcmp.eq.s32.totalorder %v1714, 1
      %vm1739 = vcmp.eq.s32.totalorder %v1715, 1
      %vm1740 = vcmp.eq.s32.totalorder %v1716, 1
      %vm1741 = vcmp.eq.s32.totalorder %v1717, 1
      %vm1742 = vcmp.eq.s32.totalorder %v1718, 1
      %vm1743 = vcmp.eq.s32.totalorder %v1719, 1
      %vm1744 = vcmp.eq.s32.totalorder %v1720, 1
      %vm1745 = vcmp.eq.s32.totalorder %v1721, 1
      %v1746 = vsel %vm1722, %v1674, 0.0
      %v1747 = vsel %vm1723, %v1675, 0.0
      %v1748 = vsel %vm1724, %v1676, 0.0
      %v1749 = vsel %vm1725, %v1677, 0.0
      %v1750 = vsel %vm1726, %v1678, 0.0
      %v1751 = vsel %vm1727, %v1679, 0.0
      %v1752 = vsel %vm1728, %v1680, 0.0
      %v1753 = vsel %vm1729, %v1681, 0.0
      %v1754 = vsel %vm1730, %v1682, 0.0
      %v1755 = vsel %vm1731, %v1683, 0.0
      %v1756 = vsel %vm1732, %v1684, 0.0
      %v1757 = vsel %vm1733, %v1685, 0.0
      %v1758 = vsel %vm1734, %v1686, 0.0
      %v1759 = vsel %vm1735, %v1687, 0.0
      %v1760 = vsel %vm1736, %v1688, 0.0
      %v1761 = vsel %vm1737, %v1689, 0.0
      %v1762 = vsel %vm1738, %v1690, 0.0
      %v1763 = vsel %vm1739, %v1691, 0.0
      %v1764 = vsel %vm1740, %v1692, 0.0
      %v1765 = vsel %vm1741, %v1693, 0.0
      %v1766 = vsel %vm1742, %v1694, 0.0
      %v1767 = vsel %vm1743, %v1695, 0.0
      %v1768 = vsel %vm1744, %v1696, 0.0
      %v1769 = vsel %vm1745, %v1697, 0.0
      %v1770 = vrot.slane %v1746, 7
      %v1771 = vrot.slane %v1747, 7
      %v1772 = vrot.slane %v1748, 7
      %v1773 = vrot.slane %v1749, 7
      %v1774 = vrot.slane %v1750, 7
      %v1775 = vrot.slane %v1751, 7
      %v1776 = vrot.slane %v1752, 7
      %v1777 = vrot.slane %v1753, 7
      %v1778 = vrot.slane %v1754, 7
      %v1779 = vrot.slane %v1755, 7
      %v1780 = vrot.slane %v1756, 7
      %v1781 = vrot.slane %v1757, 7
      %v1782 = vrot.slane %v1758, 7
      %v1783 = vrot.slane %v1759, 7
      %v1784 = vrot.slane %v1760, 7
      %v1785 = vrot.slane %v1761, 7
      %v1786 = vrot.slane %v1762, 7
      %v1787 = vrot.slane %v1763, 7
      %v1788 = vrot.slane %v1764, 7
      %v1789 = vrot.slane %v1765, 7
      %v1790 = vrot.slane %v1766, 7
      %v1791 = vrot.slane %v1767, 7
      %v1792 = vrot.slane %v1768, 7
      %v1793 = vrot.slane %v1769, 7
      %vm1794 = vcmp.lt.s32.totalorder %v974, 1
      %v1795 = vsel %vm1794, %v1792, %v1793
      %v1796 = vsel %vm1794, %v1791, %v1792
      %v1797 = vsel %vm1794, %v1790, %v1791
      %v1798 = vsel %vm1794, %v1789, %v1790
      %v1799 = vsel %vm1794, %v1788, %v1789
      %v1800 = vsel %vm1794, %v1787, %v1788
      %v1801 = vsel %vm1794, %v1786, %v1787
      %v1802 = vsel %vm1794, %v1785, %v1786
      %v1803 = vsel %vm1794, %v1784, %v1785
      %v1804 = vsel %vm1794, %v1783, %v1784
      %v1805 = vsel %vm1794, %v1782, %v1783
      %v1806 = vsel %vm1794, %v1781, %v1782
      %v1807 = vsel %vm1794, %v1780, %v1781
      %v1808 = vsel %vm1794, %v1779, %v1780
      %v1809 = vsel %vm1794, %v1778, %v1779
      %v1810 = vsel %vm1794, %v1777, %v1778
      %v1811 = vsel %vm1794, %v1776, %v1777
      %v1812 = vsel %vm1794, %v1775, %v1776
      %v1813 = vsel %vm1794, %v1774, %v1775
      %v1814 = vsel %vm1794, %v1773, %v1774
      %v1815 = vsel %vm1794, %v1772, %v1773
      %v1816 = vsel %vm1794, %v1771, %v1772
      %v1817 = vsel %vm1794, %v1770, %v1771
      %v1818 = vsel %vm1794, %v1793, %v1770
      %v1819 = vadd.s32 %v1262, 4294967295
      %v1820 = vadd.s32 %v1263, 4294967295
      %v1821 = vadd.s32 %v1264, 4294967295
      %v1822 = vadd.s32 %v1265, 4294967295
      %v1823 = vadd.s32 %v1266, 4294967295
      %v1824 = vadd.s32 %v1267, 4294967295
      %v1825 = vadd.s32 %v1268, 4294967295
      %v1826 = vadd.s32 %v1269, 4294967295
      %v1827 = vadd.s32 %v1270, 4294967295
      %v1828 = vadd.s32 %v1271, 4294967295
      %v1829 = vadd.s32 %v1272, 4294967295
      %v1830 = vadd.s32 %v1273, 4294967295
      %v1831 = vadd.s32 %v1274, 4294967295
      %v1832 = vadd.s32 %v1275, 4294967295
      %v1833 = vadd.s32 %v1276, 4294967295
      %v1834 = vadd.s32 %v1277, 4294967295
      %v1835 = vadd.s32 %v1278, 4294967295
      %v1836 = vadd.s32 %v1279, 4294967295
      %v1837 = vadd.s32 %v1280, 4294967295
      %v1838 = vadd.s32 %v1281, 4294967295
      %v1839 = vadd.s32 %v1282, 4294967295
      %v1840 = vadd.s32 %v1283, 4294967295
      %v1841 = vadd.s32 %v1284, 4294967295
      %v1842 = vadd.s32 %v1285, 4294967295
      %vm1843 = vcmp.ge.s32.totalorder %v1819, 0
      %vm1844 = vcmp.ge.s32.totalorder %v1820, 0
      %vm1845 = vcmp.ge.s32.totalorder %v1821, 0
      %vm1846 = vcmp.ge.s32.totalorder %v1822, 0
      %vm1847 = vcmp.ge.s32.totalorder %v1823, 0
      %vm1848 = vcmp.ge.s32.totalorder %v1824, 0
      %vm1849 = vcmp.ge.s32.totalorder %v1825, 0
      %vm1850 = vcmp.ge.s32.totalorder %v1826, 0
      %vm1851 = vcmp.ge.s32.totalorder %v1827, 0
      %vm1852 = vcmp.ge.s32.totalorder %v1828, 0
      %vm1853 = vcmp.ge.s32.totalorder %v1829, 0
      %vm1854 = vcmp.ge.s32.totalorder %v1830, 0
      %vm1855 = vcmp.ge.s32.totalorder %v1831, 0
      %vm1856 = vcmp.ge.s32.totalorder %v1832, 0
      %vm1857 = vcmp.ge.s32.totalorder %v1833, 0
      %vm1858 = vcmp.ge.s32.totalorder %v1834, 0
      %vm1859 = vcmp.ge.s32.totalorder %v1835, 0
      %vm1860 = vcmp.ge.s32.totalorder %v1836, 0
      %vm1861 = vcmp.ge.s32.totalorder %v1837, 0
      %vm1862 = vcmp.ge.s32.totalorder %v1838, 0
      %vm1863 = vcmp.ge.s32.totalorder %v1839, 0
      %vm1864 = vcmp.ge.s32.totalorder %v1840, 0
      %vm1865 = vcmp.ge.s32.totalorder %v1841, 0
      %vm1866 = vcmp.ge.s32.totalorder %v1842, 0
      %vm1867 = vcmp.lt.s32.totalorder %v1819, 16
      %vm1868 = vcmp.lt.s32.totalorder %v1820, 16
      %vm1869 = vcmp.lt.s32.totalorder %v1821, 16
      %vm1870 = vcmp.lt.s32.totalorder %v1822, 16
      %vm1871 = vcmp.lt.s32.totalorder %v1823, 16
      %vm1872 = vcmp.lt.s32.totalorder %v1824, 16
      %vm1873 = vcmp.lt.s32.totalorder %v1825, 16
      %vm1874 = vcmp.lt.s32.totalorder %v1826, 16
      %vm1875 = vcmp.lt.s32.totalorder %v1827, 16
      %vm1876 = vcmp.lt.s32.totalorder %v1828, 16
      %vm1877 = vcmp.lt.s32.totalorder %v1829, 16
      %vm1878 = vcmp.lt.s32.totalorder %v1830, 16
      %vm1879 = vcmp.lt.s32.totalorder %v1831, 16
      %vm1880 = vcmp.lt.s32.totalorder %v1832, 16
      %vm1881 = vcmp.lt.s32.totalorder %v1833, 16
      %vm1882 = vcmp.lt.s32.totalorder %v1834, 16
      %vm1883 = vcmp.lt.s32.totalorder %v1835, 16
      %vm1884 = vcmp.lt.s32.totalorder %v1836, 16
      %vm1885 = vcmp.lt.s32.totalorder %v1837, 16
      %vm1886 = vcmp.lt.s32.totalorder %v1838, 16
      %vm1887 = vcmp.lt.s32.totalorder %v1839, 16
      %vm1888 = vcmp.lt.s32.totalorder %v1840, 16
      %vm1889 = vcmp.lt.s32.totalorder %v1841, 16
      %vm1890 = vcmp.lt.s32.totalorder %v1842, 16
      %vm1891 = vmand %vm1843, %vm1867
      %vm1892 = vmand %vm1844, %vm1868
      %vm1893 = vmand %vm1845, %vm1869
      %vm1894 = vmand %vm1846, %vm1870
      %vm1895 = vmand %vm1847, %vm1871
      %vm1896 = vmand %vm1848, %vm1872
      %vm1897 = vmand %vm1849, %vm1873
      %vm1898 = vmand %vm1850, %vm1874
      %vm1899 = vmand %vm1851, %vm1875
      %vm1900 = vmand %vm1852, %vm1876
      %vm1901 = vmand %vm1853, %vm1877
      %vm1902 = vmand %vm1854, %vm1878
      %vm1903 = vmand %vm1855, %vm1879
      %vm1904 = vmand %vm1856, %vm1880
      %vm1905 = vmand %vm1857, %vm1881
      %vm1906 = vmand %vm1858, %vm1882
      %vm1907 = vmand %vm1859, %vm1883
      %vm1908 = vmand %vm1860, %vm1884
      %vm1909 = vmand %vm1861, %vm1885
      %vm1910 = vmand %vm1862, %vm1886
      %vm1911 = vmand %vm1863, %vm1887
      %vm1912 = vmand %vm1864, %vm1888
      %vm1913 = vmand %vm1865, %vm1889
      %vm1914 = vmand %vm1866, %vm1890
      %v1915 = vsel %vm1891, 1, 0
      %v1916 = vsel %vm1892, 1, 0
      %v1917 = vsel %vm1893, 1, 0
      %v1918 = vsel %vm1894, 1, 0
      %v1919 = vsel %vm1895, 1, 0
      %v1920 = vsel %vm1896, 1, 0
      %v1921 = vsel %vm1897, 1, 0
      %v1922 = vsel %vm1898, 1, 0
      %v1923 = vsel %vm1899, 1, 0
      %v1924 = vsel %vm1900, 1, 0
      %v1925 = vsel %vm1901, 1, 0
      %v1926 = vsel %vm1902, 1, 0
      %v1927 = vsel %vm1903, 1, 0
      %v1928 = vsel %vm1904, 1, 0
      %v1929 = vsel %vm1905, 1, 0
      %v1930 = vsel %vm1906, 1, 0
      %v1931 = vsel %vm1907, 1, 0
      %v1932 = vsel %vm1908, 1, 0
      %v1933 = vsel %vm1909, 1, 0
      %v1934 = vsel %vm1910, 1, 0
      %v1935 = vsel %vm1911, 1, 0
      %v1936 = vsel %vm1912, 1, 0
      %v1937 = vsel %vm1913, 1, 0
      %v1938 = vsel %vm1914, 1, 0
      %vm1939 = vcmp.eq.s32.totalorder %v1915, 1
      %vm1940 = vcmp.eq.s32.totalorder %v1916, 1
      %vm1941 = vcmp.eq.s32.totalorder %v1917, 1
      %vm1942 = vcmp.eq.s32.totalorder %v1918, 1
      %vm1943 = vcmp.eq.s32.totalorder %v1919, 1
      %vm1944 = vcmp.eq.s32.totalorder %v1920, 1
      %vm1945 = vcmp.eq.s32.totalorder %v1921, 1
      %vm1946 = vcmp.eq.s32.totalorder %v1922, 1
      %vm1947 = vcmp.eq.s32.totalorder %v1923, 1
      %vm1948 = vcmp.eq.s32.totalorder %v1924, 1
      %vm1949 = vcmp.eq.s32.totalorder %v1925, 1
      %vm1950 = vcmp.eq.s32.totalorder %v1926, 1
      %vm1951 = vcmp.eq.s32.totalorder %v1927, 1
      %vm1952 = vcmp.eq.s32.totalorder %v1928, 1
      %vm1953 = vcmp.eq.s32.totalorder %v1929, 1
      %vm1954 = vcmp.eq.s32.totalorder %v1930, 1
      %vm1955 = vcmp.eq.s32.totalorder %v1931, 1
      %vm1956 = vcmp.eq.s32.totalorder %v1932, 1
      %vm1957 = vcmp.eq.s32.totalorder %v1933, 1
      %vm1958 = vcmp.eq.s32.totalorder %v1934, 1
      %vm1959 = vcmp.eq.s32.totalorder %v1935, 1
      %vm1960 = vcmp.eq.s32.totalorder %v1936, 1
      %vm1961 = vcmp.eq.s32.totalorder %v1937, 1
      %vm1962 = vcmp.eq.s32.totalorder %v1938, 1
      %v1963 = vsel %vm1939, %v1818, 0.0
      %v1964 = vsel %vm1940, %v1817, 0.0
      %v1965 = vsel %vm1941, %v1816, 0.0
      %v1966 = vsel %vm1942, %v1815, 0.0
      %v1967 = vsel %vm1943, %v1814, 0.0
      %v1968 = vsel %vm1944, %v1813, 0.0
      %v1969 = vsel %vm1945, %v1812, 0.0
      %v1970 = vsel %vm1946, %v1811, 0.0
      %v1971 = vsel %vm1947, %v1810, 0.0
      %v1972 = vsel %vm1948, %v1809, 0.0
      %v1973 = vsel %vm1949, %v1808, 0.0
      %v1974 = vsel %vm1950, %v1807, 0.0
      %v1975 = vsel %vm1951, %v1806, 0.0
      %v1976 = vsel %vm1952, %v1805, 0.0
      %v1977 = vsel %vm1953, %v1804, 0.0
      %v1978 = vsel %vm1954, %v1803, 0.0
      %v1979 = vsel %vm1955, %v1802, 0.0
      %v1980 = vsel %vm1956, %v1801, 0.0
      %v1981 = vsel %vm1957, %v1800, 0.0
      %v1982 = vsel %vm1958, %v1799, 0.0
      %v1983 = vsel %vm1959, %v1798, 0.0
      %v1984 = vsel %vm1960, %v1797, 0.0
      %v1985 = vsel %vm1961, %v1796, 0.0
      %v1986 = vsel %vm1962, %v1795, 0.0
      %v1987 = vpack.c.bf16 %v1964, %v1963
      %v1988 = vpack.c.bf16 %v1966, %v1965
      %v1989 = vpack.c.bf16 %v1968, %v1967
      %v1990 = vpack.c.bf16 %v1970, %v1969
      %v1991 = vpack.c.bf16 %v1972, %v1971
      %v1992 = vpack.c.bf16 %v1974, %v1973
      %v1993 = vpack.c.bf16 %v1976, %v1975
      %v1994 = vpack.c.bf16 %v1978, %v1977
      %v1995 = vpack.c.bf16 %v1980, %v1979
      %v1996 = vpack.c.bf16 %v1982, %v1981
      %v1997 = vpack.c.bf16 %v1984, %v1983
      %v1998 = vpack.c.bf16 %v1986, %v1985
      %v1999 = vpack.c.bf16 %v1747, %v1746
      %v2000 = vpack.c.bf16 %v1749, %v1748
      %v2001 = vpack.c.bf16 %v1751, %v1750
      %v2002 = vpack.c.bf16 %v1753, %v1752
      %v2003 = vpack.c.bf16 %v1755, %v1754
      %v2004 = vpack.c.bf16 %v1757, %v1756
      %v2005 = vpack.c.bf16 %v1759, %v1758
      %v2006 = vpack.c.bf16 %v1761, %v1760
      %v2007 = vpack.c.bf16 %v1763, %v1762
      %v2008 = vpack.c.bf16 %v1765, %v1764
      %v2009 = vpack.c.bf16 %v1767, %v1766
      %v2010 = vpack.c.bf16 %v1769, %v1768
      %v2011 = vrot.slane %v1746, 1
      %v2012 = vrot.slane %v1747, 1
      %v2013 = vrot.slane %v1748, 1
      %v2014 = vrot.slane %v1749, 1
      %v2015 = vrot.slane %v1750, 1
      %v2016 = vrot.slane %v1751, 1
      %v2017 = vrot.slane %v1752, 1
      %v2018 = vrot.slane %v1753, 1
      %v2019 = vrot.slane %v1754, 1
      %v2020 = vrot.slane %v1755, 1
      %v2021 = vrot.slane %v1756, 1
      %v2022 = vrot.slane %v1757, 1
      %v2023 = vrot.slane %v1758, 1
      %v2024 = vrot.slane %v1759, 1
      %v2025 = vrot.slane %v1760, 1
      %v2026 = vrot.slane %v1761, 1
      %v2027 = vrot.slane %v1762, 1
      %v2028 = vrot.slane %v1763, 1
      %v2029 = vrot.slane %v1764, 1
      %v2030 = vrot.slane %v1765, 1
      %v2031 = vrot.slane %v1766, 1
      %v2032 = vrot.slane %v1767, 1
      %v2033 = vrot.slane %v1768, 1
      %v2034 = vrot.slane %v1769, 1
      %vm2035 = vcmp.lt.s32.totalorder %v974, 7
      %v2036 = vsel %vm2035, %v2033, %v2034
      %v2037 = vsel %vm2035, %v2032, %v2033
      %v2038 = vsel %vm2035, %v2031, %v2032
      %v2039 = vsel %vm2035, %v2030, %v2031
      %v2040 = vsel %vm2035, %v2029, %v2030
      %v2041 = vsel %vm2035, %v2028, %v2029
      %v2042 = vsel %vm2035, %v2027, %v2028
      %v2043 = vsel %vm2035, %v2026, %v2027
      %v2044 = vsel %vm2035, %v2025, %v2026
      %v2045 = vsel %vm2035, %v2024, %v2025
      %v2046 = vsel %vm2035, %v2023, %v2024
      %v2047 = vsel %vm2035, %v2022, %v2023
      %v2048 = vsel %vm2035, %v2021, %v2022
      %v2049 = vsel %vm2035, %v2020, %v2021
      %v2050 = vsel %vm2035, %v2019, %v2020
      %v2051 = vsel %vm2035, %v2018, %v2019
      %v2052 = vsel %vm2035, %v2017, %v2018
      %v2053 = vsel %vm2035, %v2016, %v2017
      %v2054 = vsel %vm2035, %v2015, %v2016
      %v2055 = vsel %vm2035, %v2014, %v2015
      %v2056 = vsel %vm2035, %v2013, %v2014
      %v2057 = vsel %vm2035, %v2012, %v2013
      %v2058 = vsel %vm2035, %v2011, %v2012
      %v2059 = vsel %vm2035, %v2034, %v2011
      %v2060 = vadd.s32 %v1262, 1
      %v2061 = vadd.s32 %v1263, 1
      %v2062 = vadd.s32 %v1264, 1
      %v2063 = vadd.s32 %v1265, 1
      %v2064 = vadd.s32 %v1266, 1
      %v2065 = vadd.s32 %v1267, 1
      %v2066 = vadd.s32 %v1268, 1
      %v2067 = vadd.s32 %v1269, 1
      %v2068 = vadd.s32 %v1270, 1
      %v2069 = vadd.s32 %v1271, 1
      %v2070 = vadd.s32 %v1272, 1
      %v2071 = vadd.s32 %v1273, 1
      %v2072 = vadd.s32 %v1274, 1
      %v2073 = vadd.s32 %v1275, 1
      %v2074 = vadd.s32 %v1276, 1
      %v2075 = vadd.s32 %v1277, 1
      %v2076 = vadd.s32 %v1278, 1
      %v2077 = vadd.s32 %v1279, 1
      %v2078 = vadd.s32 %v1280, 1
      %v2079 = vadd.s32 %v1281, 1
      %v2080 = vadd.s32 %v1282, 1
      %v2081 = vadd.s32 %v1283, 1
      %v2082 = vadd.s32 %v1284, 1
      %v2083 = vadd.s32 %v1285, 1
      %vm2084 = vcmp.ge.s32.totalorder %v2060, 0
      %vm2085 = vcmp.ge.s32.totalorder %v2061, 0
      %vm2086 = vcmp.ge.s32.totalorder %v2062, 0
      %vm2087 = vcmp.ge.s32.totalorder %v2063, 0
      %vm2088 = vcmp.ge.s32.totalorder %v2064, 0
      %vm2089 = vcmp.ge.s32.totalorder %v2065, 0
      %vm2090 = vcmp.ge.s32.totalorder %v2066, 0
      %vm2091 = vcmp.ge.s32.totalorder %v2067, 0
      %vm2092 = vcmp.ge.s32.totalorder %v2068, 0
      %vm2093 = vcmp.ge.s32.totalorder %v2069, 0
      %vm2094 = vcmp.ge.s32.totalorder %v2070, 0
      %vm2095 = vcmp.ge.s32.totalorder %v2071, 0
      %vm2096 = vcmp.ge.s32.totalorder %v2072, 0
      %vm2097 = vcmp.ge.s32.totalorder %v2073, 0
      %vm2098 = vcmp.ge.s32.totalorder %v2074, 0
      %vm2099 = vcmp.ge.s32.totalorder %v2075, 0
      %vm2100 = vcmp.ge.s32.totalorder %v2076, 0
      %vm2101 = vcmp.ge.s32.totalorder %v2077, 0
      %vm2102 = vcmp.ge.s32.totalorder %v2078, 0
      %vm2103 = vcmp.ge.s32.totalorder %v2079, 0
      %vm2104 = vcmp.ge.s32.totalorder %v2080, 0
      %vm2105 = vcmp.ge.s32.totalorder %v2081, 0
      %vm2106 = vcmp.ge.s32.totalorder %v2082, 0
      %vm2107 = vcmp.ge.s32.totalorder %v2083, 0
      %vm2108 = vcmp.lt.s32.totalorder %v2060, 16
      %vm2109 = vcmp.lt.s32.totalorder %v2061, 16
      %vm2110 = vcmp.lt.s32.totalorder %v2062, 16
      %vm2111 = vcmp.lt.s32.totalorder %v2063, 16
      %vm2112 = vcmp.lt.s32.totalorder %v2064, 16
      %vm2113 = vcmp.lt.s32.totalorder %v2065, 16
      %vm2114 = vcmp.lt.s32.totalorder %v2066, 16
      %vm2115 = vcmp.lt.s32.totalorder %v2067, 16
      %vm2116 = vcmp.lt.s32.totalorder %v2068, 16
      %vm2117 = vcmp.lt.s32.totalorder %v2069, 16
      %vm2118 = vcmp.lt.s32.totalorder %v2070, 16
      %vm2119 = vcmp.lt.s32.totalorder %v2071, 16
      %vm2120 = vcmp.lt.s32.totalorder %v2072, 16
      %vm2121 = vcmp.lt.s32.totalorder %v2073, 16
      %vm2122 = vcmp.lt.s32.totalorder %v2074, 16
      %vm2123 = vcmp.lt.s32.totalorder %v2075, 16
      %vm2124 = vcmp.lt.s32.totalorder %v2076, 16
      %vm2125 = vcmp.lt.s32.totalorder %v2077, 16
      %vm2126 = vcmp.lt.s32.totalorder %v2078, 16
      %vm2127 = vcmp.lt.s32.totalorder %v2079, 16
      %vm2128 = vcmp.lt.s32.totalorder %v2080, 16
      %vm2129 = vcmp.lt.s32.totalorder %v2081, 16
      %vm2130 = vcmp.lt.s32.totalorder %v2082, 16
      %vm2131 = vcmp.lt.s32.totalorder %v2083, 16
      %vm2132 = vmand %vm2084, %vm2108
      %vm2133 = vmand %vm2085, %vm2109
      %vm2134 = vmand %vm2086, %vm2110
      %vm2135 = vmand %vm2087, %vm2111
      %vm2136 = vmand %vm2088, %vm2112
      %vm2137 = vmand %vm2089, %vm2113
      %vm2138 = vmand %vm2090, %vm2114
      %vm2139 = vmand %vm2091, %vm2115
      %vm2140 = vmand %vm2092, %vm2116
      %vm2141 = vmand %vm2093, %vm2117
      %vm2142 = vmand %vm2094, %vm2118
      %vm2143 = vmand %vm2095, %vm2119
      %vm2144 = vmand %vm2096, %vm2120
      %vm2145 = vmand %vm2097, %vm2121
      %vm2146 = vmand %vm2098, %vm2122
      %vm2147 = vmand %vm2099, %vm2123
      %vm2148 = vmand %vm2100, %vm2124
      %vm2149 = vmand %vm2101, %vm2125
      %vm2150 = vmand %vm2102, %vm2126
      %vm2151 = vmand %vm2103, %vm2127
      %vm2152 = vmand %vm2104, %vm2128
      %vm2153 = vmand %vm2105, %vm2129
      %vm2154 = vmand %vm2106, %vm2130
      %vm2155 = vmand %vm2107, %vm2131
      %v2156 = vsel %vm2132, 1, 0
      %v2157 = vsel %vm2133, 1, 0
      %v2158 = vsel %vm2134, 1, 0
      %v2159 = vsel %vm2135, 1, 0
      %v2160 = vsel %vm2136, 1, 0
      %v2161 = vsel %vm2137, 1, 0
      %v2162 = vsel %vm2138, 1, 0
      %v2163 = vsel %vm2139, 1, 0
      %v2164 = vsel %vm2140, 1, 0
      %v2165 = vsel %vm2141, 1, 0
      %v2166 = vsel %vm2142, 1, 0
      %v2167 = vsel %vm2143, 1, 0
      %v2168 = vsel %vm2144, 1, 0
      %v2169 = vsel %vm2145, 1, 0
      %v2170 = vsel %vm2146, 1, 0
      %v2171 = vsel %vm2147, 1, 0
      %v2172 = vsel %vm2148, 1, 0
      %v2173 = vsel %vm2149, 1, 0
      %v2174 = vsel %vm2150, 1, 0
      %v2175 = vsel %vm2151, 1, 0
      %v2176 = vsel %vm2152, 1, 0
      %v2177 = vsel %vm2153, 1, 0
      %v2178 = vsel %vm2154, 1, 0
      %v2179 = vsel %vm2155, 1, 0
      %vm2180 = vcmp.eq.s32.totalorder %v2156, 1
      %vm2181 = vcmp.eq.s32.totalorder %v2157, 1
      %vm2182 = vcmp.eq.s32.totalorder %v2158, 1
      %vm2183 = vcmp.eq.s32.totalorder %v2159, 1
      %vm2184 = vcmp.eq.s32.totalorder %v2160, 1
      %vm2185 = vcmp.eq.s32.totalorder %v2161, 1
      %vm2186 = vcmp.eq.s32.totalorder %v2162, 1
      %vm2187 = vcmp.eq.s32.totalorder %v2163, 1
      %vm2188 = vcmp.eq.s32.totalorder %v2164, 1
      %vm2189 = vcmp.eq.s32.totalorder %v2165, 1
      %vm2190 = vcmp.eq.s32.totalorder %v2166, 1
      %vm2191 = vcmp.eq.s32.totalorder %v2167, 1
      %vm2192 = vcmp.eq.s32.totalorder %v2168, 1
      %vm2193 = vcmp.eq.s32.totalorder %v2169, 1
      %vm2194 = vcmp.eq.s32.totalorder %v2170, 1
      %vm2195 = vcmp.eq.s32.totalorder %v2171, 1
      %vm2196 = vcmp.eq.s32.totalorder %v2172, 1
      %vm2197 = vcmp.eq.s32.totalorder %v2173, 1
      %vm2198 = vcmp.eq.s32.totalorder %v2174, 1
      %vm2199 = vcmp.eq.s32.totalorder %v2175, 1
      %vm2200 = vcmp.eq.s32.totalorder %v2176, 1
      %vm2201 = vcmp.eq.s32.totalorder %v2177, 1
      %vm2202 = vcmp.eq.s32.totalorder %v2178, 1
      %vm2203 = vcmp.eq.s32.totalorder %v2179, 1
      %v2204 = vsel %vm2180, %v2058, 0.0
      %v2205 = vsel %vm2181, %v2057, 0.0
      %v2206 = vsel %vm2182, %v2056, 0.0
      %v2207 = vsel %vm2183, %v2055, 0.0
      %v2208 = vsel %vm2184, %v2054, 0.0
      %v2209 = vsel %vm2185, %v2053, 0.0
      %v2210 = vsel %vm2186, %v2052, 0.0
      %v2211 = vsel %vm2187, %v2051, 0.0
      %v2212 = vsel %vm2188, %v2050, 0.0
      %v2213 = vsel %vm2189, %v2049, 0.0
      %v2214 = vsel %vm2190, %v2048, 0.0
      %v2215 = vsel %vm2191, %v2047, 0.0
      %v2216 = vsel %vm2192, %v2046, 0.0
      %v2217 = vsel %vm2193, %v2045, 0.0
      %v2218 = vsel %vm2194, %v2044, 0.0
      %v2219 = vsel %vm2195, %v2043, 0.0
      %v2220 = vsel %vm2196, %v2042, 0.0
      %v2221 = vsel %vm2197, %v2041, 0.0
      %v2222 = vsel %vm2198, %v2040, 0.0
      %v2223 = vsel %vm2199, %v2039, 0.0
      %v2224 = vsel %vm2200, %v2038, 0.0
      %v2225 = vsel %vm2201, %v2037, 0.0
      %v2226 = vsel %vm2202, %v2036, 0.0
      %v2227 = vsel %vm2203, %v2059, 0.0
      %v2228 = vpack.c.bf16 %v2205, %v2204
      %v2229 = vpack.c.bf16 %v2207, %v2206
      %v2230 = vpack.c.bf16 %v2209, %v2208
      %v2231 = vpack.c.bf16 %v2211, %v2210
      %v2232 = vpack.c.bf16 %v2213, %v2212
      %v2233 = vpack.c.bf16 %v2215, %v2214
      %v2234 = vpack.c.bf16 %v2217, %v2216
      %v2235 = vpack.c.bf16 %v2219, %v2218
      %v2236 = vpack.c.bf16 %v2221, %v2220
      %v2237 = vpack.c.bf16 %v2223, %v2222
      %v2238 = vpack.c.bf16 %v2225, %v2224
      %v2239 = vpack.c.bf16 %v2227, %v2226
      %2252 = vrot.lane.b32.xlu0 %v1999, 8
      %v2253 = vpop.permute.xlu0 %2252
      %2254 = vrot.lane.b32.xlu0 %v2000, 8
      %v2255 = vpop.permute.xlu0 %2254
      %2256 = vrot.lane.b32.xlu0 %v2001, 8
      %v2257 = vpop.permute.xlu0 %2256
      %2258 = vrot.lane.b32.xlu0 %v2002, 8
      %v2259 = vpop.permute.xlu0 %2258
      %2260 = vrot.lane.b32.xlu0 %v2003, 8
      %v2261 = vpop.permute.xlu0 %2260
      %2262 = vrot.lane.b32.xlu0 %v2004, 8
      %v2263 = vpop.permute.xlu0 %2262
      %2264 = vrot.lane.b32.xlu0 %v2005, 8
      %v2265 = vpop.permute.xlu0 %2264
      %2266 = vrot.lane.b32.xlu0 %v2006, 8
      %v2267 = vpop.permute.xlu0 %2266
      %2268 = vrot.lane.b32.xlu0 %v2007, 8
      %v2269 = vpop.permute.xlu0 %2268
      %2270 = vrot.lane.b32.xlu0 %v2008, 8
      %v2271 = vpop.permute.xlu0 %2270
      %2272 = vrot.lane.b32.xlu0 %v2009, 8
      %v2273 = vpop.permute.xlu0 %2272
      %2274 = vrot.lane.b32.xlu0 %v2010, 8
      %v2275 = vpop.permute.xlu0 %2274
      %2288 = vrot.lane.b32.xlu0 %v2228, 16
      %v2289 = vpop.permute.xlu0 %2288
      %2290 = vrot.lane.b32.xlu0 %v2229, 16
      %v2291 = vpop.permute.xlu0 %2290
      %2292 = vrot.lane.b32.xlu0 %v2230, 16
      %v2293 = vpop.permute.xlu0 %2292
      %2294 = vrot.lane.b32.xlu0 %v2231, 16
      %v2295 = vpop.permute.xlu0 %2294
      %2296 = vrot.lane.b32.xlu0 %v2232, 16
      %v2297 = vpop.permute.xlu0 %2296
      %2298 = vrot.lane.b32.xlu0 %v2233, 16
      %v2299 = vpop.permute.xlu0 %2298
      %2300 = vrot.lane.b32.xlu0 %v2234, 16
      %v2301 = vpop.permute.xlu0 %2300
      %2302 = vrot.lane.b32.xlu0 %v2235, 16
      %v2303 = vpop.permute.xlu0 %2302
      %2304 = vrot.lane.b32.xlu0 %v2236, 16
      %v2305 = vpop.permute.xlu0 %2304
      %2306 = vrot.lane.b32.xlu0 %v2237, 16
      %v2307 = vpop.permute.xlu0 %2306
      %2308 = vrot.lane.b32.xlu0 %v2238, 16
      %v2309 = vpop.permute.xlu0 %2308
      %2310 = vrot.lane.b32.xlu0 %v2239, 16
      %v2311 = vpop.permute.xlu0 %2310
      %vm2312 = vcmask 64512
      %v2315 = vsel %vm2312, %v1987, %v2253
      %v2318 = vsel %vm2312, %v1988, %v2255
      %v2321 = vsel %vm2312, %v1989, %v2257
      %v2324 = vsel %vm2312, %v1990, %v2259
      %v2327 = vsel %vm2312, %v1991, %v2261
      %v2330 = vsel %vm2312, %v1992, %v2263
      %v2333 = vsel %vm2312, %v1993, %v2265
      %v2336 = vsel %vm2312, %v1994, %v2267
      %v2339 = vsel %vm2312, %v1995, %v2269
      %v2342 = vsel %vm2312, %v1996, %v2271
      %v2345 = vsel %vm2312, %v1997, %v2273
      %v2348 = vsel %vm2312, %v1998, %v2275
      %vm2349 = vcmask 130048
      %v2351 = vsel %vm2349, %v2315, %v2289
      %v2353 = vsel %vm2349, %v2318, %v2291
      %v2355 = vsel %vm2349, %v2321, %v2293
      %v2357 = vsel %vm2349, %v2324, %v2295
      %v2359 = vsel %vm2349, %v2327, %v2297
      %v2361 = vsel %vm2349, %v2330, %v2299
      %v2363 = vsel %vm2349, %v2333, %v2301
      %v2365 = vsel %vm2349, %v2336, %v2303
      %v2367 = vsel %vm2349, %v2339, %v2305
      %v2369 = vsel %vm2349, %v2342, %v2307
      %v2371 = vsel %vm2349, %v2345, %v2309
      %v2373 = vsel %vm2349, %v2348, %v2311
      %v2374 = vld [vmem:[%s8] sm:$0xf]
      %v2375 = vld [vmem:[%s8 + $0x4] sm:$0xf]
      %v2376 = vld [vmem:[%s8 + $0x8] sm:$0xf]
      %s2377 = scalar_lea.vmem %s8, 12
      %v2378 = vld [vmem:[%s2377] sm:$0xf]
      %v2379 = vld [vmem:[%s2377 + $0x4] sm:$0xf]
      %v2380 = vld [vmem:[%s2377 + $0x8] sm:$0xf]
      %v2384 = vunpack.c.l.b16 %v2378
      %v2385 = vunpack.c.l.b16 %v2379
      %v2386 = vunpack.c.l.b16 %v2380
      %v2387 = vpack.c.b16 %v2385, %v2384
      %v2388 = vpack.c.b16 %v2386, %v2386
      %vm2390 = vcmask 195584
      %v2391 = vsel %vm2390, %v2353, 0
      %v2393 = vsel %vm2390, %v2355, 0
      %v2395 = vsel %vm2390, %v2357, 0
      %v2397 = vsel %vm2390, %v2359, 0
      %v2399 = vsel %vm2390, %v2361, 0
      %v2401 = vsel %vm2390, %v2363, 0
      %v2403 = vsel %vm2390, %v2365, 0
      %v2405 = vsel %vm2390, %v2367, 0
      %v2407 = vsel %vm2390, %v2369, 0
      %v2409 = vsel %vm2390, %v2371, 0
      %vm2411 = vcmask 1043456
      %v2413 = vsel %vm2411, %v2388, 0
      %2415 = vmatprep.subr.bf16.mxu0 0
      %2416 = vmatpush1.bf16.msra.mxu0 0
      %2417 = vmatprep.subr.bf16.mxu0 0
      %2418 = vmatpush1.bf16.msra.mxu0 0
      %2419 = vmatprep.subr.bf16.mxu0 0
      %2420 = vmatpush1.bf16.msra.mxu0 0
      %2421 = vmatprep.subr.bf16.mxu0 0
      %2422 = vmatpush1.bf16.msra.mxu0 0
      %2423 = vmatprep.subr.bf16.mxu0 0
      %2424 = vmatpush1.bf16.msra.mxu0 0
      %2425 = vmatprep.subr.bf16.mxu0 0
      %2426 = vmatpush1.bf16.msra.mxu0 0
      %2427 = vmatprep.subr.bf16.mxu0 0
      %2428 = vmatpush1.bf16.msra.mxu0 %v2413
      %2429 = vmatprep.subr.bf16.mxu0 0
      %2430 = vmatpush1.bf16.msra.mxu0 %v2387
      %2431 = vmatprep.subr.bf16.mxu0 0
      %2432 = vmatpush2.bf16.msra.mxu0 0
      %2433 = vmatprep.subr.bf16.mxu0 0
      %2434 = vmatpush2.bf16.msra.mxu0 0
      %2435 = vmatprep.subr.bf16.mxu0 0
      %2436 = vmatpush2.bf16.msra.mxu0 0
      %2437 = vmatprep.subr.bf16.mxu0 0
      %2438 = vmatpush2.bf16.msra.mxu0 0
      %2439 = vmatprep.subr.bf16.mxu0 0
      %2440 = vmatpush2.bf16.msra.mxu0 0
      %2441 = vmatprep.subr.bf16.mxu0 0
      %2442 = vmatpush2.bf16.msra.mxu0 0
      %2443 = vmatprep.subr.bf16.mxu0 0
      %2444 = vmatpush2.bf16.msra.mxu0 0
      %2445 = vmatprep.subr.bf16.mxu0 0
      %2446 = vmatpush2.bf16.msra.mxu0 0
      %2447 = vmatprep.mubr.bf16.mxu0 0
      %2448 = vmatmul.mubr.bf16.gmra.mxu0 %v2391
      %v2449 = vpop.f32.mrf.mxu0
      %v2450 = vadd.f32 0.0, %v2449
      %v2451 = vpop.f32.mrf.mxu0
      %v2452 = vpop.f32.mrf.mxu0
      %v2453 = vadd.f32 0.0, %v2452
      %v2454 = vpop.f32.mrf.mxu0
      %2455 = vmatprep.mubr.bf16.mxu0 0
      %2456 = vmatmul.mubr.bf16.gmra.mxu0 %v2393
      %v2457 = vpop.f32.mrf.mxu0
      %v2458 = vadd.f32 0.0, %v2457
      %v2459 = vpop.f32.mrf.mxu0
      %v2460 = vpop.f32.mrf.mxu0
      %v2461 = vadd.f32 0.0, %v2460
      %v2462 = vpop.f32.mrf.mxu0
      %2463 = vmatprep.mubr.bf16.mxu0 0
      %2464 = vmatmul.mubr.bf16.gmra.mxu0 %v2395
      %v2465 = vpop.f32.mrf.mxu0
      %v2466 = vadd.f32 0.0, %v2465
      %v2467 = vpop.f32.mrf.mxu0
      %v2468 = vpop.f32.mrf.mxu0
      %v2469 = vadd.f32 0.0, %v2468
      %v2470 = vpop.f32.mrf.mxu0
      %2471 = vmatprep.mubr.bf16.mxu0 0
      %2472 = vmatmul.mubr.bf16.gmra.mxu0 %v2397
      %v2473 = vpop.f32.mrf.mxu0
      %v2474 = vadd.f32 0.0, %v2473
      %v2475 = vpop.f32.mrf.mxu0
      %v2476 = vpop.f32.mrf.mxu0
      %v2477 = vadd.f32 0.0, %v2476
      %v2478 = vpop.f32.mrf.mxu0
      %2479 = vmatprep.mubr.bf16.mxu0 0
      %2480 = vmatmul.mubr.bf16.gmra.mxu0 %v2399
      %v2481 = vpop.f32.mrf.mxu0
      %v2482 = vadd.f32 0.0, %v2481
      %v2483 = vpop.f32.mrf.mxu0
      %v2484 = vpop.f32.mrf.mxu0
      %v2485 = vadd.f32 0.0, %v2484
      %v2486 = vpop.f32.mrf.mxu0
      %2487 = vmatprep.mubr.bf16.mxu0 0
      %2488 = vmatmul.mubr.bf16.gmra.mxu0 %v2401
      %v2489 = vpop.f32.mrf.mxu0
      %v2490 = vadd.f32 0.0, %v2489
      %v2491 = vpop.f32.mrf.mxu0
      %v2492 = vpop.f32.mrf.mxu0
      %v2493 = vadd.f32 0.0, %v2492
      %v2494 = vpop.f32.mrf.mxu0
      %2495 = vmatprep.mubr.bf16.mxu0 0
      %2496 = vmatmul.mubr.bf16.gmra.mxu0 %v2403
      %v2497 = vpop.f32.mrf.mxu0
      %v2498 = vadd.f32 0.0, %v2497
      %v2499 = vpop.f32.mrf.mxu0
      %v2500 = vpop.f32.mrf.mxu0
      %v2501 = vadd.f32 0.0, %v2500
      %v2502 = vpop.f32.mrf.mxu0
      %2503 = vmatprep.mubr.bf16.mxu0 0
      %2504 = vmatmul.mubr.bf16.gmra.mxu0 %v2405
      %v2505 = vpop.f32.mrf.mxu0
      %v2506 = vadd.f32 0.0, %v2505
      %v2507 = vpop.f32.mrf.mxu0
      %v2508 = vpop.f32.mrf.mxu0
      %v2509 = vadd.f32 0.0, %v2508
      %v2510 = vpop.f32.mrf.mxu0
      %2511 = vmatprep.mubr.bf16.mxu0 0
      %2512 = vmatmul.mubr.bf16.gmra.mxu0 %v2407
      %v2513 = vpop.f32.mrf.mxu0
      %v2514 = vadd.f32 0.0, %v2513
      %v2515 = vpop.f32.mrf.mxu0
      %v2516 = vpop.f32.mrf.mxu0
      %v2517 = vadd.f32 0.0, %v2516
      %v2518 = vpop.f32.mrf.mxu0
      %2519 = vmatprep.mubr.bf16.mxu0 0
      %2520 = vmatmul.mubr.bf16.gmra.mxu0 %v2409
      %v2521 = vpop.f32.mrf.mxu0
      %v2522 = vadd.f32 0.0, %v2521
      %v2523 = vpop.f32.mrf.mxu0
      %v2524 = vpop.f32.mrf.mxu0
      %v2525 = vadd.f32 0.0, %v2524
      %v2526 = vpop.f32.mrf.mxu0
      %2527 = vdwg.mxu0
      %v2531 = vunpack.c.l.b16 %v2374
      %v2532 = vunpack.c.l.b16 %v2375
      %v2533 = vunpack.c.l.b16 %v2376
      %v2534 = vpack.c.b16 %v2532, %v2531
      %v2535 = vpack.c.b16 %v2533, %v2533
      %v2537 = vsel %vm2390, %v2351, 0
      %v2540 = vsel %vm2411, %v2535, 0
      %2542 = vmatprep.subr.bf16.mxu0 0
      %2543 = vmatpush1.bf16.msra.mxu0 0
      %2544 = vmatprep.subr.bf16.mxu0 0
      %2545 = vmatpush1.bf16.msra.mxu0 0
      %2546 = vmatprep.subr.bf16.mxu0 0
      %2547 = vmatpush1.bf16.msra.mxu0 0
      %2548 = vmatprep.subr.bf16.mxu0 0
      %2549 = vmatpush1.bf16.msra.mxu0 0
      %2550 = vmatprep.subr.bf16.mxu0 0
      %2551 = vmatpush1.bf16.msra.mxu0 0
      %2552 = vmatprep.subr.bf16.mxu0 0
      %2553 = vmatpush1.bf16.msra.mxu0 0
      %2554 = vmatprep.subr.bf16.mxu0 0
      %2555 = vmatpush1.bf16.msra.mxu0 %v2540
      %2556 = vmatprep.subr.bf16.mxu0 0
      %2557 = vmatpush1.bf16.msra.mxu0 %v2534
      %2558 = vmatprep.subr.bf16.mxu0 0
      %2559 = vmatpush2.bf16.msra.mxu0 0
      %2560 = vmatprep.subr.bf16.mxu0 0
      %2561 = vmatpush2.bf16.msra.mxu0 0
      %2562 = vmatprep.subr.bf16.mxu0 0
      %2563 = vmatpush2.bf16.msra.mxu0 0
      %2564 = vmatprep.subr.bf16.mxu0 0
      %2565 = vmatpush2.bf16.msra.mxu0 0
      %2566 = vmatprep.subr.bf16.mxu0 0
      %2567 = vmatpush2.bf16.msra.mxu0 0
      %2568 = vmatprep.subr.bf16.mxu0 0
      %2569 = vmatpush2.bf16.msra.mxu0 0
      %2570 = vmatprep.subr.bf16.mxu0 0
      %2571 = vmatpush2.bf16.msra.mxu0 0
      %2572 = vmatprep.subr.bf16.mxu0 0
      %2573 = vmatpush2.bf16.msra.mxu0 0
      %2574 = vmatprep.mubr.bf16.mxu0 0
      %2575 = vmatmul.mubr.bf16.gmra.mxu0 %v2537
      %v2576 = vpop.f32.mrf.mxu0
      %v2577 = vadd.f32 %v2450, %v2576
      %v2578 = vpop.f32.mrf.mxu0
      %v2579 = vpop.f32.mrf.mxu0
      %v2580 = vadd.f32 %v2453, %v2579
      %v2581 = vpop.f32.mrf.mxu0
      %2582 = vmatprep.mubr.bf16.mxu0 0
      %2583 = vmatmul.mubr.bf16.gmra.mxu0 %v2391
      %v2584 = vpop.f32.mrf.mxu0
      %v2585 = vadd.f32 %v2458, %v2584
      %v2586 = vpop.f32.mrf.mxu0
      %v2587 = vpop.f32.mrf.mxu0
      %v2588 = vadd.f32 %v2461, %v2587
      %v2589 = vpop.f32.mrf.mxu0
      %2590 = vmatprep.mubr.bf16.mxu0 0
      %2591 = vmatmul.mubr.bf16.gmra.mxu0 %v2393
      %v2592 = vpop.f32.mrf.mxu0
      %v2593 = vadd.f32 %v2466, %v2592
      %v2594 = vpop.f32.mrf.mxu0
      %v2595 = vpop.f32.mrf.mxu0
      %v2596 = vadd.f32 %v2469, %v2595
      %v2597 = vpop.f32.mrf.mxu0
      %2598 = vmatprep.mubr.bf16.mxu0 0
      %2599 = vmatmul.mubr.bf16.gmra.mxu0 %v2395
      %v2600 = vpop.f32.mrf.mxu0
      %v2601 = vadd.f32 %v2474, %v2600
      %v2602 = vpop.f32.mrf.mxu0
      %v2603 = vpop.f32.mrf.mxu0
      %v2604 = vadd.f32 %v2477, %v2603
      %v2605 = vpop.f32.mrf.mxu0
      %2606 = vmatprep.mubr.bf16.mxu0 0
      %2607 = vmatmul.mubr.bf16.gmra.mxu0 %v2397
      %v2608 = vpop.f32.mrf.mxu0
      %v2609 = vadd.f32 %v2482, %v2608
      %v2610 = vpop.f32.mrf.mxu0
      %v2611 = vpop.f32.mrf.mxu0
      %v2612 = vadd.f32 %v2485, %v2611
      %v2613 = vpop.f32.mrf.mxu0
      %2614 = vmatprep.mubr.bf16.mxu0 0
      %2615 = vmatmul.mubr.bf16.gmra.mxu0 %v2399
      %v2616 = vpop.f32.mrf.mxu0
      %v2617 = vadd.f32 %v2490, %v2616
      %v2618 = vpop.f32.mrf.mxu0
      %v2619 = vpop.f32.mrf.mxu0
      %v2620 = vadd.f32 %v2493, %v2619
      %v2621 = vpop.f32.mrf.mxu0
      %2622 = vmatprep.mubr.bf16.mxu0 0
      %2623 = vmatmul.mubr.bf16.gmra.mxu0 %v2401
      %v2624 = vpop.f32.mrf.mxu0
      %v2625 = vadd.f32 %v2498, %v2624
      %v2626 = vpop.f32.mrf.mxu0
      %v2627 = vpop.f32.mrf.mxu0
      %v2628 = vadd.f32 %v2501, %v2627
      %v2629 = vpop.f32.mrf.mxu0
      %2630 = vmatprep.mubr.bf16.mxu0 0
      %2631 = vmatmul.mubr.bf16.gmra.mxu0 %v2403
      %v2632 = vpop.f32.mrf.mxu0
      %v2633 = vadd.f32 %v2506, %v2632
      %v2634 = vpop.f32.mrf.mxu0
      %v2635 = vpop.f32.mrf.mxu0
      %v2636 = vadd.f32 %v2509, %v2635
      %v2637 = vpop.f32.mrf.mxu0
      %2638 = vmatprep.mubr.bf16.mxu0 0
      %2639 = vmatmul.mubr.bf16.gmra.mxu0 %v2405
      %v2640 = vpop.f32.mrf.mxu0
      %v2641 = vadd.f32 %v2514, %v2640
      %v2642 = vpop.f32.mrf.mxu0
      %v2643 = vpop.f32.mrf.mxu0
      %v2644 = vadd.f32 %v2517, %v2643
      %v2645 = vpop.f32.mrf.mxu0
      %2646 = vmatprep.mubr.bf16.mxu0 0
      %2647 = vmatmul.mubr.bf16.gmra.mxu0 %v2407
      %v2648 = vpop.f32.mrf.mxu0
      %v2649 = vadd.f32 %v2522, %v2648
      %v2650 = vpop.f32.mrf.mxu0
      %v2651 = vpop.f32.mrf.mxu0
      %v2652 = vadd.f32 %v2525, %v2651
      %v2653 = vpop.f32.mrf.mxu0
      %2654 = vdwg.mxu0
      %s2655 = scalar_lea.vmem %s8, 24
      %v2656 = vld [vmem:[%s2655] sm:$0xf]
      %v2657 = vld [vmem:[%s2655 + $0x4] sm:$0xf]
      %v2658 = vld [vmem:[%s2655 + $0x8] sm:$0xf]
      %v2662 = vunpack.c.l.b16 %v2656
      %v2663 = vunpack.c.l.b16 %v2657
      %v2664 = vunpack.c.l.b16 %v2658
      %v2665 = vpack.c.b16 %v2663, %v2662
      %v2666 = vpack.c.b16 %v2664, %v2664
      %v2668 = vsel %vm2390, %v2373, 0
      %v2671 = vsel %vm2411, %v2666, 0
      %2673 = vmatprep.subr.bf16.mxu0 0
      %2674 = vmatpush1.bf16.msra.mxu0 0
      %2675 = vmatprep.subr.bf16.mxu0 0
      %2676 = vmatpush1.bf16.msra.mxu0 0
      %2677 = vmatprep.subr.bf16.mxu0 0
      %2678 = vmatpush1.bf16.msra.mxu0 0
      %2679 = vmatprep.subr.bf16.mxu0 0
      %2680 = vmatpush1.bf16.msra.mxu0 0
      %2681 = vmatprep.subr.bf16.mxu0 0
      %2682 = vmatpush1.bf16.msra.mxu0 0
      %2683 = vmatprep.subr.bf16.mxu0 0
      %2684 = vmatpush1.bf16.msra.mxu0 0
      %2685 = vmatprep.subr.bf16.mxu0 0
      %2686 = vmatpush1.bf16.msra.mxu0 %v2671
      %2687 = vmatprep.subr.bf16.mxu0 0
      %2688 = vmatpush1.bf16.msra.mxu0 %v2665
      %2689 = vmatprep.subr.bf16.mxu0 0
      %2690 = vmatpush2.bf16.msra.mxu0 0
      %2691 = vmatprep.subr.bf16.mxu0 0
      %2692 = vmatpush2.bf16.msra.mxu0 0
      %2693 = vmatprep.subr.bf16.mxu0 0
      %2694 = vmatpush2.bf16.msra.mxu0 0
      %2695 = vmatprep.subr.bf16.mxu0 0
      %2696 = vmatpush2.bf16.msra.mxu0 0
      %2697 = vmatprep.subr.bf16.mxu0 0
      %2698 = vmatpush2.bf16.msra.mxu0 0
      %2699 = vmatprep.subr.bf16.mxu0 0
      %2700 = vmatpush2.bf16.msra.mxu0 0
      %2701 = vmatprep.subr.bf16.mxu0 0
      %2702 = vmatpush2.bf16.msra.mxu0 0
      %2703 = vmatprep.subr.bf16.mxu0 0
      %2704 = vmatpush2.bf16.msra.mxu0 0
      %2705 = vmatprep.mubr.bf16.mxu0 0
      %2706 = vmatmul.mubr.bf16.gmra.mxu0 %v2393
      %v2707 = vpop.f32.mrf.mxu0
      %v2708 = vadd.f32 0.0, %v2707
      %v2709 = vpop.f32.mrf.mxu0
      %v2710 = vpop.f32.mrf.mxu0
      %v2711 = vadd.f32 0.0, %v2710
      %v2712 = vpop.f32.mrf.mxu0
      %2713 = vmatprep.mubr.bf16.mxu0 0
      %2714 = vmatmul.mubr.bf16.gmra.mxu0 %v2395
      %v2715 = vpop.f32.mrf.mxu0
      %v2716 = vadd.f32 0.0, %v2715
      %v2717 = vpop.f32.mrf.mxu0
      %v2718 = vpop.f32.mrf.mxu0
      %v2719 = vadd.f32 0.0, %v2718
      %v2720 = vpop.f32.mrf.mxu0
      %2721 = vmatprep.mubr.bf16.mxu0 0
      %2722 = vmatmul.mubr.bf16.gmra.mxu0 %v2397
      %v2723 = vpop.f32.mrf.mxu0
      %v2724 = vadd.f32 0.0, %v2723
      %v2725 = vpop.f32.mrf.mxu0
      %v2726 = vpop.f32.mrf.mxu0
      %v2727 = vadd.f32 0.0, %v2726
      %v2728 = vpop.f32.mrf.mxu0
      %2729 = vmatprep.mubr.bf16.mxu0 0
      %2730 = vmatmul.mubr.bf16.gmra.mxu0 %v2399
      %v2731 = vpop.f32.mrf.mxu0
      %v2732 = vadd.f32 0.0, %v2731
      %v2733 = vpop.f32.mrf.mxu0
      %v2734 = vpop.f32.mrf.mxu0
      %v2735 = vadd.f32 0.0, %v2734
      %v2736 = vpop.f32.mrf.mxu0
      %2737 = vmatprep.mubr.bf16.mxu0 0
      %2738 = vmatmul.mubr.bf16.gmra.mxu0 %v2401
      %v2739 = vpop.f32.mrf.mxu0
      %v2740 = vadd.f32 0.0, %v2739
      %v2741 = vpop.f32.mrf.mxu0
      %v2742 = vpop.f32.mrf.mxu0
      %v2743 = vadd.f32 0.0, %v2742
      %v2744 = vpop.f32.mrf.mxu0
      %2745 = vmatprep.mubr.bf16.mxu0 0
      %2746 = vmatmul.mubr.bf16.gmra.mxu0 %v2403
      %v2747 = vpop.f32.mrf.mxu0
      %v2748 = vadd.f32 0.0, %v2747
      %v2749 = vpop.f32.mrf.mxu0
      %v2750 = vpop.f32.mrf.mxu0
      %v2751 = vadd.f32 0.0, %v2750
      %v2752 = vpop.f32.mrf.mxu0
      %2753 = vmatprep.mubr.bf16.mxu0 0
      %2754 = vmatmul.mubr.bf16.gmra.mxu0 %v2405
      %v2755 = vpop.f32.mrf.mxu0
      %v2756 = vadd.f32 0.0, %v2755
      %v2757 = vpop.f32.mrf.mxu0
      %v2758 = vpop.f32.mrf.mxu0
      %v2759 = vadd.f32 0.0, %v2758
      %v2760 = vpop.f32.mrf.mxu0
      %2761 = vmatprep.mubr.bf16.mxu0 0
      %2762 = vmatmul.mubr.bf16.gmra.mxu0 %v2407
      %v2763 = vpop.f32.mrf.mxu0
      %v2764 = vadd.f32 0.0, %v2763
      %v2765 = vpop.f32.mrf.mxu0
      %v2766 = vpop.f32.mrf.mxu0
      %v2767 = vadd.f32 0.0, %v2766
      %v2768 = vpop.f32.mrf.mxu0
      %2769 = vmatprep.mubr.bf16.mxu0 0
      %2770 = vmatmul.mubr.bf16.gmra.mxu0 %v2409
      %v2771 = vpop.f32.mrf.mxu0
      %v2772 = vadd.f32 0.0, %v2771
      %v2773 = vpop.f32.mrf.mxu0
      %v2774 = vpop.f32.mrf.mxu0
      %v2775 = vadd.f32 0.0, %v2774
      %v2776 = vpop.f32.mrf.mxu0
      %2777 = vmatprep.mubr.bf16.mxu0 0
      %2778 = vmatmul.mubr.bf16.gmra.mxu0 %v2668
      %v2779 = vpop.f32.mrf.mxu0
      %v2780 = vadd.f32 0.0, %v2779
      %v2781 = vpop.f32.mrf.mxu0
      %v2782 = vpop.f32.mrf.mxu0
      %v2783 = vadd.f32 0.0, %v2782
      %v2784 = vpop.f32.mrf.mxu0
      %2785 = vdwg.mxu0
      %v2786 = vadd.f32 %v2577, %v2708
      %v2787 = vadd.f32 %v2580, %v2711
      %v2788 = vadd.f32 %v2585, %v2716
      %v2789 = vadd.f32 %v2588, %v2719
      %v2790 = vadd.f32 %v2593, %v2724
      %v2791 = vadd.f32 %v2596, %v2727
      %v2792 = vadd.f32 %v2601, %v2732
      %v2793 = vadd.f32 %v2604, %v2735
      %v2794 = vadd.f32 %v2609, %v2740
      %v2795 = vadd.f32 %v2612, %v2743
      %v2796 = vadd.f32 %v2617, %v2748
      %v2797 = vadd.f32 %v2620, %v2751
      %v2798 = vadd.f32 %v2625, %v2756
      %v2799 = vadd.f32 %v2628, %v2759
      %v2800 = vadd.f32 %v2633, %v2764
      %v2801 = vadd.f32 %v2636, %v2767
      %v2802 = vadd.f32 %v2641, %v2772
      %v2803 = vadd.f32 %v2644, %v2775
      %v2804 = vadd.f32 %v2649, %v2780
      %v2805 = vadd.f32 %v2652, %v2783
      %v2806 = vld [vmem:[%s9] sm:$0x1]
      %v2808 = vlaneseq
      %v2809 = vshrl.u32 %v2808, 7
      %v2810 = vsub.s32 0, %v2809
      %v2811 = vrot.slane %v2806, %v2810
      %v2813 = vadd.f32 %v2786, %v2811
      %v2814 = vadd.f32 %v2787, %v2811
      %v2815 = vadd.f32 %v2788, %v2811
      %v2816 = vadd.f32 %v2789, %v2811
      %v2817 = vadd.f32 %v2790, %v2811
      %v2818 = vadd.f32 %v2791, %v2811
      %v2819 = vadd.f32 %v2792, %v2811
      %v2820 = vadd.f32 %v2793, %v2811
      %v2821 = vadd.f32 %v2794, %v2811
      %v2822 = vadd.f32 %v2795, %v2811
      %v2823 = vadd.f32 %v2796, %v2811
      %v2824 = vadd.f32 %v2797, %v2811
      %v2825 = vadd.f32 %v2798, %v2811
      %v2826 = vadd.f32 %v2799, %v2811
      %v2827 = vadd.f32 %v2800, %v2811
      %v2828 = vadd.f32 %v2801, %v2811
      %v2829 = vadd.f32 %v2802, %v2811
      %v2830 = vadd.f32 %v2803, %v2811
      %v2831 = vadd.f32 %v2804, %v2811
      %v2832 = vadd.f32 %v2805, %v2811
      %v2833 = vld [vmem:[%s12] sm:$0x1]
      %2835 = vset.pattern.permute.xlu0 0
      %2836 = vperm.xlu0 %2835, %v953
      %v2837 = vpop.permute.xlu0 %2836
      %2840 = vset.pattern.permute.xlu0 0
      %2841 = vperm.xlu0 %2840, %v954
      %v2842 = vpop.permute.xlu0 %2841
      %2845 = vset.pattern.permute.xlu0 0
      %2846 = vperm.xlu0 %2845, %v957
      %v2847 = vpop.permute.xlu0 %2846
      %2850 = vset.pattern.permute.xlu0 0
      %2851 = vperm.xlu0 %2850, %v958
      %v2852 = vpop.permute.xlu0 %2851
      %2855 = vset.pattern.permute.xlu0 0
      %2856 = vperm.xlu0 %2855, %v959
      %v2857 = vpop.permute.xlu0 %2856
      %2860 = vset.pattern.permute.xlu0 0
      %2861 = vperm.xlu0 %2860, %v960
      %v2862 = vpop.permute.xlu0 %2861
      %2865 = vset.pattern.permute.xlu0 0
      %2866 = vperm.xlu0 %2865, %v961
      %v2867 = vpop.permute.xlu0 %2866
      %2870 = vset.pattern.permute.xlu0 0
      %2871 = vperm.xlu0 %2870, %v962
      %v2872 = vpop.permute.xlu0 %2871
      %2875 = vset.pattern.permute.xlu0 0
      %2876 = vperm.xlu0 %2875, %v963
      %v2877 = vpop.permute.xlu0 %2876
      %2880 = vset.pattern.permute.xlu0 0
      %2881 = vperm.xlu0 %2880, %v964
      %v2882 = vpop.permute.xlu0 %2881
      %2885 = vset.pattern.permute.xlu0 0
      %2886 = vperm.xlu0 %2885, %v965
      %v2887 = vpop.permute.xlu0 %2886
      %2890 = vset.pattern.permute.xlu0 0
      %2891 = vperm.xlu0 %2890, %v966
      %v2892 = vpop.permute.xlu0 %2891
      %2895 = vset.pattern.permute.xlu0 0
      %2896 = vperm.xlu0 %2895, %v967
      %v2897 = vpop.permute.xlu0 %2896
      %2900 = vset.pattern.permute.xlu0 0
      %2901 = vperm.xlu0 %2900, %v968
      %v2902 = vpop.permute.xlu0 %2901
      %2905 = vset.pattern.permute.xlu0 0
      %2906 = vperm.xlu0 %2905, %v969
      %v2907 = vpop.permute.xlu0 %2906
      %2910 = vset.pattern.permute.xlu0 0
      %2911 = vperm.xlu0 %2910, %v970
      %v2912 = vpop.permute.xlu0 %2911
      %2915 = vset.pattern.permute.xlu0 0
      %2916 = vperm.xlu0 %2915, %v971
      %v2917 = vpop.permute.xlu0 %2916
      %2920 = vset.pattern.permute.xlu0 0
      %2921 = vperm.xlu0 %2920, %v972
      %v2922 = vpop.permute.xlu0 %2921
      %2925 = vset.pattern.permute.xlu0 0
      %2926 = vperm.xlu0 %2925, %v955
      %v2927 = vpop.permute.xlu0 %2926
      %2930 = vset.pattern.permute.xlu0 0
      %2931 = vperm.xlu0 %2930, %v956
      %v2932 = vpop.permute.xlu0 %2931
      %v2935 = vlaneseq
      %v2936 = vshrl.u32 %v2935, 7
      %v2937 = vsub.s32 0, %v2936
      %v2938 = vrot.slane %v2833, %v2937
      %v2940 = vmul.f32 %v2837, %v2938
      %v2941 = vmul.f32 %v2842, %v2938
      %v2942 = vmul.f32 %v2847, %v2938
      %v2943 = vmul.f32 %v2852, %v2938
      %v2944 = vmul.f32 %v2857, %v2938
      %v2945 = vmul.f32 %v2862, %v2938
      %v2946 = vmul.f32 %v2867, %v2938
      %v2947 = vmul.f32 %v2872, %v2938
      %v2948 = vmul.f32 %v2877, %v2938
      %v2949 = vmul.f32 %v2882, %v2938
      %v2950 = vmul.f32 %v2887, %v2938
      %v2951 = vmul.f32 %v2892, %v2938
      %v2952 = vmul.f32 %v2897, %v2938
      %v2953 = vmul.f32 %v2902, %v2938
      %v2954 = vmul.f32 %v2907, %v2938
      %v2955 = vmul.f32 %v2912, %v2938
      %v2956 = vmul.f32 %v2917, %v2938
      %v2957 = vmul.f32 %v2922, %v2938
      %v2958 = vmul.f32 %v2927, %v2938
      %v2959 = vmul.f32 %v2932, %v2938
      %v2960 = vld [vmem:[%s13] sm:$0x1]
      %v2962 = vlaneseq
      %v2963 = vshrl.u32 %v2962, 7
      %v2964 = vsub.s32 0, %v2963
      %v2965 = vrot.slane %v2960, %v2964
      %v2967 = vadd.f32 %v2940, %v2965
      %v2968 = vadd.f32 %v2941, %v2965
      %v2969 = vadd.f32 %v2942, %v2965
      %v2970 = vadd.f32 %v2943, %v2965
      %v2971 = vadd.f32 %v2944, %v2965
      %v2972 = vadd.f32 %v2945, %v2965
      %v2973 = vadd.f32 %v2946, %v2965
      %v2974 = vadd.f32 %v2947, %v2965
      %v2975 = vadd.f32 %v2948, %v2965
      %v2976 = vadd.f32 %v2949, %v2965
      %v2977 = vadd.f32 %v2950, %v2965
      %v2978 = vadd.f32 %v2951, %v2965
      %v2979 = vadd.f32 %v2952, %v2965
      %v2980 = vadd.f32 %v2953, %v2965
      %v2981 = vadd.f32 %v2954, %v2965
      %v2982 = vadd.f32 %v2955, %v2965
      %v2983 = vadd.f32 %v2956, %v2965
      %v2984 = vadd.f32 %v2957, %v2965
      %v2985 = vadd.f32 %v2958, %v2965
      %v2986 = vadd.f32 %v2959, %v2965
      %v2987 = vsub.f32 0.0, %v2967
      %v2988 = vsub.f32 0.0, %v2968
      %v2989 = vsub.f32 0.0, %v2969
      %v2990 = vsub.f32 0.0, %v2970
      %v2991 = vsub.f32 0.0, %v2971
      %v2992 = vsub.f32 0.0, %v2972
      %v2993 = vsub.f32 0.0, %v2973
      %v2994 = vsub.f32 0.0, %v2974
      %v2995 = vsub.f32 0.0, %v2975
      %v2996 = vsub.f32 0.0, %v2976
      %v2997 = vsub.f32 0.0, %v2977
      %v2998 = vsub.f32 0.0, %v2978
      %v2999 = vsub.f32 0.0, %v2979
      %v3000 = vsub.f32 0.0, %v2980
      %v3001 = vsub.f32 0.0, %v2981
      %v3002 = vsub.f32 0.0, %v2982
      %v3003 = vsub.f32 0.0, %v2983
      %v3004 = vsub.f32 0.0, %v2984
      %v3005 = vsub.f32 0.0, %v2985
      %v3006 = vsub.f32 0.0, %v2986
      %v3007 = vmul.f32 %v2987, 1.442695
      %v3008 = vpow.pop %v3007
      %v3009 = vmul.f32 %v2988, 1.442695
      %v3010 = vpow.pop %v3009
      %v3011 = vmul.f32 %v2989, 1.442695
      %v3012 = vpow.pop %v3011
      %v3013 = vmul.f32 %v2990, 1.442695
      %v3014 = vpow.pop %v3013
      %v3015 = vmul.f32 %v2991, 1.442695
      %v3016 = vpow.pop %v3015
      %v3017 = vmul.f32 %v2992, 1.442695
      %v3018 = vpow.pop %v3017
      %v3019 = vmul.f32 %v2993, 1.442695
      %v3020 = vpow.pop %v3019
      %v3021 = vmul.f32 %v2994, 1.442695
      %v3022 = vpow.pop %v3021
      %v3023 = vmul.f32 %v2995, 1.442695
      %v3024 = vpow.pop %v3023
      %v3025 = vmul.f32 %v2996, 1.442695
      %v3026 = vpow.pop %v3025
      %v3027 = vmul.f32 %v2997, 1.442695
      %v3028 = vpow.pop %v3027
      %v3029 = vmul.f32 %v2998, 1.442695
      %v3030 = vpow.pop %v3029
      %v3031 = vmul.f32 %v2999, 1.442695
      %v3032 = vpow.pop %v3031
      %v3033 = vmul.f32 %v3000, 1.442695
      %v3034 = vpow.pop %v3033
      %v3035 = vmul.f32 %v3001, 1.442695
      %v3036 = vpow.pop %v3035
      %v3037 = vmul.f32 %v3002, 1.442695
      %v3038 = vpow.pop %v3037
      %v3039 = vmul.f32 %v3003, 1.442695
      %v3040 = vpow.pop %v3039
      %v3041 = vmul.f32 %v3004, 1.442695
      %v3042 = vpow.pop %v3041
      %v3043 = vmul.f32 %v3005, 1.442695
      %v3044 = vpow.pop %v3043
      %v3045 = vmul.f32 %v3006, 1.442695
      %v3046 = vpow.pop %v3045
      %v3047 = vadd.f32 %v3008, 1.0
      %v3048 = vadd.f32 %v3010, 1.0
      %v3049 = vadd.f32 %v3012, 1.0
      %v3050 = vadd.f32 %v3014, 1.0
      %v3051 = vadd.f32 %v3016, 1.0
      %v3052 = vadd.f32 %v3018, 1.0
      %v3053 = vadd.f32 %v3020, 1.0
      %v3054 = vadd.f32 %v3022, 1.0
      %v3055 = vadd.f32 %v3024, 1.0
      %v3056 = vadd.f32 %v3026, 1.0
      %v3057 = vadd.f32 %v3028, 1.0
      %v3058 = vadd.f32 %v3030, 1.0
      %v3059 = vadd.f32 %v3032, 1.0
      %v3060 = vadd.f32 %v3034, 1.0
      %v3061 = vadd.f32 %v3036, 1.0
      %v3062 = vadd.f32 %v3038, 1.0
      %v3063 = vadd.f32 %v3040, 1.0
      %v3064 = vadd.f32 %v3042, 1.0
      %v3065 = vadd.f32 %v3044, 1.0
      %v3066 = vadd.f32 %v3046, 1.0
      %v3067 = vrcp.pop %v3047
      %v3068 = vrcp.pop %v3048
      %v3069 = vrcp.pop %v3049
      %v3070 = vrcp.pop %v3050
      %v3071 = vrcp.pop %v3051
      %v3072 = vrcp.pop %v3052
      %v3073 = vrcp.pop %v3053
      %v3074 = vrcp.pop %v3054
      %v3075 = vrcp.pop %v3055
      %v3076 = vrcp.pop %v3056
      %v3077 = vrcp.pop %v3057
      %v3078 = vrcp.pop %v3058
      %v3079 = vrcp.pop %v3059
      %v3080 = vrcp.pop %v3060
      %v3081 = vrcp.pop %v3061
      %v3082 = vrcp.pop %v3062
      %v3083 = vrcp.pop %v3063
      %v3084 = vrcp.pop %v3064
      %v3085 = vrcp.pop %v3065
      %v3086 = vrcp.pop %v3066
      %v3087 = vmul.f32 %v2967, %v3067
      %v3088 = vmul.f32 %v2968, %v3068
      %v3089 = vmul.f32 %v2969, %v3069
      %v3090 = vmul.f32 %v2970, %v3070
      %v3091 = vmul.f32 %v2971, %v3071
      %v3092 = vmul.f32 %v2972, %v3072
      %v3093 = vmul.f32 %v2973, %v3073
      %v3094 = vmul.f32 %v2974, %v3074
      %v3095 = vmul.f32 %v2975, %v3075
      %v3096 = vmul.f32 %v2976, %v3076
      %v3097 = vmul.f32 %v2977, %v3077
      %v3098 = vmul.f32 %v2978, %v3078
      %v3099 = vmul.f32 %v2979, %v3079
      %v3100 = vmul.f32 %v2980, %v3080
      %v3101 = vmul.f32 %v2981, %v3081
      %v3102 = vmul.f32 %v2982, %v3082
      %v3103 = vmul.f32 %v2983, %v3083
      %v3104 = vmul.f32 %v2984, %v3084
      %v3105 = vmul.f32 %v2985, %v3085
      %v3106 = vmul.f32 %v2986, %v3086
      %v3107 = vpack.c.bf16 %v3088, %v3087
      %v3108 = vpack.c.bf16 %v3090, %v3089
      %v3109 = vpack.c.bf16 %v3092, %v3091
      %v3110 = vpack.c.bf16 %v3094, %v3093
      %v3111 = vpack.c.bf16 %v3096, %v3095
      %v3112 = vpack.c.bf16 %v3098, %v3097
      %v3113 = vpack.c.bf16 %v3100, %v3099
      %v3114 = vpack.c.bf16 %v3102, %v3101
      %v3115 = vpack.c.bf16 %v3104, %v3103
      %v3116 = vpack.c.bf16 %v3106, %v3105
      %v3117 = vld [vmem:[%s14] sm:$0xf]
      %v3118 = vld [vmem:[%s15] sm:$0x1]
      %v3120 = vlaneseq
      %v3121 = vshrl.u32 %v3120, 7
      %v3122 = vsub.s32 0, %v3121
      %v3123 = vrot.slane %v3118, %v3122
      %v3126 = vsel %vm2312, %v3107, 0
      %v3129 = vsel %vm2312, %v3108, 0
      %v3132 = vsel %vm2312, %v3109, 0
      %v3135 = vsel %vm2312, %v3110, 0
      %v3138 = vsel %vm2312, %v3111, 0
      %v3141 = vsel %vm2312, %v3112, 0
      %v3144 = vsel %vm2312, %v3113, 0
      %v3147 = vsel %vm2312, %v3114, 0
      %v3150 = vsel %vm2312, %v3115, 0
      %v3153 = vsel %vm2312, %v3116, 0
      %v3156 = vsel %vm2411, %v3117, 0
      %3158 = vmatprep.subr.bf16.mxu0 0
      %3159 = vmatpush1.bf16.msra.mxu0 0
      %3160 = vmatprep.subr.bf16.mxu0 0
      %3161 = vmatpush1.bf16.msra.mxu0 0
      %3162 = vmatprep.subr.bf16.mxu0 0
      %3163 = vmatpush1.bf16.msra.mxu0 0
      %3164 = vmatprep.subr.bf16.mxu0 0
      %3165 = vmatpush1.bf16.msra.mxu0 0
      %3166 = vmatprep.subr.bf16.mxu0 0
      %3167 = vmatpush1.bf16.msra.mxu0 0
      %3168 = vmatprep.subr.bf16.mxu0 0
      %3169 = vmatpush1.bf16.msra.mxu0 0
      %3170 = vmatprep.subr.bf16.mxu0 0
      %3171 = vmatpush1.bf16.msra.mxu0 0
      %3172 = vmatprep.subr.bf16.mxu0 0
      %3173 = vmatpush1.bf16.msra.mxu0 %v3156
      %3174 = vmatprep.subr.bf16.mxu0 0
      %3175 = vmatpush2.bf16.msra.mxu0 0
      %3176 = vmatprep.subr.bf16.mxu0 0
      %3177 = vmatpush2.bf16.msra.mxu0 0
      %3178 = vmatprep.subr.bf16.mxu0 0
      %3179 = vmatpush2.bf16.msra.mxu0 0
      %3180 = vmatprep.subr.bf16.mxu0 0
      %3181 = vmatpush2.bf16.msra.mxu0 0
      %3182 = vmatprep.subr.bf16.mxu0 0
      %3183 = vmatpush2.bf16.msra.mxu0 0
      %3184 = vmatprep.subr.bf16.mxu0 0
      %3185 = vmatpush2.bf16.msra.mxu0 0
      %3186 = vmatprep.subr.bf16.mxu0 0
      %3187 = vmatpush2.bf16.msra.mxu0 0
      %3188 = vmatprep.subr.bf16.mxu0 0
      %3189 = vmatpush2.bf16.msra.mxu0 0
      %3190 = vmatprep.mubr.bf16.mxu0 0
      %3191 = vmatmul.mubr.bf16.gmra.mxu0 %v3126
      %v3192 = vpop.f32.mrf.mxu0
      %v3193 = vadd.f32 %v3123, %v3192
      %v3194 = vpop.f32.mrf.mxu0
      %v3195 = vpop.f32.mrf.mxu0
      %v3196 = vadd.f32 %v3123, %v3195
      %v3197 = vpop.f32.mrf.mxu0
      %3198 = vmatprep.mubr.bf16.mxu0 0
      %3199 = vmatmul.mubr.bf16.gmra.mxu0 %v3129
      %v3200 = vpop.f32.mrf.mxu0
      %v3201 = vadd.f32 %v3123, %v3200
      %v3202 = vpop.f32.mrf.mxu0
      %v3203 = vpop.f32.mrf.mxu0
      %v3204 = vadd.f32 %v3123, %v3203
      %v3205 = vpop.f32.mrf.mxu0
      %3206 = vmatprep.mubr.bf16.mxu0 0
      %3207 = vmatmul.mubr.bf16.gmra.mxu0 %v3132
      %v3208 = vpop.f32.mrf.mxu0
      %v3209 = vadd.f32 %v3123, %v3208
      %v3210 = vpop.f32.mrf.mxu0
      %v3211 = vpop.f32.mrf.mxu0
      %v3212 = vadd.f32 %v3123, %v3211
      %v3213 = vpop.f32.mrf.mxu0
      %3214 = vmatprep.mubr.bf16.mxu0 0
      %3215 = vmatmul.mubr.bf16.gmra.mxu0 %v3135
      %v3216 = vpop.f32.mrf.mxu0
      %v3217 = vadd.f32 %v3123, %v3216
      %v3218 = vpop.f32.mrf.mxu0
      %v3219 = vpop.f32.mrf.mxu0
      %v3220 = vadd.f32 %v3123, %v3219
      %v3221 = vpop.f32.mrf.mxu0
      %3222 = vmatprep.mubr.bf16.mxu0 0
      %3223 = vmatmul.mubr.bf16.gmra.mxu0 %v3138
      %v3224 = vpop.f32.mrf.mxu0
      %v3225 = vadd.f32 %v3123, %v3224
      %v3226 = vpop.f32.mrf.mxu0
      %v3227 = vpop.f32.mrf.mxu0
      %v3228 = vadd.f32 %v3123, %v3227
      %v3229 = vpop.f32.mrf.mxu0
      %3230 = vmatprep.mubr.bf16.mxu0 0
      %3231 = vmatmul.mubr.bf16.gmra.mxu0 %v3141
      %v3232 = vpop.f32.mrf.mxu0
      %v3233 = vadd.f32 %v3123, %v3232
      %v3234 = vpop.f32.mrf.mxu0
      %v3235 = vpop.f32.mrf.mxu0
      %v3236 = vadd.f32 %v3123, %v3235
      %v3237 = vpop.f32.mrf.mxu0
      %3238 = vmatprep.mubr.bf16.mxu0 0
      %3239 = vmatmul.mubr.bf16.gmra.mxu0 %v3144
      %v3240 = vpop.f32.mrf.mxu0
      %v3241 = vadd.f32 %v3123, %v3240
      %v3242 = vpop.f32.mrf.mxu0
      %v3243 = vpop.f32.mrf.mxu0
      %v3244 = vadd.f32 %v3123, %v3243
      %v3245 = vpop.f32.mrf.mxu0
      %3246 = vmatprep.mubr.bf16.mxu0 0
      %3247 = vmatmul.mubr.bf16.gmra.mxu0 %v3147
      %v3248 = vpop.f32.mrf.mxu0
      %v3249 = vadd.f32 %v3123, %v3248
      %v3250 = vpop.f32.mrf.mxu0
      %v3251 = vpop.f32.mrf.mxu0
      %v3252 = vadd.f32 %v3123, %v3251
      %v3253 = vpop.f32.mrf.mxu0
      %3254 = vmatprep.mubr.bf16.mxu0 0
      %3255 = vmatmul.mubr.bf16.gmra.mxu0 %v3150
      %v3256 = vpop.f32.mrf.mxu0
      %v3257 = vadd.f32 %v3123, %v3256
      %v3258 = vpop.f32.mrf.mxu0
      %v3259 = vpop.f32.mrf.mxu0
      %v3260 = vadd.f32 %v3123, %v3259
      %v3261 = vpop.f32.mrf.mxu0
      %3262 = vmatprep.mubr.bf16.mxu0 0
      %3263 = vmatmul.mubr.bf16.gmra.mxu0 %v3153
      %v3264 = vpop.f32.mrf.mxu0
      %v3265 = vadd.f32 %v3123, %v3264
      %v3266 = vpop.f32.mrf.mxu0
      %v3267 = vpop.f32.mrf.mxu0
      %v3268 = vadd.f32 %v3123, %v3267
      %v3269 = vpop.f32.mrf.mxu0
      %3270 = vdwg.mxu0
      %v3271 = vsub.f32 0.0, %v3193
      %v3272 = vsub.f32 0.0, %v3196
      %v3273 = vsub.f32 0.0, %v3201
      %v3274 = vsub.f32 0.0, %v3204
      %v3275 = vsub.f32 0.0, %v3209
      %v3276 = vsub.f32 0.0, %v3212
      %v3277 = vsub.f32 0.0, %v3217
      %v3278 = vsub.f32 0.0, %v3220
      %v3279 = vsub.f32 0.0, %v3225
      %v3280 = vsub.f32 0.0, %v3228
      %v3281 = vsub.f32 0.0, %v3233
      %v3282 = vsub.f32 0.0, %v3236
      %v3283 = vsub.f32 0.0, %v3241
      %v3284 = vsub.f32 0.0, %v3244
      %v3285 = vsub.f32 0.0, %v3249
      %v3286 = vsub.f32 0.0, %v3252
      %v3287 = vsub.f32 0.0, %v3257
      %v3288 = vsub.f32 0.0, %v3260
      %v3289 = vsub.f32 0.0, %v3265
      %v3290 = vsub.f32 0.0, %v3268
      %v3291 = vmul.f32 %v3271, 1.442695
      %v3292 = vpow.pop %v3291
      %v3293 = vmul.f32 %v3272, 1.442695
      %v3294 = vpow.pop %v3293
      %v3295 = vmul.f32 %v3273, 1.442695
      %v3296 = vpow.pop %v3295
      %v3297 = vmul.f32 %v3274, 1.442695
      %v3298 = vpow.pop %v3297
      %v3299 = vmul.f32 %v3275, 1.442695
      %v3300 = vpow.pop %v3299
      %v3301 = vmul.f32 %v3276, 1.442695
      %v3302 = vpow.pop %v3301
      %v3303 = vmul.f32 %v3277, 1.442695
      %v3304 = vpow.pop %v3303
      %v3305 = vmul.f32 %v3278, 1.442695
      %v3306 = vpow.pop %v3305
      %v3307 = vmul.f32 %v3279, 1.442695
      %v3308 = vpow.pop %v3307
      %v3309 = vmul.f32 %v3280, 1.442695
      %v3310 = vpow.pop %v3309
      %v3311 = vmul.f32 %v3281, 1.442695
      %v3312 = vpow.pop %v3311
      %v3313 = vmul.f32 %v3282, 1.442695
      %v3314 = vpow.pop %v3313
      %v3315 = vmul.f32 %v3283, 1.442695
      %v3316 = vpow.pop %v3315
      %v3317 = vmul.f32 %v3284, 1.442695
      %v3318 = vpow.pop %v3317
      %v3319 = vmul.f32 %v3285, 1.442695
      %v3320 = vpow.pop %v3319
      %v3321 = vmul.f32 %v3286, 1.442695
      %v3322 = vpow.pop %v3321
      %v3323 = vmul.f32 %v3287, 1.442695
      %v3324 = vpow.pop %v3323
      %v3325 = vmul.f32 %v3288, 1.442695
      %v3326 = vpow.pop %v3325
      %v3327 = vmul.f32 %v3289, 1.442695
      %v3328 = vpow.pop %v3327
      %v3329 = vmul.f32 %v3290, 1.442695
      %v3330 = vpow.pop %v3329
      %v3331 = vadd.f32 %v3292, 1.0
      %v3332 = vadd.f32 %v3294, 1.0
      %v3333 = vadd.f32 %v3296, 1.0
      %v3334 = vadd.f32 %v3298, 1.0
      %v3335 = vadd.f32 %v3300, 1.0
      %v3336 = vadd.f32 %v3302, 1.0
      %v3337 = vadd.f32 %v3304, 1.0
      %v3338 = vadd.f32 %v3306, 1.0
      %v3339 = vadd.f32 %v3308, 1.0
      %v3340 = vadd.f32 %v3310, 1.0
      %v3341 = vadd.f32 %v3312, 1.0
      %v3342 = vadd.f32 %v3314, 1.0
      %v3343 = vadd.f32 %v3316, 1.0
      %v3344 = vadd.f32 %v3318, 1.0
      %v3345 = vadd.f32 %v3320, 1.0
      %v3346 = vadd.f32 %v3322, 1.0
      %v3347 = vadd.f32 %v3324, 1.0
      %v3348 = vadd.f32 %v3326, 1.0
      %v3349 = vadd.f32 %v3328, 1.0
      %v3350 = vadd.f32 %v3330, 1.0
      %v3351 = vrcp.pop %v3331
      %v3352 = vrcp.pop %v3332
      %v3353 = vrcp.pop %v3333
      %v3354 = vrcp.pop %v3334
      %v3355 = vrcp.pop %v3335
      %v3356 = vrcp.pop %v3336
      %v3357 = vrcp.pop %v3337
      %v3358 = vrcp.pop %v3338
      %v3359 = vrcp.pop %v3339
      %v3360 = vrcp.pop %v3340
      %v3361 = vrcp.pop %v3341
      %v3362 = vrcp.pop %v3342
      %v3363 = vrcp.pop %v3343
      %v3364 = vrcp.pop %v3344
      %v3365 = vrcp.pop %v3345
      %v3366 = vrcp.pop %v3346
      %v3367 = vrcp.pop %v3347
      %v3368 = vrcp.pop %v3348
      %v3369 = vrcp.pop %v3349
      %v3370 = vrcp.pop %v3350
      %v3371 = vmul.f32 %v3193, %v3351
      %v3372 = vmul.f32 %v3196, %v3352
      %v3373 = vmul.f32 %v3201, %v3353
      %v3374 = vmul.f32 %v3204, %v3354
      %v3375 = vmul.f32 %v3209, %v3355
      %v3376 = vmul.f32 %v3212, %v3356
      %v3377 = vmul.f32 %v3217, %v3357
      %v3378 = vmul.f32 %v3220, %v3358
      %v3379 = vmul.f32 %v3225, %v3359
      %v3380 = vmul.f32 %v3228, %v3360
      %v3381 = vmul.f32 %v3233, %v3361
      %v3382 = vmul.f32 %v3236, %v3362
      %v3383 = vmul.f32 %v3241, %v3363
      %v3384 = vmul.f32 %v3244, %v3364
      %v3385 = vmul.f32 %v3249, %v3365
      %v3386 = vmul.f32 %v3252, %v3366
      %v3387 = vmul.f32 %v3257, %v3367
      %v3388 = vmul.f32 %v3260, %v3368
      %v3389 = vmul.f32 %v3265, %v3369
      %v3390 = vmul.f32 %v3268, %v3370
      %v3391 = vpack.c.bf16 %v3372, %v3371
      %v3392 = vpack.c.bf16 %v3374, %v3373
      %v3393 = vpack.c.bf16 %v3376, %v3375
      %v3394 = vpack.c.bf16 %v3378, %v3377
      %v3395 = vpack.c.bf16 %v3380, %v3379
      %v3396 = vpack.c.bf16 %v3382, %v3381
      %v3397 = vpack.c.bf16 %v3384, %v3383
      %v3398 = vpack.c.bf16 %v3386, %v3385
      %v3399 = vpack.c.bf16 %v3388, %v3387
      %v3400 = vpack.c.bf16 %v3390, %v3389
      %v3401 = vld [vmem:[%s16] sm:$0xf]
      %v3402 = vld [vmem:[%s17] sm:$0x1]
      %v3404 = vlaneseq
      %v3405 = vshrl.u32 %v3404, 7
      %v3406 = vsub.s32 0, %v3405
      %v3407 = vrot.slane %v3402, %v3406
      %v3410 = vsel %vm2312, %v3391, 0
      %v3413 = vsel %vm2312, %v3392, 0
      %v3416 = vsel %vm2312, %v3393, 0
      %v3419 = vsel %vm2312, %v3394, 0
      %v3422 = vsel %vm2312, %v3395, 0
      %v3425 = vsel %vm2312, %v3396, 0
      %v3428 = vsel %vm2312, %v3397, 0
      %v3431 = vsel %vm2312, %v3398, 0
      %v3434 = vsel %vm2312, %v3399, 0
      %v3437 = vsel %vm2312, %v3400, 0
      %v3440 = vsel %vm2411, %v3401, 0
      %3442 = vmatprep.subr.bf16.mxu0 0
      %3443 = vmatpush1.bf16.msra.mxu0 0
      %3444 = vmatprep.subr.bf16.mxu0 0
      %3445 = vmatpush1.bf16.msra.mxu0 0
      %3446 = vmatprep.subr.bf16.mxu0 0
      %3447 = vmatpush1.bf16.msra.mxu0 0
      %3448 = vmatprep.subr.bf16.mxu0 0
      %3449 = vmatpush1.bf16.msra.mxu0 0
      %3450 = vmatprep.subr.bf16.mxu0 0
      %3451 = vmatpush1.bf16.msra.mxu0 0
      %3452 = vmatprep.subr.bf16.mxu0 0
      %3453 = vmatpush1.bf16.msra.mxu0 0
      %3454 = vmatprep.subr.bf16.mxu0 0
      %3455 = vmatpush1.bf16.msra.mxu0 0
      %3456 = vmatprep.subr.bf16.mxu0 0
      %3457 = vmatpush1.bf16.msra.mxu0 %v3440
      %3458 = vmatprep.subr.bf16.mxu0 0
      %3459 = vmatpush2.bf16.msra.mxu0 0
      %3460 = vmatprep.subr.bf16.mxu0 0
      %3461 = vmatpush2.bf16.msra.mxu0 0
      %3462 = vmatprep.subr.bf16.mxu0 0
      %3463 = vmatpush2.bf16.msra.mxu0 0
      %3464 = vmatprep.subr.bf16.mxu0 0
      %3465 = vmatpush2.bf16.msra.mxu0 0
      %3466 = vmatprep.subr.bf16.mxu0 0
      %3467 = vmatpush2.bf16.msra.mxu0 0
      %3468 = vmatprep.subr.bf16.mxu0 0
      %3469 = vmatpush2.bf16.msra.mxu0 0
      %3470 = vmatprep.subr.bf16.mxu0 0
      %3471 = vmatpush2.bf16.msra.mxu0 0
      %3472 = vmatprep.subr.bf16.mxu0 0
      %3473 = vmatpush2.bf16.msra.mxu0 0
      %3474 = vmatprep.mubr.bf16.mxu0 0
      %3475 = vmatmul.mubr.bf16.gmra.mxu0 %v3410
      %v3476 = vpop.f32.mrf.mxu0
      %v3477 = vadd.f32 %v3407, %v3476
      %v3478 = vpop.f32.mrf.mxu0
      %v3479 = vpop.f32.mrf.mxu0
      %v3480 = vadd.f32 %v3407, %v3479
      %v3481 = vpop.f32.mrf.mxu0
      %3482 = vmatprep.mubr.bf16.mxu0 0
      %3483 = vmatmul.mubr.bf16.gmra.mxu0 %v3413
      %v3484 = vpop.f32.mrf.mxu0
      %v3485 = vadd.f32 %v3407, %v3484
      %v3486 = vpop.f32.mrf.mxu0
      %v3487 = vpop.f32.mrf.mxu0
      %v3488 = vadd.f32 %v3407, %v3487
      %v3489 = vpop.f32.mrf.mxu0
      %3490 = vmatprep.mubr.bf16.mxu0 0
      %3491 = vmatmul.mubr.bf16.gmra.mxu0 %v3416
      %v3492 = vpop.f32.mrf.mxu0
      %v3493 = vadd.f32 %v3407, %v3492
      %v3494 = vpop.f32.mrf.mxu0
      %v3495 = vpop.f32.mrf.mxu0
      %v3496 = vadd.f32 %v3407, %v3495
      %v3497 = vpop.f32.mrf.mxu0
      %3498 = vmatprep.mubr.bf16.mxu0 0
      %3499 = vmatmul.mubr.bf16.gmra.mxu0 %v3419
      %v3500 = vpop.f32.mrf.mxu0
      %v3501 = vadd.f32 %v3407, %v3500
      %v3502 = vpop.f32.mrf.mxu0
      %v3503 = vpop.f32.mrf.mxu0
      %v3504 = vadd.f32 %v3407, %v3503
      %v3505 = vpop.f32.mrf.mxu0
      %3506 = vmatprep.mubr.bf16.mxu0 0
      %3507 = vmatmul.mubr.bf16.gmra.mxu0 %v3422
      %v3508 = vpop.f32.mrf.mxu0
      %v3509 = vadd.f32 %v3407, %v3508
      %v3510 = vpop.f32.mrf.mxu0
      %v3511 = vpop.f32.mrf.mxu0
      %v3512 = vadd.f32 %v3407, %v3511
      %v3513 = vpop.f32.mrf.mxu0
      %3514 = vmatprep.mubr.bf16.mxu0 0
      %3515 = vmatmul.mubr.bf16.gmra.mxu0 %v3425
      %v3516 = vpop.f32.mrf.mxu0
      %v3517 = vadd.f32 %v3407, %v3516
      %v3518 = vpop.f32.mrf.mxu0
      %v3519 = vpop.f32.mrf.mxu0
      %v3520 = vadd.f32 %v3407, %v3519
      %v3521 = vpop.f32.mrf.mxu0
      %3522 = vmatprep.mubr.bf16.mxu0 0
      %3523 = vmatmul.mubr.bf16.gmra.mxu0 %v3428
      %v3524 = vpop.f32.mrf.mxu0
      %v3525 = vadd.f32 %v3407, %v3524
      %v3526 = vpop.f32.mrf.mxu0
      %v3527 = vpop.f32.mrf.mxu0
      %v3528 = vadd.f32 %v3407, %v3527
      %v3529 = vpop.f32.mrf.mxu0
      %3530 = vmatprep.mubr.bf16.mxu0 0
      %3531 = vmatmul.mubr.bf16.gmra.mxu0 %v3431
      %v3532 = vpop.f32.mrf.mxu0
      %v3533 = vadd.f32 %v3407, %v3532
      %v3534 = vpop.f32.mrf.mxu0
      %v3535 = vpop.f32.mrf.mxu0
      %v3536 = vadd.f32 %v3407, %v3535
      %v3537 = vpop.f32.mrf.mxu0
      %3538 = vmatprep.mubr.bf16.mxu0 0
      %3539 = vmatmul.mubr.bf16.gmra.mxu0 %v3434
      %v3540 = vpop.f32.mrf.mxu0
      %v3541 = vadd.f32 %v3407, %v3540
      %v3542 = vpop.f32.mrf.mxu0
      %v3543 = vpop.f32.mrf.mxu0
      %v3544 = vadd.f32 %v3407, %v3543
      %v3545 = vpop.f32.mrf.mxu0
      %3546 = vmatprep.mubr.bf16.mxu0 0
      %3547 = vmatmul.mubr.bf16.gmra.mxu0 %v3437
      %v3548 = vpop.f32.mrf.mxu0
      %v3549 = vadd.f32 %v3407, %v3548
      %v3550 = vpop.f32.mrf.mxu0
      %v3551 = vpop.f32.mrf.mxu0
      %v3552 = vadd.f32 %v3407, %v3551
      %v3553 = vpop.f32.mrf.mxu0
      %3554 = vdwg.mxu0
      %v3555 = vmul.f32 %v2813, %v3193
      %v3556 = vmul.f32 %v2814, %v3196
      %v3557 = vmul.f32 %v2815, %v3201
      %v3558 = vmul.f32 %v2816, %v3204
      %v3559 = vmul.f32 %v2817, %v3209
      %v3560 = vmul.f32 %v2818, %v3212
      %v3561 = vmul.f32 %v2819, %v3217
      %v3562 = vmul.f32 %v2820, %v3220
      %v3563 = vmul.f32 %v2821, %v3225
      %v3564 = vmul.f32 %v2822, %v3228
      %v3565 = vmul.f32 %v2823, %v3233
      %v3566 = vmul.f32 %v2824, %v3236
      %v3567 = vmul.f32 %v2825, %v3241
      %v3568 = vmul.f32 %v2826, %v3244
      %v3569 = vmul.f32 %v2827, %v3249
      %v3570 = vmul.f32 %v2828, %v3252
      %v3571 = vmul.f32 %v2829, %v3257
      %v3572 = vmul.f32 %v2830, %v3260
      %v3573 = vmul.f32 %v2831, %v3265
      %v3574 = vmul.f32 %v2832, %v3268
      %v3575 = vadd.f32 %v3555, %v3477
      %v3576 = vadd.f32 %v3556, %v3480
      %v3577 = vadd.f32 %v3557, %v3485
      %v3578 = vadd.f32 %v3558, %v3488
      %v3579 = vadd.f32 %v3559, %v3493
      %v3580 = vadd.f32 %v3560, %v3496
      %v3581 = vadd.f32 %v3561, %v3501
      %v3582 = vadd.f32 %v3562, %v3504
      %v3583 = vadd.f32 %v3563, %v3509
      %v3584 = vadd.f32 %v3564, %v3512
      %v3585 = vadd.f32 %v3565, %v3517
      %v3586 = vadd.f32 %v3566, %v3520
      %v3587 = vadd.f32 %v3567, %v3525
      %v3588 = vadd.f32 %v3568, %v3528
      %v3589 = vadd.f32 %v3569, %v3533
      %v3590 = vadd.f32 %v3570, %v3536
      %v3591 = vadd.f32 %v3571, %v3541
      %v3592 = vadd.f32 %v3572, %v3544
      %v3593 = vadd.f32 %v3573, %v3549
      %v3594 = vadd.f32 %v3574, %v3552
      %v3595 = vsub.f32 0.0, %v3575
      %v3596 = vsub.f32 0.0, %v3576
      %v3597 = vsub.f32 0.0, %v3577
      %v3598 = vsub.f32 0.0, %v3578
      %v3599 = vsub.f32 0.0, %v3579
      %v3600 = vsub.f32 0.0, %v3580
      %v3601 = vsub.f32 0.0, %v3581
      %v3602 = vsub.f32 0.0, %v3582
      %v3603 = vsub.f32 0.0, %v3583
      %v3604 = vsub.f32 0.0, %v3584
      %v3605 = vsub.f32 0.0, %v3585
      %v3606 = vsub.f32 0.0, %v3586
      %v3607 = vsub.f32 0.0, %v3587
      %v3608 = vsub.f32 0.0, %v3588
      %v3609 = vsub.f32 0.0, %v3589
      %v3610 = vsub.f32 0.0, %v3590
      %v3611 = vsub.f32 0.0, %v3591
      %v3612 = vsub.f32 0.0, %v3592
      %v3613 = vsub.f32 0.0, %v3593
      %v3614 = vsub.f32 0.0, %v3594
      %v3615 = vmul.f32 %v3595, 1.442695
      %v3616 = vpow.pop %v3615
      %v3617 = vmul.f32 %v3596, 1.442695
      %v3618 = vpow.pop %v3617
      %v3619 = vmul.f32 %v3597, 1.442695
      %v3620 = vpow.pop %v3619
      %v3621 = vmul.f32 %v3598, 1.442695
      %v3622 = vpow.pop %v3621
      %v3623 = vmul.f32 %v3599, 1.442695
      %v3624 = vpow.pop %v3623
      %v3625 = vmul.f32 %v3600, 1.442695
      %v3626 = vpow.pop %v3625
      %v3627 = vmul.f32 %v3601, 1.442695
      %v3628 = vpow.pop %v3627
      %v3629 = vmul.f32 %v3602, 1.442695
      %v3630 = vpow.pop %v3629
      %v3631 = vmul.f32 %v3603, 1.442695
      %v3632 = vpow.pop %v3631
      %v3633 = vmul.f32 %v3604, 1.442695
      %v3634 = vpow.pop %v3633
      %v3635 = vmul.f32 %v3605, 1.442695
      %v3636 = vpow.pop %v3635
      %v3637 = vmul.f32 %v3606, 1.442695
      %v3638 = vpow.pop %v3637
      %v3639 = vmul.f32 %v3607, 1.442695
      %v3640 = vpow.pop %v3639
      %v3641 = vmul.f32 %v3608, 1.442695
      %v3642 = vpow.pop %v3641
      %v3643 = vmul.f32 %v3609, 1.442695
      %v3644 = vpow.pop %v3643
      %v3645 = vmul.f32 %v3610, 1.442695
      %v3646 = vpow.pop %v3645
      %v3647 = vmul.f32 %v3611, 1.442695
      %v3648 = vpow.pop %v3647
      %v3649 = vmul.f32 %v3612, 1.442695
      %v3650 = vpow.pop %v3649
      %v3651 = vmul.f32 %v3613, 1.442695
      %v3652 = vpow.pop %v3651
      %v3653 = vmul.f32 %v3614, 1.442695
      %v3654 = vpow.pop %v3653
      %v3655 = vadd.f32 %v3616, 1.0
      %v3656 = vadd.f32 %v3618, 1.0
      %v3657 = vadd.f32 %v3620, 1.0
      %v3658 = vadd.f32 %v3622, 1.0
      %v3659 = vadd.f32 %v3624, 1.0
      %v3660 = vadd.f32 %v3626, 1.0
      %v3661 = vadd.f32 %v3628, 1.0
      %v3662 = vadd.f32 %v3630, 1.0
      %v3663 = vadd.f32 %v3632, 1.0
      %v3664 = vadd.f32 %v3634, 1.0
      %v3665 = vadd.f32 %v3636, 1.0
      %v3666 = vadd.f32 %v3638, 1.0
      %v3667 = vadd.f32 %v3640, 1.0
      %v3668 = vadd.f32 %v3642, 1.0
      %v3669 = vadd.f32 %v3644, 1.0
      %v3670 = vadd.f32 %v3646, 1.0
      %v3671 = vadd.f32 %v3648, 1.0
      %v3672 = vadd.f32 %v3650, 1.0
      %v3673 = vadd.f32 %v3652, 1.0
      %v3674 = vadd.f32 %v3654, 1.0
      %v3675 = vrcp.pop %v3655
      %v3676 = vrcp.pop %v3656
      %v3677 = vrcp.pop %v3657
      %v3678 = vrcp.pop %v3658
      %v3679 = vrcp.pop %v3659
      %v3680 = vrcp.pop %v3660
      %v3681 = vrcp.pop %v3661
      %v3682 = vrcp.pop %v3662
      %v3683 = vrcp.pop %v3663
      %v3684 = vrcp.pop %v3664
      %v3685 = vrcp.pop %v3665
      %v3686 = vrcp.pop %v3666
      %v3687 = vrcp.pop %v3667
      %v3688 = vrcp.pop %v3668
      %v3689 = vrcp.pop %v3669
      %v3690 = vrcp.pop %v3670
      %v3691 = vrcp.pop %v3671
      %v3692 = vrcp.pop %v3672
      %v3693 = vrcp.pop %v3673
      %v3694 = vrcp.pop %v3674
      %v3695 = vmul.f32 %v3575, %v3675
      %v3696 = vmul.f32 %v3576, %v3676
      %v3697 = vmul.f32 %v3577, %v3677
      %v3698 = vmul.f32 %v3578, %v3678
      %v3699 = vmul.f32 %v3579, %v3679
      %v3700 = vmul.f32 %v3580, %v3680
      %v3701 = vmul.f32 %v3581, %v3681
      %v3702 = vmul.f32 %v3582, %v3682
      %v3703 = vmul.f32 %v3583, %v3683
      %v3704 = vmul.f32 %v3584, %v3684
      %v3705 = vmul.f32 %v3585, %v3685
      %v3706 = vmul.f32 %v3586, %v3686
      %v3707 = vmul.f32 %v3587, %v3687
      %v3708 = vmul.f32 %v3588, %v3688
      %v3709 = vmul.f32 %v3589, %v3689
      %v3710 = vmul.f32 %v3590, %v3690
      %v3711 = vmul.f32 %v3591, %v3691
      %v3712 = vmul.f32 %v3592, %v3692
      %v3713 = vmul.f32 %v3593, %v3693
      %v3714 = vmul.f32 %v3594, %v3694
      %v3715 = vsel %vm1724, %v3695, 0.0
      %v3716 = vsel %vm1725, %v3696, 0.0
      %v3717 = vsel %vm1726, %v3697, 0.0
      %v3718 = vsel %vm1727, %v3698, 0.0
      %v3719 = vsel %vm1728, %v3699, 0.0
      %v3720 = vsel %vm1729, %v3700, 0.0
      %v3721 = vsel %vm1730, %v3701, 0.0
      %v3722 = vsel %vm1731, %v3702, 0.0
      %v3723 = vsel %vm1732, %v3703, 0.0
      %v3724 = vsel %vm1733, %v3704, 0.0
      %v3725 = vsel %vm1734, %v3705, 0.0
      %v3726 = vsel %vm1735, %v3706, 0.0
      %v3727 = vsel %vm1736, %v3707, 0.0
      %v3728 = vsel %vm1737, %v3708, 0.0
      %v3729 = vsel %vm1738, %v3709, 0.0
      %v3730 = vsel %vm1739, %v3710, 0.0
      %v3731 = vsel %vm1740, %v3711, 0.0
      %v3732 = vsel %vm1741, %v3712, 0.0
      %v3733 = vsel %vm1742, %v3713, 0.0
      %v3734 = vsel %vm1743, %v3714, 0.0
      %v3735 = vrot.slane %v3715, 7
      %v3736 = vrot.slane %v3716, 7
      %v3737 = vrot.slane %v3717, 7
      %v3738 = vrot.slane %v3718, 7
      %v3739 = vrot.slane %v3719, 7
      %v3740 = vrot.slane %v3720, 7
      %v3741 = vrot.slane %v3721, 7
      %v3742 = vrot.slane %v3722, 7
      %v3743 = vrot.slane %v3723, 7
      %v3744 = vrot.slane %v3724, 7
      %v3745 = vrot.slane %v3725, 7
      %v3746 = vrot.slane %v3726, 7
      %v3747 = vrot.slane %v3727, 7
      %v3748 = vrot.slane %v3728, 7
      %v3749 = vrot.slane %v3729, 7
      %v3750 = vrot.slane %v3730, 7
      %v3751 = vrot.slane %v3731, 7
      %v3752 = vrot.slane %v3732, 7
      %v3753 = vrot.slane %v3733, 7
      %v3754 = vrot.slane %v3734, 7
      %v3755 = vsel %vm1794, %v3753, %v3754
      %v3756 = vsel %vm1794, %v3752, %v3753
      %v3757 = vsel %vm1794, %v3751, %v3752
      %v3758 = vsel %vm1794, %v3750, %v3751
      %v3759 = vsel %vm1794, %v3749, %v3750
      %v3760 = vsel %vm1794, %v3748, %v3749
      %v3761 = vsel %vm1794, %v3747, %v3748
      %v3762 = vsel %vm1794, %v3746, %v3747
      %v3763 = vsel %vm1794, %v3745, %v3746
      %v3764 = vsel %vm1794, %v3744, %v3745
      %v3765 = vsel %vm1794, %v3743, %v3744
      %v3766 = vsel %vm1794, %v3742, %v3743
      %v3767 = vsel %vm1794, %v3741, %v3742
      %v3768 = vsel %vm1794, %v3740, %v3741
      %v3769 = vsel %vm1794, %v3739, %v3740
      %v3770 = vsel %vm1794, %v3738, %v3739
      %v3771 = vsel %vm1794, %v3737, %v3738
      %v3772 = vsel %vm1794, %v3736, %v3737
      %v3773 = vsel %vm1794, %v3735, %v3736
      %v3774 = vsel %vm1794, %v3754, %v3735
      %v3775 = vsel %vm1939, %v3774, 0.0
      %v3776 = vsel %vm1940, %v3773, 0.0
      %v3777 = vsel %vm1941, %v3772, 0.0
      %v3778 = vsel %vm1942, %v3771, 0.0
      %v3779 = vsel %vm1943, %v3770, 0.0
      %v3780 = vsel %vm1944, %v3769, 0.0
      %v3781 = vsel %vm1945, %v3768, 0.0
      %v3782 = vsel %vm1946, %v3767, 0.0
      %v3783 = vsel %vm1947, %v3766, 0.0
      %v3784 = vsel %vm1948, %v3765, 0.0
      %v3785 = vsel %vm1949, %v3764, 0.0
      %v3786 = vsel %vm1950, %v3763, 0.0
      %v3787 = vsel %vm1951, %v3762, 0.0
      %v3788 = vsel %vm1952, %v3761, 0.0
      %v3789 = vsel %vm1953, %v3760, 0.0
      %v3790 = vsel %vm1954, %v3759, 0.0
      %v3791 = vsel %vm1955, %v3758, 0.0
      %v3792 = vsel %vm1956, %v3757, 0.0
      %v3793 = vsel %vm1957, %v3756, 0.0
      %v3794 = vsel %vm1958, %v3755, 0.0
      %v3795 = vpack.c.bf16 %v3776, %v3775
      %v3796 = vpack.c.bf16 %v3778, %v3777
      %v3797 = vpack.c.bf16 %v3780, %v3779
      %v3798 = vpack.c.bf16 %v3782, %v3781
      %v3799 = vpack.c.bf16 %v3784, %v3783
      %v3800 = vpack.c.bf16 %v3786, %v3785
      %v3801 = vpack.c.bf16 %v3788, %v3787
      %v3802 = vpack.c.bf16 %v3790, %v3789
      %v3803 = vpack.c.bf16 %v3792, %v3791
      %v3804 = vpack.c.bf16 %v3794, %v3793
      %v3805 = vpack.c.bf16 %v3716, %v3715
      %v3806 = vpack.c.bf16 %v3718, %v3717
      %v3807 = vpack.c.bf16 %v3720, %v3719
      %v3808 = vpack.c.bf16 %v3722, %v3721
      %v3809 = vpack.c.bf16 %v3724, %v3723
      %v3810 = vpack.c.bf16 %v3726, %v3725
      %v3811 = vpack.c.bf16 %v3728, %v3727
      %v3812 = vpack.c.bf16 %v3730, %v3729
      %v3813 = vpack.c.bf16 %v3732, %v3731
      %v3814 = vpack.c.bf16 %v3734, %v3733
      %v3815 = vrot.slane %v3715, 1
      %v3816 = vrot.slane %v3716, 1
      %v3817 = vrot.slane %v3717, 1
      %v3818 = vrot.slane %v3718, 1
      %v3819 = vrot.slane %v3719, 1
      %v3820 = vrot.slane %v3720, 1
      %v3821 = vrot.slane %v3721, 1
      %v3822 = vrot.slane %v3722, 1
      %v3823 = vrot.slane %v3723, 1
      %v3824 = vrot.slane %v3724, 1
      %v3825 = vrot.slane %v3725, 1
      %v3826 = vrot.slane %v3726, 1
      %v3827 = vrot.slane %v3727, 1
      %v3828 = vrot.slane %v3728, 1
      %v3829 = vrot.slane %v3729, 1
      %v3830 = vrot.slane %v3730, 1
      %v3831 = vrot.slane %v3731, 1
      %v3832 = vrot.slane %v3732, 1
      %v3833 = vrot.slane %v3733, 1
      %v3834 = vrot.slane %v3734, 1
      %v3835 = vsel %vm2035, %v3833, %v3834
      %v3836 = vsel %vm2035, %v3832, %v3833
      %v3837 = vsel %vm2035, %v3831, %v3832
      %v3838 = vsel %vm2035, %v3830, %v3831
      %v3839 = vsel %vm2035, %v3829, %v3830
      %v3840 = vsel %vm2035, %v3828, %v3829
      %v3841 = vsel %vm2035, %v3827, %v3828
      %v3842 = vsel %vm2035, %v3826, %v3827
      %v3843 = vsel %vm2035, %v3825, %v3826
      %v3844 = vsel %vm2035, %v3824, %v3825
      %v3845 = vsel %vm2035, %v3823, %v3824
      %v3846 = vsel %vm2035, %v3822, %v3823
      %v3847 = vsel %vm2035, %v3821, %v3822
      %v3848 = vsel %vm2035, %v3820, %v3821
      %v3849 = vsel %vm2035, %v3819, %v3820
      %v3850 = vsel %vm2035, %v3818, %v3819
      %v3851 = vsel %vm2035, %v3817, %v3818
      %v3852 = vsel %vm2035, %v3816, %v3817
      %v3853 = vsel %vm2035, %v3815, %v3816
      %v3854 = vsel %vm2035, %v3834, %v3815
      %v3855 = vsel %vm2180, %v3853, 0.0
      %v3856 = vsel %vm2181, %v3852, 0.0
      %v3857 = vsel %vm2182, %v3851, 0.0
      %v3858 = vsel %vm2183, %v3850, 0.0
      %v3859 = vsel %vm2184, %v3849, 0.0
      %v3860 = vsel %vm2185, %v3848, 0.0
      %v3861 = vsel %vm2186, %v3847, 0.0
      %v3862 = vsel %vm2187, %v3846, 0.0
      %v3863 = vsel %vm2188, %v3845, 0.0
      %v3864 = vsel %vm2189, %v3844, 0.0
      %v3865 = vsel %vm2190, %v3843, 0.0
      %v3866 = vsel %vm2191, %v3842, 0.0
      %v3867 = vsel %vm2192, %v3841, 0.0
      %v3868 = vsel %vm2193, %v3840, 0.0
      %v3869 = vsel %vm2194, %v3839, 0.0
      %v3870 = vsel %vm2195, %v3838, 0.0
      %v3871 = vsel %vm2196, %v3837, 0.0
      %v3872 = vsel %vm2197, %v3836, 0.0
      %v3873 = vsel %vm2198, %v3835, 0.0
      %v3874 = vsel %vm2199, %v3854, 0.0
      %v3875 = vpack.c.bf16 %v3856, %v3855
      %v3876 = vpack.c.bf16 %v3858, %v3857
      %v3877 = vpack.c.bf16 %v3860, %v3859
      %v3878 = vpack.c.bf16 %v3862, %v3861
      %v3879 = vpack.c.bf16 %v3864, %v3863
      %v3880 = vpack.c.bf16 %v3866, %v3865
      %v3881 = vpack.c.bf16 %v3868, %v3867
      %v3882 = vpack.c.bf16 %v3870, %v3869
      %v3883 = vpack.c.bf16 %v3872, %v3871
      %v3884 = vpack.c.bf16 %v3874, %v3873
      %3895 = vrot.lane.b32.xlu0 %v3805, 8
      %v3896 = vpop.permute.xlu0 %3895
      %3897 = vrot.lane.b32.xlu0 %v3806, 8
      %v3898 = vpop.permute.xlu0 %3897
      %3899 = vrot.lane.b32.xlu0 %v3807, 8
      %v3900 = vpop.permute.xlu0 %3899
      %3901 = vrot.lane.b32.xlu0 %v3808, 8
      %v3902 = vpop.permute.xlu0 %3901
      %3903 = vrot.lane.b32.xlu0 %v3809, 8
      %v3904 = vpop.permute.xlu0 %3903
      %3905 = vrot.lane.b32.xlu0 %v3810, 8
      %v3906 = vpop.permute.xlu0 %3905
      %3907 = vrot.lane.b32.xlu0 %v3811, 8
      %v3908 = vpop.permute.xlu0 %3907
      %3909 = vrot.lane.b32.xlu0 %v3812, 8
      %v3910 = vpop.permute.xlu0 %3909
      %3911 = vrot.lane.b32.xlu0 %v3813, 8
      %v3912 = vpop.permute.xlu0 %3911
      %3913 = vrot.lane.b32.xlu0 %v3814, 8
      %v3914 = vpop.permute.xlu0 %3913
      %3925 = vrot.lane.b32.xlu0 %v3875, 16
      %v3926 = vpop.permute.xlu0 %3925
      %3927 = vrot.lane.b32.xlu0 %v3876, 16
      %v3928 = vpop.permute.xlu0 %3927
      %3929 = vrot.lane.b32.xlu0 %v3877, 16
      %v3930 = vpop.permute.xlu0 %3929
      %3931 = vrot.lane.b32.xlu0 %v3878, 16
      %v3932 = vpop.permute.xlu0 %3931
      %3933 = vrot.lane.b32.xlu0 %v3879, 16
      %v3934 = vpop.permute.xlu0 %3933
      %3935 = vrot.lane.b32.xlu0 %v3880, 16
      %v3936 = vpop.permute.xlu0 %3935
      %3937 = vrot.lane.b32.xlu0 %v3881, 16
      %v3938 = vpop.permute.xlu0 %3937
      %3939 = vrot.lane.b32.xlu0 %v3882, 16
      %v3940 = vpop.permute.xlu0 %3939
      %3941 = vrot.lane.b32.xlu0 %v3883, 16
      %v3942 = vpop.permute.xlu0 %3941
      %3943 = vrot.lane.b32.xlu0 %v3884, 16
      %v3944 = vpop.permute.xlu0 %3943
      %v3947 = vsel %vm2312, %v3795, %v3896
      %v3950 = vsel %vm2312, %v3796, %v3898
      %v3953 = vsel %vm2312, %v3797, %v3900
      %v3956 = vsel %vm2312, %v3798, %v3902
      %v3959 = vsel %vm2312, %v3799, %v3904
      %v3962 = vsel %vm2312, %v3800, %v3906
      %v3965 = vsel %vm2312, %v3801, %v3908
      %v3968 = vsel %vm2312, %v3802, %v3910
      %v3971 = vsel %vm2312, %v3803, %v3912
      %v3974 = vsel %vm2312, %v3804, %v3914
      %v3976 = vsel %vm2349, %v3947, %v3926
      %v3978 = vsel %vm2349, %v3950, %v3928
      %v3980 = vsel %vm2349, %v3953, %v3930
      %v3982 = vsel %vm2349, %v3956, %v3932
      %v3984 = vsel %vm2349, %v3959, %v3934
      %v3986 = vsel %vm2349, %v3962, %v3936
      %v3988 = vsel %vm2349, %v3965, %v3938
      %v3990 = vsel %vm2349, %v3968, %v3940
      %v3992 = vsel %vm2349, %v3971, %v3942
      %v3994 = vsel %vm2349, %v3974, %v3944
      %v3995 = vld [vmem:[%s10] sm:$0xf]
      %v3996 = vld [vmem:[%s10 + $0x4] sm:$0xf]
      %v3997 = vld [vmem:[%s10 + $0x8] sm:$0xf]
      %s3998 = scalar_lea.vmem %s10, 12
      %v3999 = vld [vmem:[%s3998] sm:$0xf]
      %v4000 = vld [vmem:[%s3998 + $0x4] sm:$0xf]
      %v4001 = vld [vmem:[%s3998 + $0x8] sm:$0xf]
      %v4005 = vunpack.c.l.b16 %v3999
      %v4006 = vunpack.c.l.b16 %v4000
      %v4007 = vunpack.c.l.b16 %v4001
      %v4008 = vpack.c.b16 %v4006, %v4005
      %v4009 = vpack.c.b16 %v4007, %v4007
      %v4011 = vsel %vm2390, %v3978, 0
      %v4013 = vsel %vm2390, %v3980, 0
      %v4015 = vsel %vm2390, %v3982, 0
      %v4017 = vsel %vm2390, %v3984, 0
      %v4019 = vsel %vm2390, %v3986, 0
      %v4021 = vsel %vm2390, %v3988, 0
      %v4023 = vsel %vm2390, %v3990, 0
      %v4025 = vsel %vm2390, %v3992, 0
      %v4028 = vsel %vm2411, %v4009, 0
      %4030 = vmatprep.subr.bf16.mxu0 0
      %4031 = vmatpush1.bf16.msra.mxu0 0
      %4032 = vmatprep.subr.bf16.mxu0 0
      %4033 = vmatpush1.bf16.msra.mxu0 0
      %4034 = vmatprep.subr.bf16.mxu0 0
      %4035 = vmatpush1.bf16.msra.mxu0 0
      %4036 = vmatprep.subr.bf16.mxu0 0
      %4037 = vmatpush1.bf16.msra.mxu0 0
      %4038 = vmatprep.subr.bf16.mxu0 0
      %4039 = vmatpush1.bf16.msra.mxu0 0
      %4040 = vmatprep.subr.bf16.mxu0 0
      %4041 = vmatpush1.bf16.msra.mxu0 0
      %4042 = vmatprep.subr.bf16.mxu0 0
      %4043 = vmatpush1.bf16.msra.mxu0 %v4028
      %4044 = vmatprep.subr.bf16.mxu0 0
      %4045 = vmatpush1.bf16.msra.mxu0 %v4008
      %4046 = vmatprep.subr.bf16.mxu0 0
      %4047 = vmatpush2.bf16.msra.mxu0 0
      %4048 = vmatprep.subr.bf16.mxu0 0
      %4049 = vmatpush2.bf16.msra.mxu0 0
      %4050 = vmatprep.subr.bf16.mxu0 0
      %4051 = vmatpush2.bf16.msra.mxu0 0
      %4052 = vmatprep.subr.bf16.mxu0 0
      %4053 = vmatpush2.bf16.msra.mxu0 0
      %4054 = vmatprep.subr.bf16.mxu0 0
      %4055 = vmatpush2.bf16.msra.mxu0 0
      %4056 = vmatprep.subr.bf16.mxu0 0
      %4057 = vmatpush2.bf16.msra.mxu0 0
      %4058 = vmatprep.subr.bf16.mxu0 0
      %4059 = vmatpush2.bf16.msra.mxu0 0
      %4060 = vmatprep.subr.bf16.mxu0 0
      %4061 = vmatpush2.bf16.msra.mxu0 0
      %4062 = vmatprep.mubr.bf16.mxu0 0
      %4063 = vmatmul.mubr.bf16.gmra.mxu0 %v4011
      %v4064 = vpop.f32.mrf.mxu0
      %v4065 = vadd.f32 0.0, %v4064
      %v4066 = vpop.f32.mrf.mxu0
      %v4067 = vpop.f32.mrf.mxu0
      %v4068 = vadd.f32 0.0, %v4067
      %v4069 = vpop.f32.mrf.mxu0
      %4070 = vmatprep.mubr.bf16.mxu0 0
      %4071 = vmatmul.mubr.bf16.gmra.mxu0 %v4013
      %v4072 = vpop.f32.mrf.mxu0
      %v4073 = vadd.f32 0.0, %v4072
      %v4074 = vpop.f32.mrf.mxu0
      %v4075 = vpop.f32.mrf.mxu0
      %v4076 = vadd.f32 0.0, %v4075
      %v4077 = vpop.f32.mrf.mxu0
      %4078 = vmatprep.mubr.bf16.mxu0 0
      %4079 = vmatmul.mubr.bf16.gmra.mxu0 %v4015
      %v4080 = vpop.f32.mrf.mxu0
      %v4081 = vadd.f32 0.0, %v4080
      %v4082 = vpop.f32.mrf.mxu0
      %v4083 = vpop.f32.mrf.mxu0
      %v4084 = vadd.f32 0.0, %v4083
      %v4085 = vpop.f32.mrf.mxu0
      %4086 = vmatprep.mubr.bf16.mxu0 0
      %4087 = vmatmul.mubr.bf16.gmra.mxu0 %v4017
      %v4088 = vpop.f32.mrf.mxu0
      %v4089 = vadd.f32 0.0, %v4088
      %v4090 = vpop.f32.mrf.mxu0
      %v4091 = vpop.f32.mrf.mxu0
      %v4092 = vadd.f32 0.0, %v4091
      %v4093 = vpop.f32.mrf.mxu0
      %4094 = vmatprep.mubr.bf16.mxu0 0
      %4095 = vmatmul.mubr.bf16.gmra.mxu0 %v4019
      %v4096 = vpop.f32.mrf.mxu0
      %v4097 = vadd.f32 0.0, %v4096
      %v4098 = vpop.f32.mrf.mxu0
      %v4099 = vpop.f32.mrf.mxu0
      %v4100 = vadd.f32 0.0, %v4099
      %v4101 = vpop.f32.mrf.mxu0
      %4102 = vmatprep.mubr.bf16.mxu0 0
      %4103 = vmatmul.mubr.bf16.gmra.mxu0 %v4021
      %v4104 = vpop.f32.mrf.mxu0
      %v4105 = vadd.f32 0.0, %v4104
      %v4106 = vpop.f32.mrf.mxu0
      %v4107 = vpop.f32.mrf.mxu0
      %v4108 = vadd.f32 0.0, %v4107
      %v4109 = vpop.f32.mrf.mxu0
      %4110 = vmatprep.mubr.bf16.mxu0 0
      %4111 = vmatmul.mubr.bf16.gmra.mxu0 %v4023
      %v4112 = vpop.f32.mrf.mxu0
      %v4113 = vadd.f32 0.0, %v4112
      %v4114 = vpop.f32.mrf.mxu0
      %v4115 = vpop.f32.mrf.mxu0
      %v4116 = vadd.f32 0.0, %v4115
      %v4117 = vpop.f32.mrf.mxu0
      %4118 = vmatprep.mubr.bf16.mxu0 0
      %4119 = vmatmul.mubr.bf16.gmra.mxu0 %v4025
      %v4120 = vpop.f32.mrf.mxu0
      %v4121 = vadd.f32 0.0, %v4120
      %v4122 = vpop.f32.mrf.mxu0
      %v4123 = vpop.f32.mrf.mxu0
      %v4124 = vadd.f32 0.0, %v4123
      %v4125 = vpop.f32.mrf.mxu0
      %4126 = vdwg.mxu0
      %v4130 = vunpack.c.l.b16 %v3995
      %v4131 = vunpack.c.l.b16 %v3996
      %v4132 = vunpack.c.l.b16 %v3997
      %v4133 = vpack.c.b16 %v4131, %v4130
      %v4134 = vpack.c.b16 %v4132, %v4132
      %v4136 = vsel %vm2390, %v3976, 0
      %v4139 = vsel %vm2411, %v4134, 0
      %4141 = vmatprep.subr.bf16.mxu0 0
      %4142 = vmatpush1.bf16.msra.mxu0 0
      %4143 = vmatprep.subr.bf16.mxu0 0
      %4144 = vmatpush1.bf16.msra.mxu0 0
      %4145 = vmatprep.subr.bf16.mxu0 0
      %4146 = vmatpush1.bf16.msra.mxu0 0
      %4147 = vmatprep.subr.bf16.mxu0 0
      %4148 = vmatpush1.bf16.msra.mxu0 0
      %4149 = vmatprep.subr.bf16.mxu0 0
      %4150 = vmatpush1.bf16.msra.mxu0 0
      %4151 = vmatprep.subr.bf16.mxu0 0
      %4152 = vmatpush1.bf16.msra.mxu0 0
      %4153 = vmatprep.subr.bf16.mxu0 0
      %4154 = vmatpush1.bf16.msra.mxu0 %v4139
      %4155 = vmatprep.subr.bf16.mxu0 0
      %4156 = vmatpush1.bf16.msra.mxu0 %v4133
      %4157 = vmatprep.subr.bf16.mxu0 0
      %4158 = vmatpush2.bf16.msra.mxu0 0
      %4159 = vmatprep.subr.bf16.mxu0 0
      %4160 = vmatpush2.bf16.msra.mxu0 0
      %4161 = vmatprep.subr.bf16.mxu0 0
      %4162 = vmatpush2.bf16.msra.mxu0 0
      %4163 = vmatprep.subr.bf16.mxu0 0
      %4164 = vmatpush2.bf16.msra.mxu0 0
      %4165 = vmatprep.subr.bf16.mxu0 0
      %4166 = vmatpush2.bf16.msra.mxu0 0
      %4167 = vmatprep.subr.bf16.mxu0 0
      %4168 = vmatpush2.bf16.msra.mxu0 0
      %4169 = vmatprep.subr.bf16.mxu0 0
      %4170 = vmatpush2.bf16.msra.mxu0 0
      %4171 = vmatprep.subr.bf16.mxu0 0
      %4172 = vmatpush2.bf16.msra.mxu0 0
      %4173 = vmatprep.mubr.bf16.mxu0 0
      %4174 = vmatmul.mubr.bf16.gmra.mxu0 %v4136
      %v4175 = vpop.f32.mrf.mxu0
      %v4176 = vadd.f32 %v4065, %v4175
      %v4177 = vpop.f32.mrf.mxu0
      %v4178 = vpop.f32.mrf.mxu0
      %v4179 = vadd.f32 %v4068, %v4178
      %v4180 = vpop.f32.mrf.mxu0
      %4181 = vmatprep.mubr.bf16.mxu0 0
      %4182 = vmatmul.mubr.bf16.gmra.mxu0 %v4011
      %v4183 = vpop.f32.mrf.mxu0
      %v4184 = vadd.f32 %v4073, %v4183
      %v4185 = vpop.f32.mrf.mxu0
      %v4186 = vpop.f32.mrf.mxu0
      %v4187 = vadd.f32 %v4076, %v4186
      %v4188 = vpop.f32.mrf.mxu0
      %4189 = vmatprep.mubr.bf16.mxu0 0
      %4190 = vmatmul.mubr.bf16.gmra.mxu0 %v4013
      %v4191 = vpop.f32.mrf.mxu0
      %v4192 = vadd.f32 %v4081, %v4191
      %v4193 = vpop.f32.mrf.mxu0
      %v4194 = vpop.f32.mrf.mxu0
      %v4195 = vadd.f32 %v4084, %v4194
      %v4196 = vpop.f32.mrf.mxu0
      %4197 = vmatprep.mubr.bf16.mxu0 0
      %4198 = vmatmul.mubr.bf16.gmra.mxu0 %v4015
      %v4199 = vpop.f32.mrf.mxu0
      %v4200 = vadd.f32 %v4089, %v4199
      %v4201 = vpop.f32.mrf.mxu0
      %v4202 = vpop.f32.mrf.mxu0
      %v4203 = vadd.f32 %v4092, %v4202
      %v4204 = vpop.f32.mrf.mxu0
      %4205 = vmatprep.mubr.bf16.mxu0 0
      %4206 = vmatmul.mubr.bf16.gmra.mxu0 %v4017
      %v4207 = vpop.f32.mrf.mxu0
      %v4208 = vadd.f32 %v4097, %v4207
      %v4209 = vpop.f32.mrf.mxu0
      %v4210 = vpop.f32.mrf.mxu0
      %v4211 = vadd.f32 %v4100, %v4210
      %v4212 = vpop.f32.mrf.mxu0
      %4213 = vmatprep.mubr.bf16.mxu0 0
      %4214 = vmatmul.mubr.bf16.gmra.mxu0 %v4019
      %v4215 = vpop.f32.mrf.mxu0
      %v4216 = vadd.f32 %v4105, %v4215
      %v4217 = vpop.f32.mrf.mxu0
      %v4218 = vpop.f32.mrf.mxu0
      %v4219 = vadd.f32 %v4108, %v4218
      %v4220 = vpop.f32.mrf.mxu0
      %4221 = vmatprep.mubr.bf16.mxu0 0
      %4222 = vmatmul.mubr.bf16.gmra.mxu0 %v4021
      %v4223 = vpop.f32.mrf.mxu0
      %v4224 = vadd.f32 %v4113, %v4223
      %v4225 = vpop.f32.mrf.mxu0
      %v4226 = vpop.f32.mrf.mxu0
      %v4227 = vadd.f32 %v4116, %v4226
      %v4228 = vpop.f32.mrf.mxu0
      %4229 = vmatprep.mubr.bf16.mxu0 0
      %4230 = vmatmul.mubr.bf16.gmra.mxu0 %v4023
      %v4231 = vpop.f32.mrf.mxu0
      %v4232 = vadd.f32 %v4121, %v4231
      %v4233 = vpop.f32.mrf.mxu0
      %v4234 = vpop.f32.mrf.mxu0
      %v4235 = vadd.f32 %v4124, %v4234
      %v4236 = vpop.f32.mrf.mxu0
      %4237 = vdwg.mxu0
      %s4238 = scalar_lea.vmem %s10, 24
      %v4239 = vld [vmem:[%s4238] sm:$0xf]
      %v4240 = vld [vmem:[%s4238 + $0x4] sm:$0xf]
      %v4241 = vld [vmem:[%s4238 + $0x8] sm:$0xf]
      %v4245 = vunpack.c.l.b16 %v4239
      %v4246 = vunpack.c.l.b16 %v4240
      %v4247 = vunpack.c.l.b16 %v4241
      %v4248 = vpack.c.b16 %v4246, %v4245
      %v4249 = vpack.c.b16 %v4247, %v4247
      %v4251 = vsel %vm2390, %v3994, 0
      %v4254 = vsel %vm2411, %v4249, 0
      %4256 = vmatprep.subr.bf16.mxu0 0
      %4257 = vmatpush1.bf16.msra.mxu0 0
      %4258 = vmatprep.subr.bf16.mxu0 0
      %4259 = vmatpush1.bf16.msra.mxu0 0
      %4260 = vmatprep.subr.bf16.mxu0 0
      %4261 = vmatpush1.bf16.msra.mxu0 0
      %4262 = vmatprep.subr.bf16.mxu0 0
      %4263 = vmatpush1.bf16.msra.mxu0 0
      %4264 = vmatprep.subr.bf16.mxu0 0
      %4265 = vmatpush1.bf16.msra.mxu0 0
      %4266 = vmatprep.subr.bf16.mxu0 0
      %4267 = vmatpush1.bf16.msra.mxu0 0
      %4268 = vmatprep.subr.bf16.mxu0 0
      %4269 = vmatpush1.bf16.msra.mxu0 %v4254
      %4270 = vmatprep.subr.bf16.mxu0 0
      %4271 = vmatpush1.bf16.msra.mxu0 %v4248
      %4272 = vmatprep.subr.bf16.mxu0 0
      %4273 = vmatpush2.bf16.msra.mxu0 0
      %4274 = vmatprep.subr.bf16.mxu0 0
      %4275 = vmatpush2.bf16.msra.mxu0 0
      %4276 = vmatprep.subr.bf16.mxu0 0
      %4277 = vmatpush2.bf16.msra.mxu0 0
      %4278 = vmatprep.subr.bf16.mxu0 0
      %4279 = vmatpush2.bf16.msra.mxu0 0
      %4280 = vmatprep.subr.bf16.mxu0 0
      %4281 = vmatpush2.bf16.msra.mxu0 0
      %4282 = vmatprep.subr.bf16.mxu0 0
      %4283 = vmatpush2.bf16.msra.mxu0 0
      %4284 = vmatprep.subr.bf16.mxu0 0
      %4285 = vmatpush2.bf16.msra.mxu0 0
      %4286 = vmatprep.subr.bf16.mxu0 0
      %4287 = vmatpush2.bf16.msra.mxu0 0
      %4288 = vmatprep.mubr.bf16.mxu0 0
      %4289 = vmatmul.mubr.bf16.gmra.mxu0 %v4013
      %v4290 = vpop.f32.mrf.mxu0
      %v4291 = vadd.f32 0.0, %v4290
      %v4292 = vpop.f32.mrf.mxu0
      %v4293 = vpop.f32.mrf.mxu0
      %v4294 = vadd.f32 0.0, %v4293
      %v4295 = vpop.f32.mrf.mxu0
      %4296 = vmatprep.mubr.bf16.mxu0 0
      %4297 = vmatmul.mubr.bf16.gmra.mxu0 %v4015
      %v4298 = vpop.f32.mrf.mxu0
      %v4299 = vadd.f32 0.0, %v4298
      %v4300 = vpop.f32.mrf.mxu0
      %v4301 = vpop.f32.mrf.mxu0
      %v4302 = vadd.f32 0.0, %v4301
      %v4303 = vpop.f32.mrf.mxu0
      %4304 = vmatprep.mubr.bf16.mxu0 0
      %4305 = vmatmul.mubr.bf16.gmra.mxu0 %v4017
      %v4306 = vpop.f32.mrf.mxu0
      %v4307 = vadd.f32 0.0, %v4306
      %v4308 = vpop.f32.mrf.mxu0
      %v4309 = vpop.f32.mrf.mxu0
      %v4310 = vadd.f32 0.0, %v4309
      %v4311 = vpop.f32.mrf.mxu0
      %4312 = vmatprep.mubr.bf16.mxu0 0
      %4313 = vmatmul.mubr.bf16.gmra.mxu0 %v4019
      %v4314 = vpop.f32.mrf.mxu0
      %v4315 = vadd.f32 0.0, %v4314
      %v4316 = vpop.f32.mrf.mxu0
      %v4317 = vpop.f32.mrf.mxu0
      %v4318 = vadd.f32 0.0, %v4317
      %v4319 = vpop.f32.mrf.mxu0
      %4320 = vmatprep.mubr.bf16.mxu0 0
      %4321 = vmatmul.mubr.bf16.gmra.mxu0 %v4021
      %v4322 = vpop.f32.mrf.mxu0
      %v4323 = vadd.f32 0.0, %v4322
      %v4324 = vpop.f32.mrf.mxu0
      %v4325 = vpop.f32.mrf.mxu0
      %v4326 = vadd.f32 0.0, %v4325
      %v4327 = vpop.f32.mrf.mxu0
      %4328 = vmatprep.mubr.bf16.mxu0 0
      %4329 = vmatmul.mubr.bf16.gmra.mxu0 %v4023
      %v4330 = vpop.f32.mrf.mxu0
      %v4331 = vadd.f32 0.0, %v4330
      %v4332 = vpop.f32.mrf.mxu0
      %v4333 = vpop.f32.mrf.mxu0
      %v4334 = vadd.f32 0.0, %v4333
      %v4335 = vpop.f32.mrf.mxu0
      %4336 = vmatprep.mubr.bf16.mxu0 0
      %4337 = vmatmul.mubr.bf16.gmra.mxu0 %v4025
      %v4338 = vpop.f32.mrf.mxu0
      %v4339 = vadd.f32 0.0, %v4338
      %v4340 = vpop.f32.mrf.mxu0
      %v4341 = vpop.f32.mrf.mxu0
      %v4342 = vadd.f32 0.0, %v4341
      %v4343 = vpop.f32.mrf.mxu0
      %4344 = vmatprep.mubr.bf16.mxu0 0
      %4345 = vmatmul.mubr.bf16.gmra.mxu0 %v4251
      %v4346 = vpop.f32.mrf.mxu0
      %v4347 = vadd.f32 0.0, %v4346
      %v4348 = vpop.f32.mrf.mxu0
      %v4349 = vpop.f32.mrf.mxu0
      %v4350 = vadd.f32 0.0, %v4349
      %v4351 = vpop.f32.mrf.mxu0
      %4352 = vdwg.mxu0
      %v4353 = vadd.f32 %v4176, %v4291
      %v4354 = vadd.f32 %v4179, %v4294
      %v4355 = vadd.f32 %v4184, %v4299
      %v4356 = vadd.f32 %v4187, %v4302
      %v4357 = vadd.f32 %v4192, %v4307
      %v4358 = vadd.f32 %v4195, %v4310
      %v4359 = vadd.f32 %v4200, %v4315
      %v4360 = vadd.f32 %v4203, %v4318
      %v4361 = vadd.f32 %v4208, %v4323
      %v4362 = vadd.f32 %v4211, %v4326
      %v4363 = vadd.f32 %v4216, %v4331
      %v4364 = vadd.f32 %v4219, %v4334
      %v4365 = vadd.f32 %v4224, %v4339
      %v4366 = vadd.f32 %v4227, %v4342
      %v4367 = vadd.f32 %v4232, %v4347
      %v4368 = vadd.f32 %v4235, %v4350
      %v4369 = vld [vmem:[%s11] sm:$0x1]
      %v4371 = vlaneseq
      %v4372 = vshrl.u32 %v4371, 7
      %v4373 = vsub.s32 0, %v4372
      %v4374 = vrot.slane %v4369, %v4373
      %v4376 = vadd.f32 %v4353, %v4374
      %v4377 = vadd.f32 %v4354, %v4374
      %v4378 = vadd.f32 %v4355, %v4374
      %v4379 = vadd.f32 %v4356, %v4374
      %v4380 = vadd.f32 %v4357, %v4374
      %v4381 = vadd.f32 %v4358, %v4374
      %v4382 = vadd.f32 %v4359, %v4374
      %v4383 = vadd.f32 %v4360, %v4374
      %v4384 = vadd.f32 %v4361, %v4374
      %v4385 = vadd.f32 %v4362, %v4374
      %v4386 = vadd.f32 %v4363, %v4374
      %v4387 = vadd.f32 %v4364, %v4374
      %v4388 = vadd.f32 %v4365, %v4374
      %v4389 = vadd.f32 %v4366, %v4374
      %v4390 = vadd.f32 %v4367, %v4374
      %v4391 = vadd.f32 %v4368, %v4374
      %v4392 = vadd.f32 %v4376, %v1476
      %v4393 = vadd.f32 %v4377, %v1479
      %v4394 = vadd.f32 %v4378, %v1484
      %v4395 = vadd.f32 %v4379, %v1487
      %v4396 = vadd.f32 %v4380, %v1492
      %v4397 = vadd.f32 %v4381, %v1495
      %v4398 = vadd.f32 %v4382, %v1500
      %v4399 = vadd.f32 %v4383, %v1503
      %v4400 = vadd.f32 %v4384, %v1508
      %v4401 = vadd.f32 %v4385, %v1511
      %v4402 = vadd.f32 %v4386, %v1516
      %v4403 = vadd.f32 %v4387, %v1519
      %v4404 = vadd.f32 %v4388, %v1524
      %v4405 = vadd.f32 %v4389, %v1527
      %v4406 = vadd.f32 %v4390, %v1532
      %v4407 = vadd.f32 %v4391, %v1535
      %4408 = vst.msk [vmem:[%s925] sm:$0xff] %vm2312, %v4392
      %4409 = vst.msk [vmem:[%s925 + $0x8] sm:$0xff] %vm2312, %v4393
      %4410 = vst.msk [vmem:[%s925 + $0x10] sm:$0xff] %vm2312, %v4394
      %4411 = vst.msk [vmem:[%s925 + $0x18] sm:$0xff] %vm2312, %v4395
      %4412 = vst.msk [vmem:[%s925 + $0x20] sm:$0xff] %vm2312, %v4396
      %4413 = vst.msk [vmem:[%s925 + $0x28] sm:$0xff] %vm2312, %v4397
      %4414 = vst.msk [vmem:[%s925 + $0x30] sm:$0xff] %vm2312, %v4398
      %4415 = vst.msk [vmem:[%s925 + $0x38] sm:$0xff] %vm2312, %v4399
      %4416 = vst.msk [vmem:[%s925 + $0x40] sm:$0xff] %vm2312, %v4400
      %4417 = vst.msk [vmem:[%s925 + $0x48] sm:$0xff] %vm2312, %v4401
      %4418 = vst.msk [vmem:[%s925 + $0x50] sm:$0xff] %vm2312, %v4402
      %4419 = vst.msk [vmem:[%s925 + $0x58] sm:$0xff] %vm2312, %v4403
      %4420 = vst.msk [vmem:[%s925 + $0x60] sm:$0xff] %vm2312, %v4404
      %4421 = vst.msk [vmem:[%s925 + $0x68] sm:$0xff] %vm2312, %v4405
      %4422 = vst.msk [vmem:[%s925 + $0x70] sm:$0xff] %vm2312, %v4406
      %4423 = vst.msk [vmem:[%s925 + $0x78] sm:$0xff] %vm2312, %v4407
      %s4424 = smul.u32 8, %s34
      %p4425 = scmp.lt.s32.totalorder %s33, 1
      %s4426 = scalar_select %p4425, %s33, 1
      %p4427 = scmp.lt.s32.totalorder %s4424, 15
      %s4428 = scalar_select %p4427, %s4424, 15
      %s4429 = smul.addr %s4428, 2
      %s4430 = smul.addr %s4426, 32
      %s4431 = sadd.s32 %s4429, %s4430
      %s4432 = smul.addr %s4431, 8
      %s4433 = scalar_lea.vmem %s18, %s4432
      // Predicated region
      $region93: #{tpu_custom_call.1} parent=91 // pred_check
        %p4434 = pneg %p513
      $region94: #{tpu_custom_call.1} parent=91 // pred_check_branch
        %4436 = sbr.rel (%p4434) target = $region96
      $region95: #{tpu_custom_call.1} parent=91 // pred_region
        %s4437 = smul.u32 8, %s34
      $region96: #{tpu_custom_call.1} parent=91 // pred_fallthru
        _
    $region92: #{tpu_custom_call.1} parent=5 // pred_fallthru
      _
    %p4438 = scmp.le.s32.totalorder 2, %s24
    // Predicated region
    $region97: #{tpu_custom_call.1} parent=5 // pred_check
      %p4439 = pneg %p4438
    $region98: #{tpu_custom_call.1} parent=5 // pred_check_branch
      %4441 = sbr.rel (%p4439) target = $region100
    $region99: #{tpu_custom_call.1} parent=5 // pred_region
      %s4442 = ssub.s32 %s24, 2
      // Predicated region
      $region101: #{tpu_custom_call.1} parent=99 // pred_check
        %p4443 = pneg %p519
      $region102: #{tpu_custom_call.1} parent=99 // pred_check_branch
        %4445 = sbr.rel (%p4443) target = $region104
      $region103: #{tpu_custom_call.1} parent=99 // pred_region
        %s4446 = smul.u32 8, %s36
        %p4447 = scmp.lt.s32.totalorder %s35, 1
        %s4448 = scalar_select %p4447, %s35, 1
        %p4449 = scmp.lt.s32.totalorder %s4446, 15
        %s4450 = scalar_select %p4449, %s4446, 15
        %s4451 = smul.addr %s4450, 2
        %s4452 = smul.addr %s4448, 32
        %s4453 = sadd.s32 %s4451, %s4452
        %s4454 = smul.addr %s4453, 8
        %s4455 = scalar_lea.vmem %s18, %s4454
      $region104: #{tpu_custom_call.1} parent=99 // pred_fallthru
        _
    $region100: #{tpu_custom_call.1} parent=5 // pred_fallthru
      _
  $region6: #{tpu_custom_call.1} parent=0 // loop_footer
    %s28 = sadd.s32 1, %s24
  $region7: #{tpu_custom_call.1} parent=0 // loop_footer_branch
    %23 = sbr.rel target = $region3
  $region8: #{tpu_custom_call.1} parent=0 // loop_exit
    _

</llo_original>
